<compile_context>
chip_gen: v7x
topology: tpu7x:2x2x1
jax: 0.10.0
libtpu: 0.0.40
codegen_flags: <defaults>
</compile_context>

<pallas_src>
import jax
import jax.numpy as jnp
from jax.experimental import pallas as pl
from jax.experimental.pallas import tpu as pltpu

# ----------------------------- configuration --------------------------------
N = 256       # number of nodes
NB = 128      # node-block rows per grid step (sweep {64,128,256}: 64 if v5e spills, 256 for v6e single-step)
G = 2         # number of graphs (ba.max() + 1)
NS = 32       # ns_feat  (node scalar dim)
NV = 16       # nv_feat  (node vector channel dim)
NT = 8        # nt_feat  (node tensor channel dim)
LAT = 32      # latent_feat (readout MLP width); == NS so wm1/wm2 stack
HID = 64      # hidden width of the gate MLP
L = 2         # n_gate_layers
EPS = 1e-8

VW = 3 * NV           # packed vector lane width   (48)
TW = 9 * NT           # packed tensor lane width   (72)
VTW = VW + TW         # packed vector+tensor width (120)
NRM = NV + NT         # invariant-norm lane width  (24)


# ------------------------------- kernel -------------------------------------
def gated_equivariant_kernel(
    # data (per node-block) + count-scaled one-hot graph assignment
    h_ns_ref, h_nvt_ref, onehot_ref,
    # packed gate-block weights (stacked over the L layers)
    wvt_ref, rnorm_ref, w1s_ref, w1vt_ref, b1_ref,
    w2s_ref, b2s_ref, w2g_ref, b2g_ref,
    # packed readout weights
    wm_ref, wread_ref, rvec_ref,
    # per-node-block partial output [G, 9]
    out_ref,
):
  f32 = jnp.float32
  dot = lambda a, b: jnp.dot(a, b, preferred_element_type=f32)

  s = h_ns_ref[...]              # [NB, NS]
  vt = h_nvt_ref[...]            # [NB, VTW]  (tensors already symmetrized)

  # ---- stacked NodeEquivariantBlocks (static unroll over L layers) ----
  for l in range(L):
    vt_mix = dot(vt, wvt_ref[l])                         # equivariant channel mix [NB, VTW]
    sq = vt_mix * vt_mix
    # invariant norms via one tiny matmul (0/1 grouping matrix) -> [NB, NV+NT]
    norms = jnp.sqrt(dot(sq, rnorm_ref[...]) + EPS)
    # gate MLP, layer 1: two dots instead of a lane concat of [s, v_norm, t_norm]
    h = jax.nn.silu(dot(s, w1s_ref[l]) + dot(norms, w1vt_ref[l]) + b1_ref[l])   # [NB, HID]
    # gate MLP, layer 2: scalar residual + gates already in packed 120-lane order
    s = s + dot(h, w2s_ref[l]) + b2s_ref[l]                                     # [NB, NS]
    gates = jax.nn.sigmoid(dot(h, w2g_ref[l]) + b2g_ref[l])                     # [NB, VTW]
    vt = vt + vt_mix * gates

  # ---- TensorReadout ----
  bm1 = rvec_ref[0:1, :]
  bm2 = rvec_ref[1:2, :]
  wm3 = rvec_ref[2:3, :]
  bm3 = rvec_ref[3:4, 0:1]

  h1 = jax.nn.silu(dot(s, wm_ref[0]) + bm1)              # [NB, LAT]
  h2 = jax.nn.silu(dot(h1, wm_ref[1]) + bm2)             # [NB, LAT]
  s_out = jnp.sum(h2 * wm3, axis=-1, keepdims=True) + bm3                      # [NB, 1]

  # single packed readout matmul: cols 0..8 -> v1[i], 9..17 -> v2[j], 18..26 -> t_read
  p = dot(vt, wread_ref[...])                            # [NB, 27]
  k9 = jax.lax.broadcasted_iota(jnp.int32, (NB, 9), 1)
  diag = jnp.where(k9 % 4 == 0, 1.0, 0.0).astype(f32)    # lanes 0,4,8 -> identity(3x3)
  res = p[:, 18:27] + p[:, 0:9] * p[:, 9:18] + s_out * diag                    # [NB, 9]

  # ---- per-graph mean: one-hot already scaled by 1/count; partial sum for this node block
  out_ref[...] = dot(onehot_ref[...], res)               # [G, 9]


# ----------------------- one-time weight packing (hoisted) -------------------
def pack_params(params):
  f32 = jnp.float32
  (wv, wt, w1s, w1v, w1t, b1, w2s, b2s, w2v, b2v, w2t, b2t,
   wm1, bm1, wm2, bm2, wm3, bm3, wv1, wv2, wtr) = params
  eye3 = jnp.eye(3, dtype=f32)
  eye9 = jnp.eye(9, dtype=f32)

  # equivariant channel mix, block-diag in the packed (vec | tensor) lane layout
  wvt = jnp.zeros((L, VTW, VTW), f32)
  for l in range(L):
    blk = jnp.zeros((VTW, VTW), f32)
    blk = blk.at[:VW, :VW].set(jnp.kron(eye3, wv[l]))
    blk = blk.at[VW:, VW:].set(jnp.kron(eye9, wt[l]))
    wvt = wvt.at[l].set(blk)

  # norm grouping matrix: sq @ R sums the 3 (vector) / 9 (tensor) spatial lanes per channel
  rnorm = jnp.zeros((VTW, NRM), f32)
  rnorm = rnorm.at[:VW, :NV].set(jnp.kron(jnp.ones((3, 1), f32), jnp.eye(NV, dtype=f32)))
  rnorm = rnorm.at[VW:, NV:].set(jnp.kron(jnp.ones((9, 1), f32), jnp.eye(NT, dtype=f32)))

  w1vt = jnp.concatenate([w1v, w1t], axis=1)                    # [L, NV+NT, HID]

  # gate broadcast folded into the weights (sigmoid commutes with column replication)
  w2g = jnp.concatenate([jnp.tile(w2v, (1, 1, 3)), jnp.tile(w2t, (1, 1, 9))], axis=2)   # [L, HID, VTW]
  b2g = jnp.concatenate([jnp.tile(b2v, (1, 1, 3)), jnp.tile(b2t, (1, 1, 9))], axis=2)   # [L, 1, VTW]

  wm = jnp.stack([wm1, wm2])                                    # [2, LAT, LAT]

  # packed readout projection: P[:, i*3+j] = v1[i], P[:, 9+i*3+j] = v2[j], P[:, 18+k] = t_read[k]
  wread = jnp.zeros((VTW, 27), f32)
  pick_i = jnp.kron(eye3, jnp.ones((1, 3), f32))                # [3,9]: col m -> row m // 3
  pick_j = jnp.tile(eye3, (1, 3))                               # [3,9]: col m -> row m % 3
  wread = wread.at[:VW, 0:9].set(jnp.kron(pick_i, wv1))
  wread = wread.at[:VW, 9:18].set(jnp.kron(pick_j, wv2))
  wread = wread.at[VW:, 18:27].set(jnp.kron(eye9, wtr))

  def row(x):
    x = jnp.reshape(x, (1, -1)).astype(f32)
    return jnp.pad(x, ((0, 0), (0, LAT - x.shape[1])))

  rvec = jnp.concatenate([row(bm1), row(bm2), row(wm3), row(bm3)], axis=0)    # [4, LAT]

  return (wvt, rnorm, w1s.astype(f32), w1vt, b1, w2s, b2s, w2g, b2g, wm, wread, rvec)


# ------------------------------- wrapper -------------------------------------
@jax.jit
def gated_equivariant_forward(h_ns, h_nv, h_nt, ba, packed):
  f32 = jnp.float32
  (wvt, rnorm, w1s, w1vt, b1, w2s, b2s, w2g, b2g, wm, wread, rvec) = packed

  # glue: symmetrize node tensors + lane-pack vectors/tensors into one slab
  t_sym = (h_nt + jnp.swapaxes(h_nt, 1, 2)) * 0.5
  h_nvt = jnp.concatenate(
      [h_nv.reshape(N, VW), t_sym.reshape(N, TW)], axis=-1).astype(f32)

  # one-hot graph assignment with 1/count folded in (guarded against empty graphs)
  counts = jax.ops.segment_sum(jnp.ones((N,), f32), ba, num_segments=G)
  inv = jnp.where(counts > 0, 1.0 / counts, 0.0)
  onehot = (ba[None, :] == jnp.arange(G)[:, None]).astype(f32) * inv[:, None]   # [G, N]

  nblk = N // NB
  parts = pl.pallas_call(
      gated_equivariant_kernel,
      out_shape=jax.ShapeDtypeStruct((nblk, G, 9), f32),
      grid=(nblk,),
      in_specs=[
          pl.BlockSpec((NB, NS), lambda i: (i, 0)),
          pl.BlockSpec((NB, VTW), lambda i: (i, 0)),
          pl.BlockSpec((G, NB), lambda i: (0, i)),
          pl.BlockSpec((L, VTW, VTW), lambda i: (0, 0, 0)),
          pl.BlockSpec((VTW, NRM), lambda i: (0, 0)),
          pl.BlockSpec((L, NS, HID), lambda i: (0, 0, 0)),
          pl.BlockSpec((L, NRM, HID), lambda i: (0, 0, 0)),
          pl.BlockSpec((L, 1, HID), lambda i: (0, 0, 0)),
          pl.BlockSpec((L, HID, NS), lambda i: (0, 0, 0)),
          pl.BlockSpec((L, 1, NS), lambda i: (0, 0, 0)),
          pl.BlockSpec((L, HID, VTW), lambda i: (0, 0, 0)),
          pl.BlockSpec((L, 1, VTW), lambda i: (0, 0, 0)),
          pl.BlockSpec((2, LAT, LAT), lambda i: (0, 0, 0)),
          pl.BlockSpec((VTW, 27), lambda i: (0, 0)),
          pl.BlockSpec((4, LAT), lambda i: (0, 0)),
      ],
      out_specs=pl.BlockSpec((None, G, 9), lambda i: (i, 0, 0)),
      compiler_params=pltpu.CompilerParams(
          dimension_semantics=("parallel",)),   # independent node blocks -> both v7x TCs
  )(h_ns.astype(f32), h_nvt, onehot, wvt, rnorm, w1s, w1vt, b1,
    w2s, b2s, w2g, b2g, wm, wread, rvec)

  return jnp.sum(parts, axis=0).reshape(G, 3, 3)


# ------------------------- deterministic parameters ---------------------------
def init_params(key):
  f32 = jnp.float32
  ks = iter(jax.random.split(key, 24))

  def w(shape, fan_in):
    return (jax.random.normal(next(ks), shape, f32) / jnp.sqrt(fan_in)).astype(f32)

  wv = w((L, NV, NV), NV)
  wt = w((L, NT, NT), NT)
  w1s = w((L, NS, HID), NS)
  w1v = w((L, NV, HID), NV)
  w1t = w((L, NT, HID), NT)
  b1 = jnp.zeros((L, 1, HID), f32)
  w2s = w((L, HID, NS), HID); b2s = jnp.zeros((L, 1, NS), f32)
  w2v = w((L, HID, NV), HID); b2v = jnp.zeros((L, 1, NV), f32)
  w2t = w((L, HID, NT), HID); b2t = jnp.zeros((L, 1, NT), f32)
  wm1 = w((NS, LAT), NS);   bm1 = jnp.zeros((1, LAT), f32)
  wm2 = w((LAT, LAT), LAT); bm2 = jnp.zeros((1, LAT), f32)
  wm3 = w((LAT, 1), LAT);   bm3 = jnp.zeros((1, 1), f32)
  wv1 = w((NV, 1), NV)
  wv2 = w((NV, 1), NV)
  wtr = w((NT, 1), NT)
  return (wv, wt, w1s, w1v, w1t, b1, w2s, b2s, w2v, b2v, w2t, b2t,
          wm1, bm1, wm2, bm2, wm3, bm3, wv1, wv2, wtr)


# ---------------------- plain-JAX reference (natural shapes) ------------------
def reference(h_ns, h_nv, h_nt, ba, params):
  (wv, wt, w1s, w1v, w1t, b1, w2s, b2s, w2v, b2v, w2t, b2t,
   wm1, bm1, wm2, bm2, wm3, bm3, wv1, wv2, wtr) = params
  s, v = h_ns, h_nv
  t = (h_nt + jnp.swapaxes(h_nt, 1, 2)) * 0.5
  for l in range(L):
    v_mix = jnp.einsum('ndc,ce->nde', v, wv[l])
    t_mix = jnp.einsum('nijc,ce->nije', t, wt[l])
    v_norm = jnp.sqrt(jnp.sum(v_mix ** 2, axis=1) + EPS)
    t_norm = jnp.sqrt(jnp.sum(t_mix ** 2, axis=(1, 2)) + EPS)
    h = jax.nn.silu(s @ w1s[l] + v_norm @ w1v[l] + t_norm @ w1t[l] + b1[l])
    s = s + h @ w2s[l] + b2s[l]
    gv = jax.nn.sigmoid(h @ w2v[l] + b2v[l])
    gt = jax.nn.sigmoid(h @ w2t[l] + b2t[l])
    v = v + v_mix * gv[:, None, :]
    t = t + t_mix * gt[:, None, None, :]
  h1 = jax.nn.silu(s @ wm1 + bm1)
  h2 = jax.nn.silu(h1 @ wm2 + bm2)
  s_out = h2 @ wm3 + bm3
  v1 = jnp.einsum('ndc,co->nd', v, wv1)
  v2 = jnp.einsum('ndc,co->nd', v, wv2)
  res = (jnp.einsum('nijc,co->nij', t, wtr)
         + v1[:, :, None] * v2[:, None, :]
         + s_out[:, :, None] * jnp.eye(3, dtype=jnp.float32)[None])
  num = jax.ops.segment_sum(res, ba, num_segments=G)
  cnt = jax.ops.segment_sum(jnp.ones((N,), jnp.float32), ba, num_segments=G)
  return num / cnt[:, None, None]


# ---------------------------------- main --------------------------------------
if __name__ == "__main__":
  key = jax.random.PRNGKey(0)
  k1, k2, k3, kp = jax.random.split(key, 4)
  h_ns = jax.random.normal(k1, (N, NS), jnp.float32)
  h_nv = jax.random.normal(k2, (N, 3, NV), jnp.float32)
  h_nt = jax.random.normal(k3, (N, 3, 3, NT), jnp.float32)
  ba = jnp.arange(N, dtype=jnp.int32) % G          # batch assignment
  params = init_params(kp)
  packed = pack_params(params)                     # one-time weight prep (hoisted)

  out = jax.block_until_ready(gated_equivariant_forward(h_ns, h_nv, h_nt, ba, packed))
  ref = jax.block_until_ready(reference(h_ns, h_nv, h_nt, ba, params))

  assert out.shape == (G, 3, 3)
  if not bool(jnp.allclose(out, ref, atol=1e-3, rtol=1e-3)):
    raise AssertionError(
        f"kernel/reference mismatch, max abs err = {float(jnp.max(jnp.abs(out - ref)))}")
  print("KERNEL_OK")
</pallas_src>

<mosaic_0001>
module attributes {stable_mosaic.version = 11 : i64} {
  func.func private @main(%arg0: i32) attributes {dimension_semantics = [#tpu.dimension_semantics<core_parallel>], iteration_bounds = array<i64: 2>, tpu.core_type = #tpu.core_type<sc_scalar_subcore>, window_params = []} {
    return
  }
}

module attributes {stable_mosaic.version = 11 : i64} {
  func.func private @main(%arg0: i32) attributes {dimension_semantics = [#tpu.dimension_semantics<core_parallel>], iteration_bounds = array<i64: 2>, tpu.core_type = #tpu.core_type<sc_scalar_subcore>, window_params = []} {
    return
  }
}

module attributes {stable_mosaic.version = 11 : i64} {
  func.func @gated_equivariant_kernel(%arg0: i32, %arg1: memref<128x32xf32, #tpu.memory_space<vmem>>, %arg2: memref<128x120xf32, #tpu.memory_space<vmem>>, %arg3: memref<2x128xf32, #tpu.memory_space<vmem>>, %arg4: memref<2x120x120xf32, #tpu.memory_space<vmem>>, %arg5: memref<120x24xf32, #tpu.memory_space<vmem>>, %arg6: memref<2x32x64xf32, #tpu.memory_space<vmem>>, %arg7: memref<2x24x64xf32, #tpu.memory_space<vmem>>, %arg8: memref<2x1x64xf32, #tpu.memory_space<vmem>>, %arg9: memref<2x64x32xf32, #tpu.memory_space<vmem>>, %arg10: memref<2x1x32xf32, #tpu.memory_space<vmem>>, %arg11: memref<2x64x120xf32, #tpu.memory_space<vmem>>, %arg12: memref<2x1x120xf32, #tpu.memory_space<vmem>>, %arg13: memref<2x32x32xf32, #tpu.memory_space<vmem>>, %arg14: memref<120x27xf32, #tpu.memory_space<vmem>>, %arg15: memref<4x32xf32, #tpu.memory_space<vmem>>, %arg16: memref<1x2x9xf32, #tpu.memory_space<vmem>>) attributes {dimension_semantics = [#tpu.dimension_semantics<parallel>], iteration_bounds = array<i64: 2>, scalar_prefetch = 0 : i64, scratch_operands = 0 : i64, tpu.core_type = #tpu.core_type<tc>, window_params = [{transform_indices = @transform_0, window_bounds = array<i64: 128, 32>}, {transform_indices = @transform_1, window_bounds = array<i64: 128, 120>}, {transform_indices = @transform_2, window_bounds = array<i64: 2, 128>}, {pipeline_mode = #tpu.pipeline_mode<synchronous>, transform_indices = @transform_3, window_bounds = array<i64: 2, 120, 120>}, {pipeline_mode = #tpu.pipeline_mode<synchronous>, transform_indices = @transform_4, window_bounds = array<i64: 120, 24>}, {pipeline_mode = #tpu.pipeline_mode<synchronous>, transform_indices = @transform_5, window_bounds = array<i64: 2, 32, 64>}, {pipeline_mode = #tpu.pipeline_mode<synchronous>, transform_indices = @transform_6, window_bounds = array<i64: 2, 24, 64>}, {pipeline_mode = #tpu.pipeline_mode<synchronous>, transform_indices = @transform_7, window_bounds = array<i64: 2, 1, 64>}, {pipeline_mode = #tpu.pipeline_mode<synchronous>, transform_indices = @transform_8, window_bounds = array<i64: 2, 64, 32>}, {pipeline_mode = #tpu.pipeline_mode<synchronous>, transform_indices = @transform_9, window_bounds = array<i64: 2, 1, 32>}, {pipeline_mode = #tpu.pipeline_mode<synchronous>, transform_indices = @transform_10, window_bounds = array<i64: 2, 64, 120>}, {pipeline_mode = #tpu.pipeline_mode<synchronous>, transform_indices = @transform_11, window_bounds = array<i64: 2, 1, 120>}, {pipeline_mode = #tpu.pipeline_mode<synchronous>, transform_indices = @transform_12, window_bounds = array<i64: 2, 32, 32>}, {pipeline_mode = #tpu.pipeline_mode<synchronous>, transform_indices = @transform_13, window_bounds = array<i64: 120, 27>}, {pipeline_mode = #tpu.pipeline_mode<synchronous>, transform_indices = @transform_14, window_bounds = array<i64: 4, 32>}, {transform_indices = @transform_15, window_bounds = array<i64: 1, 2, 9>}]} {
    %c0 = arith.constant 0 : index
    %c0_0 = arith.constant 0 : index
    %0 = vector.load %arg1[%c0, %c0_0] : memref<128x32xf32, #tpu.memory_space<vmem>>, vector<128x32xf32>
    %c0_1 = arith.constant 0 : index
    %c0_2 = arith.constant 0 : index
    %1 = vector.load %arg2[%c0_1, %c0_2] : memref<128x120xf32, #tpu.memory_space<vmem>>, vector<128x120xf32>
    %c0_3 = arith.constant 0 : index
    %c0_4 = arith.constant 0 : index
    %c0_5 = arith.constant 0 : index
    %2 = vector.load %arg4[%c0_3, %c0_4, %c0_5] : memref<2x120x120xf32, #tpu.memory_space<vmem>>, vector<1x120x120xf32>
    %3 = vector.shape_cast %2 : vector<1x120x120xf32> to vector<120x120xf32>
    %cst = arith.constant dense<0.000000e+00> : vector<128x120xf32>
    %4 = tpu.matmul %1, %3, %cst {dimension_numbers = #tpu.dot_dimension_numbers<[1], [0], [0], [1], [0, 0, 1, 1], [], []>} : vector<128x120xf32>, vector<120x120xf32>, vector<128x120xf32> -> vector<128x120xf32>
    %5 = arith.mulf %4, %4 : vector<128x120xf32>
    %c0_6 = arith.constant 0 : index
    %c0_7 = arith.constant 0 : index
    %6 = vector.load %arg5[%c0_6, %c0_7] : memref<120x24xf32, #tpu.memory_space<vmem>>, vector<120x24xf32>
    %cst_8 = arith.constant dense<0.000000e+00> : vector<128x24xf32>
    %7 = tpu.matmul %5, %6, %cst_8 {dimension_numbers = #tpu.dot_dimension_numbers<[1], [0], [0], [1], [0, 0, 1, 1], [], []>} : vector<128x120xf32>, vector<120x24xf32>, vector<128x24xf32> -> vector<128x24xf32>
    %cst_9 = arith.constant 9.99999993E-9 : f32
    %8 = vector.broadcast %cst_9 : f32 to vector<128x24xf32>
    %9 = arith.addf %7, %8 : vector<128x24xf32>
    %10 = math.sqrt %9 : vector<128x24xf32>
    %c0_10 = arith.constant 0 : index
    %c0_11 = arith.constant 0 : index
    %c0_12 = arith.constant 0 : index
    %11 = vector.load %arg6[%c0_10, %c0_11, %c0_12] : memref<2x32x64xf32, #tpu.memory_space<vmem>>, vector<1x32x64xf32>
    %12 = vector.shape_cast %11 : vector<1x32x64xf32> to vector<32x64xf32>
    %cst_13 = arith.constant dense<0.000000e+00> : vector<128x64xf32>
    %13 = tpu.matmul %0, %12, %cst_13 {dimension_numbers = #tpu.dot_dimension_numbers<[1], [0], [0], [1], [0, 0, 1, 1], [], []>} : vector<128x32xf32>, vector<32x64xf32>, vector<128x64xf32> -> vector<128x64xf32>
    %c0_14 = arith.constant 0 : index
    %c0_15 = arith.constant 0 : index
    %c0_16 = arith.constant 0 : index
    %14 = vector.load %arg7[%c0_14, %c0_15, %c0_16] : memref<2x24x64xf32, #tpu.memory_space<vmem>>, vector<1x24x64xf32>
    %15 = vector.shape_cast %14 : vector<1x24x64xf32> to vector<24x64xf32>
    %cst_17 = arith.constant dense<0.000000e+00> : vector<128x64xf32>
    %16 = tpu.matmul %10, %15, %cst_17 {dimension_numbers = #tpu.dot_dimension_numbers<[1], [0], [0], [1], [0, 0, 1, 1], [], []>} : vector<128x24xf32>, vector<24x64xf32>, vector<128x64xf32> -> vector<128x64xf32>
    %17 = arith.addf %13, %16 : vector<128x64xf32>
    %c0_18 = arith.constant 0 : index
    %c0_19 = arith.constant 0 : index
    %c0_20 = arith.constant 0 : index
    %18 = vector.load %arg8[%c0_18, %c0_19, %c0_20] : memref<2x1x64xf32, #tpu.memory_space<vmem>>, vector<1x1x64xf32>
    %19 = vector.shape_cast %18 : vector<1x1x64xf32> to vector<1x64xf32>
    %20 = vector.broadcast %19 : vector<1x64xf32> to vector<128x64xf32>
    %21 = arith.addf %17, %20 : vector<128x64xf32>
    %22 = arith.negf %21 : vector<128x64xf32>
    %23 = math.exp %22 : vector<128x64xf32>
    %cst_21 = arith.constant 1.000000e+00 : f32
    %24 = vector.broadcast %cst_21 : f32 to vector<128x64xf32>
    %25 = arith.addf %24, %23 : vector<128x64xf32>
    %26 = arith.divf %24, %25 : vector<128x64xf32>
    %27 = arith.mulf %21, %26 : vector<128x64xf32>
    %c0_22 = arith.constant 0 : index
    %c0_23 = arith.constant 0 : index
    %c0_24 = arith.constant 0 : index
    %28 = vector.load %arg9[%c0_22, %c0_23, %c0_24] : memref<2x64x32xf32, #tpu.memory_space<vmem>>, vector<1x64x32xf32>
    %29 = vector.shape_cast %28 : vector<1x64x32xf32> to vector<64x32xf32>
    %cst_25 = arith.constant dense<0.000000e+00> : vector<128x32xf32>
    %30 = tpu.matmul %27, %29, %cst_25 {dimension_numbers = #tpu.dot_dimension_numbers<[1], [0], [0], [1], [0, 0, 1, 1], [], []>} : vector<128x64xf32>, vector<64x32xf32>, vector<128x32xf32> -> vector<128x32xf32>
    %31 = arith.addf %0, %30 : vector<128x32xf32>
    %c0_26 = arith.constant 0 : index
    %c0_27 = arith.constant 0 : index
    %c0_28 = arith.constant 0 : index
    %32 = vector.load %arg10[%c0_26, %c0_27, %c0_28] : memref<2x1x32xf32, #tpu.memory_space<vmem>>, vector<1x1x32xf32>
    %33 = vector.shape_cast %32 : vector<1x1x32xf32> to vector<1x32xf32>
    %34 = vector.broadcast %33 : vector<1x32xf32> to vector<128x32xf32>
    %35 = arith.addf %31, %34 : vector<128x32xf32>
    %c0_29 = arith.constant 0 : index
    %c0_30 = arith.constant 0 : index
    %c0_31 = arith.constant 0 : index
    %36 = vector.load %arg11[%c0_29, %c0_30, %c0_31] : memref<2x64x120xf32, #tpu.memory_space<vmem>>, vector<1x64x120xf32>
    %37 = vector.shape_cast %36 : vector<1x64x120xf32> to vector<64x120xf32>
    %cst_32 = arith.constant dense<0.000000e+00> : vector<128x120xf32>
    %38 = tpu.matmul %27, %37, %cst_32 {dimension_numbers = #tpu.dot_dimension_numbers<[1], [0], [0], [1], [0, 0, 1, 1], [], []>} : vector<128x64xf32>, vector<64x120xf32>, vector<128x120xf32> -> vector<128x120xf32>
    %c0_33 = arith.constant 0 : index
    %c0_34 = arith.constant 0 : index
    %c0_35 = arith.constant 0 : index
    %39 = vector.load %arg12[%c0_33, %c0_34, %c0_35] : memref<2x1x120xf32, #tpu.memory_space<vmem>>, vector<1x1x120xf32>
    %40 = vector.shape_cast %39 : vector<1x1x120xf32> to vector<1x120xf32>
    %41 = vector.broadcast %40 : vector<1x120xf32> to vector<128x120xf32>
    %42 = arith.addf %38, %41 : vector<128x120xf32>
    %43 = arith.negf %42 : vector<128x120xf32>
    %44 = math.exp %43 : vector<128x120xf32>
    %cst_36 = arith.constant 1.000000e+00 : f32
    %45 = vector.broadcast %cst_36 : f32 to vector<128x120xf32>
    %46 = arith.addf %45, %44 : vector<128x120xf32>
    %47 = arith.divf %45, %46 : vector<128x120xf32>
    %48 = arith.mulf %4, %47 : vector<128x120xf32>
    %49 = arith.addf %1, %48 : vector<128x120xf32>
    %c1 = arith.constant 1 : index
    %c0_37 = arith.constant 0 : index
    %c0_38 = arith.constant 0 : index
    %50 = vector.load %arg4[%c1, %c0_37, %c0_38] : memref<2x120x120xf32, #tpu.memory_space<vmem>>, vector<1x120x120xf32>
    %51 = vector.shape_cast %50 : vector<1x120x120xf32> to vector<120x120xf32>
    %cst_39 = arith.constant dense<0.000000e+00> : vector<128x120xf32>
    %52 = tpu.matmul %49, %51, %cst_39 {dimension_numbers = #tpu.dot_dimension_numbers<[1], [0], [0], [1], [0, 0, 1, 1], [], []>} : vector<128x120xf32>, vector<120x120xf32>, vector<128x120xf32> -> vector<128x120xf32>
    %53 = arith.mulf %52, %52 : vector<128x120xf32>
    %c0_40 = arith.constant 0 : index
    %c0_41 = arith.constant 0 : index
    %54 = vector.load %arg5[%c0_40, %c0_41] : memref<120x24xf32, #tpu.memory_space<vmem>>, vector<120x24xf32>
    %cst_42 = arith.constant dense<0.000000e+00> : vector<128x24xf32>
    %55 = tpu.matmul %53, %54, %cst_42 {dimension_numbers = #tpu.dot_dimension_numbers<[1], [0], [0], [1], [0, 0, 1, 1], [], []>} : vector<128x120xf32>, vector<120x24xf32>, vector<128x24xf32> -> vector<128x24xf32>
    %cst_43 = arith.constant 9.99999993E-9 : f32
    %56 = vector.broadcast %cst_43 : f32 to vector<128x24xf32>
    %57 = arith.addf %55, %56 : vector<128x24xf32>
    %58 = math.sqrt %57 : vector<128x24xf32>
    %c1_44 = arith.constant 1 : index
    %c0_45 = arith.constant 0 : index
    %c0_46 = arith.constant 0 : index
    %59 = vector.load %arg6[%c1_44, %c0_45, %c0_46] : memref<2x32x64xf32, #tpu.memory_space<vmem>>, vector<1x32x64xf32>
    %60 = vector.shape_cast %59 : vector<1x32x64xf32> to vector<32x64xf32>
    %cst_47 = arith.constant dense<0.000000e+00> : vector<128x64xf32>
    %61 = tpu.matmul %35, %60, %cst_47 {dimension_numbers = #tpu.dot_dimension_numbers<[1], [0], [0], [1], [0, 0, 1, 1], [], []>} : vector<128x32xf32>, vector<32x64xf32>, vector<128x64xf32> -> vector<128x64xf32>
    %c1_48 = arith.constant 1 : index
    %c0_49 = arith.constant 0 : index
    %c0_50 = arith.constant 0 : index
    %62 = vector.load %arg7[%c1_48, %c0_49, %c0_50] : memref<2x24x64xf32, #tpu.memory_space<vmem>>, vector<1x24x64xf32>
    %63 = vector.shape_cast %62 : vector<1x24x64xf32> to vector<24x64xf32>
    %cst_51 = arith.constant dense<0.000000e+00> : vector<128x64xf32>
    %64 = tpu.matmul %58, %63, %cst_51 {dimension_numbers = #tpu.dot_dimension_numbers<[1], [0], [0], [1], [0, 0, 1, 1], [], []>} : vector<128x24xf32>, vector<24x64xf32>, vector<128x64xf32> -> vector<128x64xf32>
    %65 = arith.addf %61, %64 : vector<128x64xf32>
    %c1_52 = arith.constant 1 : index
    %c0_53 = arith.constant 0 : index
    %c0_54 = arith.constant 0 : index
    %66 = vector.load %arg8[%c1_52, %c0_53, %c0_54] : memref<2x1x64xf32, #tpu.memory_space<vmem>>, vector<1x1x64xf32>
    %67 = vector.shape_cast %66 : vector<1x1x64xf32> to vector<1x64xf32>
    %68 = vector.broadcast %67 : vector<1x64xf32> to vector<128x64xf32>
    %69 = arith.addf %65, %68 : vector<128x64xf32>
    %70 = arith.negf %69 : vector<128x64xf32>
    %71 = math.exp %70 : vector<128x64xf32>
    %cst_55 = arith.constant 1.000000e+00 : f32
    %72 = vector.broadcast %cst_55 : f32 to vector<128x64xf32>
    %73 = arith.addf %72, %71 : vector<128x64xf32>
    %74 = arith.divf %72, %73 : vector<128x64xf32>
    %75 = arith.mulf %69, %74 : vector<128x64xf32>
    %c1_56 = arith.constant 1 : index
    %c0_57 = arith.constant 0 : index
    %c0_58 = arith.constant 0 : index
    %76 = vector.load %arg9[%c1_56, %c0_57, %c0_58] : memref<2x64x32xf32, #tpu.memory_space<vmem>>, vector<1x64x32xf32>
    %77 = vector.shape_cast %76 : vector<1x64x32xf32> to vector<64x32xf32>
    %cst_59 = arith.constant dense<0.000000e+00> : vector<128x32xf32>
    %78 = tpu.matmul %75, %77, %cst_59 {dimension_numbers = #tpu.dot_dimension_numbers<[1], [0], [0], [1], [0, 0, 1, 1], [], []>} : vector<128x64xf32>, vector<64x32xf32>, vector<128x32xf32> -> vector<128x32xf32>
    %79 = arith.addf %35, %78 : vector<128x32xf32>
    %c1_60 = arith.constant 1 : index
    %c0_61 = arith.constant 0 : index
    %c0_62 = arith.constant 0 : index
    %80 = vector.load %arg10[%c1_60, %c0_61, %c0_62] : memref<2x1x32xf32, #tpu.memory_space<vmem>>, vector<1x1x32xf32>
    %81 = vector.shape_cast %80 : vector<1x1x32xf32> to vector<1x32xf32>
    %82 = vector.broadcast %81 : vector<1x32xf32> to vector<128x32xf32>
    %83 = arith.addf %79, %82 : vector<128x32xf32>
    %c1_63 = arith.constant 1 : index
    %c0_64 = arith.constant 0 : index
    %c0_65 = arith.constant 0 : index
    %84 = vector.load %arg11[%c1_63, %c0_64, %c0_65] : memref<2x64x120xf32, #tpu.memory_space<vmem>>, vector<1x64x120xf32>
    %85 = vector.shape_cast %84 : vector<1x64x120xf32> to vector<64x120xf32>
    %cst_66 = arith.constant dense<0.000000e+00> : vector<128x120xf32>
    %86 = tpu.matmul %75, %85, %cst_66 {dimension_numbers = #tpu.dot_dimension_numbers<[1], [0], [0], [1], [0, 0, 1, 1], [], []>} : vector<128x64xf32>, vector<64x120xf32>, vector<128x120xf32> -> vector<128x120xf32>
    %c1_67 = arith.constant 1 : index
    %c0_68 = arith.constant 0 : index
    %c0_69 = arith.constant 0 : index
    %87 = vector.load %arg12[%c1_67, %c0_68, %c0_69] : memref<2x1x120xf32, #tpu.memory_space<vmem>>, vector<1x1x120xf32>
    %88 = vector.shape_cast %87 : vector<1x1x120xf32> to vector<1x120xf32>
    %89 = vector.broadcast %88 : vector<1x120xf32> to vector<128x120xf32>
    %90 = arith.addf %86, %89 : vector<128x120xf32>
    %91 = arith.negf %90 : vector<128x120xf32>
    %92 = math.exp %91 : vector<128x120xf32>
    %cst_70 = arith.constant 1.000000e+00 : f32
    %93 = vector.broadcast %cst_70 : f32 to vector<128x120xf32>
    %94 = arith.addf %93, %92 : vector<128x120xf32>
    %95 = arith.divf %93, %94 : vector<128x120xf32>
    %96 = arith.mulf %52, %95 : vector<128x120xf32>
    %97 = arith.addf %49, %96 : vector<128x120xf32>
    %c0_71 = arith.constant 0 : index
    %c0_72 = arith.constant 0 : index
    %98 = vector.load %arg15[%c0_71, %c0_72] : memref<4x32xf32, #tpu.memory_space<vmem>>, vector<1x32xf32>
    %c1_73 = arith.constant 1 : index
    %c0_74 = arith.constant 0 : index
    %99 = vector.load %arg15[%c1_73, %c0_74] : memref<4x32xf32, #tpu.memory_space<vmem>>, vector<1x32xf32>
    %c2 = arith.constant 2 : index
    %c0_75 = arith.constant 0 : index
    %100 = vector.load %arg15[%c2, %c0_75] : memref<4x32xf32, #tpu.memory_space<vmem>>, vector<1x32xf32>
    %c3 = arith.constant 3 : index
    %c0_76 = arith.constant 0 : index
    %101 = vector.load %arg15[%c3, %c0_76] : memref<4x32xf32, #tpu.memory_space<vmem>>, vector<1x1xf32>
    %c0_77 = arith.constant 0 : index
    %c0_78 = arith.constant 0 : index
    %c0_79 = arith.constant 0 : index
    %102 = vector.load %arg13[%c0_77, %c0_78, %c0_79] : memref<2x32x32xf32, #tpu.memory_space<vmem>>, vector<1x32x32xf32>
    %103 = vector.shape_cast %102 : vector<1x32x32xf32> to vector<32x32xf32>
    %cst_80 = arith.constant dense<0.000000e+00> : vector<128x32xf32>
    %104 = tpu.matmul %83, %103, %cst_80 {dimension_numbers = #tpu.dot_dimension_numbers<[1], [0], [0], [1], [0, 0, 1, 1], [], []>} : vector<128x32xf32>, vector<32x32xf32>, vector<128x32xf32> -> vector<128x32xf32>
    %105 = vector.broadcast %98 : vector<1x32xf32> to vector<128x32xf32>
    %106 = arith.addf %104, %105 : vector<128x32xf32>
    %107 = arith.negf %106 : vector<128x32xf32>
    %108 = math.exp %107 : vector<128x32xf32>
    %cst_81 = arith.constant 1.000000e+00 : f32
    %109 = vector.broadcast %cst_81 : f32 to vector<128x32xf32>
    %110 = arith.addf %109, %108 : vector<128x32xf32>
    %111 = arith.divf %109, %110 : vector<128x32xf32>
    %112 = arith.mulf %106, %111 : vector<128x32xf32>
    %c1_82 = arith.constant 1 : index
    %c0_83 = arith.constant 0 : index
    %c0_84 = arith.constant 0 : index
    %113 = vector.load %arg13[%c1_82, %c0_83, %c0_84] : memref<2x32x32xf32, #tpu.memory_space<vmem>>, vector<1x32x32xf32>
    %114 = vector.shape_cast %113 : vector<1x32x32xf32> to vector<32x32xf32>
    %cst_85 = arith.constant dense<0.000000e+00> : vector<128x32xf32>
    %115 = tpu.matmul %112, %114, %cst_85 {dimension_numbers = #tpu.dot_dimension_numbers<[1], [0], [0], [1], [0, 0, 1, 1], [], []>} : vector<128x32xf32>, vector<32x32xf32>, vector<128x32xf32> -> vector<128x32xf32>
    %116 = vector.broadcast %99 : vector<1x32xf32> to vector<128x32xf32>
    %117 = arith.addf %115, %116 : vector<128x32xf32>
    %118 = arith.negf %117 : vector<128x32xf32>
    %119 = math.exp %118 : vector<128x32xf32>
    %cst_86 = arith.constant 1.000000e+00 : f32
    %120 = vector.broadcast %cst_86 : f32 to vector<128x32xf32>
    %121 = arith.addf %120, %119 : vector<128x32xf32>
    %122 = arith.divf %120, %121 : vector<128x32xf32>
    %123 = arith.mulf %117, %122 : vector<128x32xf32>
    %124 = vector.broadcast %100 : vector<1x32xf32> to vector<128x32xf32>
    %125 = arith.mulf %123, %124 : vector<128x32xf32>
    %cst_87 = arith.constant dense<0.000000e+00> : vector<128xf32>
    %126 = vector.multi_reduction <add>, %125, %cst_87 [1] : vector<128x32xf32> to vector<128xf32>
    %127 = vector.shape_cast %126 : vector<128xf32> to vector<128x1xf32>
    %128 = vector.broadcast %101 : vector<1x1xf32> to vector<128x1xf32>
    %129 = arith.addf %127, %128 : vector<128x1xf32>
    %c0_88 = arith.constant 0 : index
    %c0_89 = arith.constant 0 : index
    %130 = vector.load %arg14[%c0_88, %c0_89] : memref<120x27xf32, #tpu.memory_space<vmem>>, vector<120x27xf32>
    %cst_90 = arith.constant dense<0.000000e+00> : vector<128x27xf32>
    %131 = tpu.matmul %97, %130, %cst_90 {dimension_numbers = #tpu.dot_dimension_numbers<[1], [0], [0], [1], [0, 0, 1, 1], [], []>} : vector<128x120xf32>, vector<120x27xf32>, vector<128x27xf32> -> vector<128x27xf32>
    %132 = tpu.iota {dimensions = array<i32: 1>} : vector<128x9xi32>
    %c4_i32 = arith.constant 4 : i32
    %c0_i32 = arith.constant 0 : i32
    %133 = arith.cmpi eq, %c4_i32, %c0_i32 : i32
    %c1_i32 = arith.constant 1 : i32
    %134 = arith.select %133, %c1_i32, %c4_i32 : i32
    %135 = vector.broadcast %134 : i32 to vector<128x9xi32>
    %136 = arith.remsi %132, %135 : vector<128x9xi32>
    %c0_i32_91 = arith.constant 0 : i32
    %137 = vector.broadcast %c0_i32_91 : i32 to vector<128x9xi32>
    %138 = arith.cmpi ne, %136, %137 : vector<128x9xi32>
    %c0_i32_92 = arith.constant 0 : i32
    %139 = vector.broadcast %c0_i32_92 : i32 to vector<128x9xi32>
    %140 = arith.cmpi slt, %136, %139 : vector<128x9xi32>
    %c0_i32_93 = arith.constant 0 : i32
    %141 = arith.cmpi slt, %134, %c0_i32_93 : i32
    %142 = vector.broadcast %141 : i1 to vector<128x9xi1>
    %143 = vector.broadcast %142 : vector<128x9xi1> to vector<128x9xi1>
    %144 = arith.xori %140, %143 : vector<128x9xi1>
    %145 = arith.andi %144, %138 : vector<128x9xi1>
    %146 = vector.broadcast %134 : i32 to vector<128x9xi32>
    %147 = arith.addi %136, %146 : vector<128x9xi32>
    %148 = arith.select %145, %147, %136 : vector<128x9xi1>, vector<128x9xi32>
    %c0_i32_94 = arith.constant 0 : i32
    %149 = vector.broadcast %c0_i32_94 : i32 to vector<128x9xi32>
    %150 = arith.cmpi eq, %148, %149 : vector<128x9xi32>
    %cst_95 = arith.constant 1.000000e+00 : f32
    %cst_96 = arith.constant 0.000000e+00 : f32
    %151 = vector.broadcast %cst_95 : f32 to vector<128x9xf32>
    %152 = vector.broadcast %cst_96 : f32 to vector<128x9xf32>
    %153 = arith.select %150, %151, %152 : vector<128x9xi1>, vector<128x9xf32>
    %154 = vector.extract_strided_slice %131 {offsets = [0, 18], sizes = [128, 9], strides = [1, 1]} : vector<128x27xf32> to vector<128x9xf32>
    %155 = vector.extract_strided_slice %131 {offsets = [0, 0], sizes = [128, 9], strides = [1, 1]} : vector<128x27xf32> to vector<128x9xf32>
    %156 = vector.extract_strided_slice %131 {offsets = [0, 9], sizes = [128, 9], strides = [1, 1]} : vector<128x27xf32> to vector<128x9xf32>
    %157 = arith.mulf %155, %156 : vector<128x9xf32>
    %158 = arith.addf %154, %157 : vector<128x9xf32>
    %159 = vector.broadcast %129 : vector<128x1xf32> to vector<128x9xf32>
    %160 = arith.mulf %159, %153 : vector<128x9xf32>
    %161 = arith.addf %158, %160 : vector<128x9xf32>
    %c0_97 = arith.constant 0 : index
    %c0_98 = arith.constant 0 : index
    %162 = vector.load %arg3[%c0_97, %c0_98] : memref<2x128xf32, #tpu.memory_space<vmem>>, vector<2x128xf32>
    %cst_99 = arith.constant dense<0.000000e+00> : vector<2x9xf32>
    %163 = tpu.matmul %162, %161, %cst_99 {dimension_numbers = #tpu.dot_dimension_numbers<[1], [0], [0], [1], [0, 0, 1, 1], [], []>} : vector<2x128xf32>, vector<128x9xf32>, vector<2x9xf32> -> vector<2x9xf32>
    %c0_100 = arith.constant 0 : index
    %c0_101 = arith.constant 0 : index
    %c0_102 = arith.constant 0 : index
    %164 = vector.load %arg16[%c0_100, %c0_101, %c0_102] : memref<1x2x9xf32, #tpu.memory_space<vmem>>, vector<1x2x9xf32>
    %165 = vector.shape_cast %164 : vector<1x2x9xf32> to vector<2x9xf32>
    %166 = vector.shape_cast %163 : vector<2x9xf32> to vector<1x2x9xf32>
    tpu.vector_store %arg16[%c0_100, %c0_101, %c0_102], %166 {strides = array<i32>} : memref<1x2x9xf32, #tpu.memory_space<vmem>>, vector<1x2x9xf32>,
    return
  }
  func.func @transform_0(%arg0: i32) -> (i32, i32) {
    %c0_i32 = arith.constant 0 : i32
    %c0_i32_0 = arith.constant 0 : i32
    return %arg0, %c0_i32 : i32, i32
  }
  func.func @transform_1(%arg0: i32) -> (i32, i32) {
    %c0_i32 = arith.constant 0 : i32
    %c0_i32_0 = arith.constant 0 : i32
    return %arg0, %c0_i32 : i32, i32
  }
  func.func @transform_2(%arg0: i32) -> (i32, i32) {
    %c0_i32 = arith.constant 0 : i32
    %c0_i32_0 = arith.constant 0 : i32
    return %c0_i32, %arg0 : i32, i32
  }
  func.func @transform_3(%arg0: i32) -> (i32, i32, i32) {
    %c0_i32 = arith.constant 0 : i32
    %c0_i32_0 = arith.constant 0 : i32
    %c0_i32_1 = arith.constant 0 : i32
    %c0_i32_2 = arith.constant 0 : i32
    return %c0_i32, %c0_i32_0, %c0_i32_1 : i32, i32, i32
  }
  func.func @transform_4(%arg0: i32) -> (i32, i32) {
    %c0_i32 = arith.constant 0 : i32
    %c0_i32_0 = arith.constant 0 : i32
    %c0_i32_1 = arith.constant 0 : i32
    return %c0_i32, %c0_i32_0 : i32, i32
  }
  func.func @transform_5(%arg0: i32) -> (i32, i32, i32) {
    %c0_i32 = arith.constant 0 : i32
    %c0_i32_0 = arith.constant 0 : i32
    %c0_i32_1 = arith.constant 0 : i32
    %c0_i32_2 = arith.constant 0 : i32
    return %c0_i32, %c0_i32_0, %c0_i32_1 : i32, i32, i32
  }
  func.func @transform_6(%arg0: i32) -> (i32, i32, i32) {
    %c0_i32 = arith.constant 0 : i32
    %c0_i32_0 = arith.constant 0 : i32
    %c0_i32_1 = arith.constant 0 : i32
    %c0_i32_2 = arith.constant 0 : i32
    return %c0_i32, %c0_i32_0, %c0_i32_1 : i32, i32, i32
  }
  func.func @transform_7(%arg0: i32) -> (i32, i32, i32) {
    %c0_i32 = arith.constant 0 : i32
    %c0_i32_0 = arith.constant 0 : i32
    %c0_i32_1 = arith.constant 0 : i32
    %c0_i32_2 = arith.constant 0 : i32
    return %c0_i32, %c0_i32_0, %c0_i32_1 : i32, i32, i32
  }
  func.func @transform_8(%arg0: i32) -> (i32, i32, i32) {
    %c0_i32 = arith.constant 0 : i32
    %c0_i32_0 = arith.constant 0 : i32
    %c0_i32_1 = arith.constant 0 : i32
    %c0_i32_2 = arith.constant 0 : i32
    return %c0_i32, %c0_i32_0, %c0_i32_1 : i32, i32, i32
  }
  func.func @transform_9(%arg0: i32) -> (i32, i32, i32) {
    %c0_i32 = arith.constant 0 : i32
    %c0_i32_0 = arith.constant 0 : i32
    %c0_i32_1 = arith.constant 0 : i32
    %c0_i32_2 = arith.constant 0 : i32
    return %c0_i32, %c0_i32_0, %c0_i32_1 : i32, i32, i32
  }
  func.func @transform_10(%arg0: i32) -> (i32, i32, i32) {
    %c0_i32 = arith.constant 0 : i32
    %c0_i32_0 = arith.constant 0 : i32
    %c0_i32_1 = arith.constant 0 : i32
    %c0_i32_2 = arith.constant 0 : i32
    return %c0_i32, %c0_i32_0, %c0_i32_1 : i32, i32, i32
  }
  func.func @transform_11(%arg0: i32) -> (i32, i32, i32) {
    %c0_i32 = arith.constant 0 : i32
    %c0_i32_0 = arith.constant 0 : i32
    %c0_i32_1 = arith.constant 0 : i32
    %c0_i32_2 = arith.constant 0 : i32
    return %c0_i32, %c0_i32_0, %c0_i32_1 : i32, i32, i32
  }
  func.func @transform_12(%arg0: i32) -> (i32, i32, i32) {
    %c0_i32 = arith.constant 0 : i32
    %c0_i32_0 = arith.constant 0 : i32
    %c0_i32_1 = arith.constant 0 : i32
    %c0_i32_2 = arith.constant 0 : i32
    return %c0_i32, %c0_i32_0, %c0_i32_1 : i32, i32, i32
  }
  func.func @transform_13(%arg0: i32) -> (i32, i32) {
    %c0_i32 = arith.constant 0 : i32
    %c0_i32_0 = arith.constant 0 : i32
    %c0_i32_1 = arith.constant 0 : i32
    return %c0_i32, %c0_i32_0 : i32, i32
  }
  func.func @transform_14(%arg0: i32) -> (i32, i32) {
    %c0_i32 = arith.constant 0 : i32
    %c0_i32_0 = arith.constant 0 : i32
    %c0_i32_1 = arith.constant 0 : i32
    return %c0_i32, %c0_i32_0 : i32, i32
  }
  func.func @transform_15(%arg0: i32) -> (i32, i32, i32) {
    %c0_i32 = arith.constant 0 : i32
    %c0_i32_0 = arith.constant 0 : i32
    %c0_i32_1 = arith.constant 0 : i32
    return %arg0, %c0_i32, %c0_i32_0 : i32, i32, i32
  }
}

</mosaic_0001>

<llo_original>
// kernel: gated_equivariant_forward.1
$region0: #{gated_equivariant_forward.1}
  #allocation0 [shape = 'u32[]', space=smem, size = 0x4, offset = 0x4, fixed_abs, tag = 'smem constant byte address 0x4 - core index']
  #allocation1 [shape = 'u32[144,128]{1,0:T(1,128)}', space=vmem, size = 0x12000, scoped, tag = 'internal scratch']
  %s0 = inlined_call_operand.vmem [shape: f32[256,32], index: 0, kind: input, shape index: {}]
  %s1 = inlined_call_operand.vmem [shape: f32[256,120], index: 1, kind: input, shape index: {}]
  %s2 = inlined_call_operand.vmem [shape: f32[2,256], index: 2, kind: input, shape index: {}]
  %s3 = inlined_call_operand.vmem [shape: f32[2,120,120], index: 3, kind: input, shape index: {}]
  %s4 = inlined_call_operand.vmem [shape: f32[120,24], index: 4, kind: input, shape index: {}]
  %s5 = inlined_call_operand.vmem [shape: f32[2,32,64], index: 5, kind: input, shape index: {}]
  %s6 = inlined_call_operand.vmem [shape: f32[2,24,64], index: 6, kind: input, shape index: {}]
  %s7 = inlined_call_operand.vmem [shape: f32[2,1,64], index: 7, kind: input, shape index: {}]
  %s8 = inlined_call_operand.vmem [shape: f32[2,64,32], index: 8, kind: input, shape index: {}]
  %s9 = inlined_call_operand.vmem [shape: f32[2,1,32], index: 9, kind: input, shape index: {}]
  %s10 = inlined_call_operand.vmem [shape: f32[2,64,120], index: 10, kind: input, shape index: {}]
  %s11 = inlined_call_operand.vmem [shape: f32[2,1,120], index: 11, kind: input, shape index: {}]
  %s12 = inlined_call_operand.vmem [shape: f32[2,32,32], index: 12, kind: input, shape index: {}]
  %s13 = inlined_call_operand.vmem [shape: f32[120,27], index: 13, kind: input, shape index: {}]
  %s14 = inlined_call_operand.vmem [shape: f32[4,32], index: 14, kind: input, shape index: {}]
  %s15 = inlined_call_operand.vmem [shape: f32[2,2,9], index: 15, kind: output, shape index: {}]
  %s16 = sld [smem:[#allocation0]]
  $region93: #{gated_equivariant_forward.1} parent=0
    _
  %s18 = ssub.s32 1, %s16
  %s19 = scalar_select 0, %s18, %s16
  loop: start=0, step=1, limit=4
  $region2: #{gated_equivariant_forward.1} parent=0 // loop_pre_header
    _
  $region3: #{gated_equivariant_forward.1} parent=0 // loop_header
    %s21 = sphi 0, %s25
    %p22 = scmp.ge.s32.totalorder %s21, 4
    %s31 = sphi 0, %s33
    %s34 = sphi 0, %s31
    %s35 = sphi 0, %s34
    %s51 = sphi 0, %s35
    %s57 = sphi 0, %s59
    %s60 = sphi 0, %s57
    %s61 = sphi 0, %s60
    %s77 = sphi 0, %s61
    %s83 = sphi 0, %s85
    %s86 = sphi 0, %s83
    %s87 = sphi 0, %s86
    %s103 = sphi 0, %s87
    %s107 = sphi 0, %s107
    %s109 = sphi 0, %s107
    %s110 = sphi 0, %s109
    %s124 = sphi 0, %s110
    %s128 = sphi 0, %s128
    %s130 = sphi 0, %s128
    %s131 = sphi 0, %s130
    %s145 = sphi 0, %s131
    %s149 = sphi 0, %s149
    %s151 = sphi 0, %s149
    %s152 = sphi 0, %s151
    %s166 = sphi 0, %s152
    %s170 = sphi 0, %s170
    %s172 = sphi 0, %s170
    %s173 = sphi 0, %s172
    %s187 = sphi 0, %s173
    %s191 = sphi 0, %s191
    %s193 = sphi 0, %s191
    %s194 = sphi 0, %s193
    %s208 = sphi 0, %s194
    %s212 = sphi 0, %s212
    %s214 = sphi 0, %s212
    %s215 = sphi 0, %s214
    %s229 = sphi 0, %s215
    %s233 = sphi 0, %s233
    %s235 = sphi 0, %s233
    %s236 = sphi 0, %s235
    %s250 = sphi 0, %s236
    %s254 = sphi 0, %s254
    %s256 = sphi 0, %s254
    %s257 = sphi 0, %s256
    %s271 = sphi 0, %s257
    %s275 = sphi 0, %s275
    %s277 = sphi 0, %s275
    %s278 = sphi 0, %s277
    %s292 = sphi 0, %s278
    %s296 = sphi 0, %s296
    %s298 = sphi 0, %s296
    %s299 = sphi 0, %s298
    %s313 = sphi 0, %s299
    %s317 = sphi 0, %s317
    %s319 = sphi 0, %s317
    %s320 = sphi 0, %s319
    %s334 = sphi 0, %s320
    %s338 = sphi 0, %s338
    %s340 = sphi 0, %s338
    %s341 = sphi 0, %s340
    %s355 = sphi 0, %s341
    %s361 = sphi 0, %s363
    %s364 = sphi 0, %s361
    %s365 = sphi 0, %s364
    %s381 = sphi 0, %s365
  $region4: #{gated_equivariant_forward.1} parent=0 // loop_header_branch
    %24 = sbr.rel (%p22) target = $region8
  $region5: #{gated_equivariant_forward.1} parent=0 // loop_body
    %s26 = ssub.s32 %s21, 1
    %s27 = ssub.s32 %s21, 2
    %s28 = sadd.s32 %s21, 1
    %s29 = ssub.s32 %s21, %s28
    %p30 = scmp.eq.s32.totalorder %s29, 0
    %s32 = sadd.s32 %s31, 1
    %s33 = scalar_select %p30, %s31, %s32
    %p36 = pneg %p30
    %p37 = scmp.eq.s32.totalorder %s21, 1
    %p38 = por %p36, %p37
    %p39 = scmp.ne.s32.totalorder %s31, %s34
    %p40 = scmp.eq.s32.totalorder %s21, 0
    %p41 = por %p39, %p40
    %p42 = scmp.ne.s32.totalorder %s31, %s34
    %p43 = scmp.eq.s32.totalorder %s26, 1
    %p44 = por %p42, %p43
    %p45 = scmp.ne.s32.totalorder %s34, %s35
    %p46 = scmp.eq.s32.totalorder %s26, 0
    %p47 = por %p45, %p46
    %p48 = scmp.ne.s32.totalorder %s34, %s35
    %p49 = scmp.eq.s32.totalorder %s27, 1
    %p50 = por %p48, %p49
    %p52 = scmp.ne.s32.totalorder %s35, %s51
    %p53 = scmp.eq.s32.totalorder %s27, 0
    %p54 = por %p52, %p53
    %s55 = ssub.s32 %s21, %s28
    %p56 = scmp.eq.s32.totalorder %s55, 0
    %s58 = sadd.s32 %s57, 1
    %s59 = scalar_select %p56, %s57, %s58
    %p62 = pneg %p56
    %p63 = scmp.eq.s32.totalorder %s21, 1
    %p64 = por %p62, %p63
    %p65 = scmp.ne.s32.totalorder %s57, %s60
    %p66 = scmp.eq.s32.totalorder %s21, 0
    %p67 = por %p65, %p66
    %p68 = scmp.ne.s32.totalorder %s57, %s60
    %p69 = scmp.eq.s32.totalorder %s26, 1
    %p70 = por %p68, %p69
    %p71 = scmp.ne.s32.totalorder %s60, %s61
    %p72 = scmp.eq.s32.totalorder %s26, 0
    %p73 = por %p71, %p72
    %p74 = scmp.ne.s32.totalorder %s60, %s61
    %p75 = scmp.eq.s32.totalorder %s27, 1
    %p76 = por %p74, %p75
    %p78 = scmp.ne.s32.totalorder %s61, %s77
    %p79 = scmp.eq.s32.totalorder %s27, 0
    %p80 = por %p78, %p79
    %s81 = ssub.s32 %s21, %s28
    %p82 = scmp.eq.s32.totalorder %s81, 0
    %s84 = sadd.s32 %s83, 1
    %s85 = scalar_select %p82, %s83, %s84
    %p88 = pneg %p82
    %p89 = scmp.eq.s32.totalorder %s21, 1
    %p90 = por %p88, %p89
    %p91 = scmp.ne.s32.totalorder %s83, %s86
    %p92 = scmp.eq.s32.totalorder %s21, 0
    %p93 = por %p91, %p92
    %p94 = scmp.ne.s32.totalorder %s83, %s86
    %p95 = scmp.eq.s32.totalorder %s26, 1
    %p96 = por %p94, %p95
    %p97 = scmp.ne.s32.totalorder %s86, %s87
    %p98 = scmp.eq.s32.totalorder %s26, 0
    %p99 = por %p97, %p98
    %p100 = scmp.ne.s32.totalorder %s86, %s87
    %p101 = scmp.eq.s32.totalorder %s27, 1
    %p102 = por %p100, %p101
    %p104 = scmp.ne.s32.totalorder %s87, %s103
    %p105 = scmp.eq.s32.totalorder %s27, 0
    %p106 = por %p104, %p105
    %s108 = sadd.s32 %s107, 1
    %p111 = scmp.eq.s32.totalorder %s21, 1
    %p112 = scmp.ne.s32.totalorder %s107, %s109
    %p113 = scmp.eq.s32.totalorder %s21, 0
    %p114 = por %p112, %p113
    %p115 = scmp.ne.s32.totalorder %s107, %s109
    %p116 = scmp.eq.s32.totalorder %s26, 1
    %p117 = por %p115, %p116
    %p118 = scmp.ne.s32.totalorder %s109, %s110
    %p119 = scmp.eq.s32.totalorder %s26, 0
    %p120 = por %p118, %p119
    %p121 = scmp.ne.s32.totalorder %s109, %s110
    %p122 = scmp.eq.s32.totalorder %s27, 1
    %p123 = por %p121, %p122
    %p125 = scmp.ne.s32.totalorder %s110, %s124
    %p126 = scmp.eq.s32.totalorder %s27, 0
    %p127 = por %p125, %p126
    %s129 = sadd.s32 %s128, 1
    %p132 = scmp.eq.s32.totalorder %s21, 1
    %p133 = scmp.ne.s32.totalorder %s128, %s130
    %p134 = scmp.eq.s32.totalorder %s21, 0
    %p135 = por %p133, %p134
    %p136 = scmp.ne.s32.totalorder %s128, %s130
    %p137 = scmp.eq.s32.totalorder %s26, 1
    %p138 = por %p136, %p137
    %p139 = scmp.ne.s32.totalorder %s130, %s131
    %p140 = scmp.eq.s32.totalorder %s26, 0
    %p141 = por %p139, %p140
    %p142 = scmp.ne.s32.totalorder %s130, %s131
    %p143 = scmp.eq.s32.totalorder %s27, 1
    %p144 = por %p142, %p143
    %p146 = scmp.ne.s32.totalorder %s131, %s145
    %p147 = scmp.eq.s32.totalorder %s27, 0
    %p148 = por %p146, %p147
    %s150 = sadd.s32 %s149, 1
    %p153 = scmp.eq.s32.totalorder %s21, 1
    %p154 = scmp.ne.s32.totalorder %s149, %s151
    %p155 = scmp.eq.s32.totalorder %s21, 0
    %p156 = por %p154, %p155
    %p157 = scmp.ne.s32.totalorder %s149, %s151
    %p158 = scmp.eq.s32.totalorder %s26, 1
    %p159 = por %p157, %p158
    %p160 = scmp.ne.s32.totalorder %s151, %s152
    %p161 = scmp.eq.s32.totalorder %s26, 0
    %p162 = por %p160, %p161
    %p163 = scmp.ne.s32.totalorder %s151, %s152
    %p164 = scmp.eq.s32.totalorder %s27, 1
    %p165 = por %p163, %p164
    %p167 = scmp.ne.s32.totalorder %s152, %s166
    %p168 = scmp.eq.s32.totalorder %s27, 0
    %p169 = por %p167, %p168
    %s171 = sadd.s32 %s170, 1
    %p174 = scmp.eq.s32.totalorder %s21, 1
    %p175 = scmp.ne.s32.totalorder %s170, %s172
    %p176 = scmp.eq.s32.totalorder %s21, 0
    %p177 = por %p175, %p176
    %p178 = scmp.ne.s32.totalorder %s170, %s172
    %p179 = scmp.eq.s32.totalorder %s26, 1
    %p180 = por %p178, %p179
    %p181 = scmp.ne.s32.totalorder %s172, %s173
    %p182 = scmp.eq.s32.totalorder %s26, 0
    %p183 = por %p181, %p182
    %p184 = scmp.ne.s32.totalorder %s172, %s173
    %p185 = scmp.eq.s32.totalorder %s27, 1
    %p186 = por %p184, %p185
    %p188 = scmp.ne.s32.totalorder %s173, %s187
    %p189 = scmp.eq.s32.totalorder %s27, 0
    %p190 = por %p188, %p189
    %s192 = sadd.s32 %s191, 1
    %p195 = scmp.eq.s32.totalorder %s21, 1
    %p196 = scmp.ne.s32.totalorder %s191, %s193
    %p197 = scmp.eq.s32.totalorder %s21, 0
    %p198 = por %p196, %p197
    %p199 = scmp.ne.s32.totalorder %s191, %s193
    %p200 = scmp.eq.s32.totalorder %s26, 1
    %p201 = por %p199, %p200
    %p202 = scmp.ne.s32.totalorder %s193, %s194
    %p203 = scmp.eq.s32.totalorder %s26, 0
    %p204 = por %p202, %p203
    %p205 = scmp.ne.s32.totalorder %s193, %s194
    %p206 = scmp.eq.s32.totalorder %s27, 1
    %p207 = por %p205, %p206
    %p209 = scmp.ne.s32.totalorder %s194, %s208
    %p210 = scmp.eq.s32.totalorder %s27, 0
    %p211 = por %p209, %p210
    %s213 = sadd.s32 %s212, 1
    %p216 = scmp.eq.s32.totalorder %s21, 1
    %p217 = scmp.ne.s32.totalorder %s212, %s214
    %p218 = scmp.eq.s32.totalorder %s21, 0
    %p219 = por %p217, %p218
    %p220 = scmp.ne.s32.totalorder %s212, %s214
    %p221 = scmp.eq.s32.totalorder %s26, 1
    %p222 = por %p220, %p221
    %p223 = scmp.ne.s32.totalorder %s214, %s215
    %p224 = scmp.eq.s32.totalorder %s26, 0
    %p225 = por %p223, %p224
    %p226 = scmp.ne.s32.totalorder %s214, %s215
    %p227 = scmp.eq.s32.totalorder %s27, 1
    %p228 = por %p226, %p227
    %p230 = scmp.ne.s32.totalorder %s215, %s229
    %p231 = scmp.eq.s32.totalorder %s27, 0
    %p232 = por %p230, %p231
    %s234 = sadd.s32 %s233, 1
    %p237 = scmp.eq.s32.totalorder %s21, 1
    %p238 = scmp.ne.s32.totalorder %s233, %s235
    %p239 = scmp.eq.s32.totalorder %s21, 0
    %p240 = por %p238, %p239
    %p241 = scmp.ne.s32.totalorder %s233, %s235
    %p242 = scmp.eq.s32.totalorder %s26, 1
    %p243 = por %p241, %p242
    %p244 = scmp.ne.s32.totalorder %s235, %s236
    %p245 = scmp.eq.s32.totalorder %s26, 0
    %p246 = por %p244, %p245
    %p247 = scmp.ne.s32.totalorder %s235, %s236
    %p248 = scmp.eq.s32.totalorder %s27, 1
    %p249 = por %p247, %p248
    %p251 = scmp.ne.s32.totalorder %s236, %s250
    %p252 = scmp.eq.s32.totalorder %s27, 0
    %p253 = por %p251, %p252
    %s255 = sadd.s32 %s254, 1
    %p258 = scmp.eq.s32.totalorder %s21, 1
    %p259 = scmp.ne.s32.totalorder %s254, %s256
    %p260 = scmp.eq.s32.totalorder %s21, 0
    %p261 = por %p259, %p260
    %p262 = scmp.ne.s32.totalorder %s254, %s256
    %p263 = scmp.eq.s32.totalorder %s26, 1
    %p264 = por %p262, %p263
    %p265 = scmp.ne.s32.totalorder %s256, %s257
    %p266 = scmp.eq.s32.totalorder %s26, 0
    %p267 = por %p265, %p266
    %p268 = scmp.ne.s32.totalorder %s256, %s257
    %p269 = scmp.eq.s32.totalorder %s27, 1
    %p270 = por %p268, %p269
    %p272 = scmp.ne.s32.totalorder %s257, %s271
    %p273 = scmp.eq.s32.totalorder %s27, 0
    %p274 = por %p272, %p273
    %s276 = sadd.s32 %s275, 1
    %p279 = scmp.eq.s32.totalorder %s21, 1
    %p280 = scmp.ne.s32.totalorder %s275, %s277
    %p281 = scmp.eq.s32.totalorder %s21, 0
    %p282 = por %p280, %p281
    %p283 = scmp.ne.s32.totalorder %s275, %s277
    %p284 = scmp.eq.s32.totalorder %s26, 1
    %p285 = por %p283, %p284
    %p286 = scmp.ne.s32.totalorder %s277, %s278
    %p287 = scmp.eq.s32.totalorder %s26, 0
    %p288 = por %p286, %p287
    %p289 = scmp.ne.s32.totalorder %s277, %s278
    %p290 = scmp.eq.s32.totalorder %s27, 1
    %p291 = por %p289, %p290
    %p293 = scmp.ne.s32.totalorder %s278, %s292
    %p294 = scmp.eq.s32.totalorder %s27, 0
    %p295 = por %p293, %p294
    %s297 = sadd.s32 %s296, 1
    %p300 = scmp.eq.s32.totalorder %s21, 1
    %p301 = scmp.ne.s32.totalorder %s296, %s298
    %p302 = scmp.eq.s32.totalorder %s21, 0
    %p303 = por %p301, %p302
    %p304 = scmp.ne.s32.totalorder %s296, %s298
    %p305 = scmp.eq.s32.totalorder %s26, 1
    %p306 = por %p304, %p305
    %p307 = scmp.ne.s32.totalorder %s298, %s299
    %p308 = scmp.eq.s32.totalorder %s26, 0
    %p309 = por %p307, %p308
    %p310 = scmp.ne.s32.totalorder %s298, %s299
    %p311 = scmp.eq.s32.totalorder %s27, 1
    %p312 = por %p310, %p311
    %p314 = scmp.ne.s32.totalorder %s299, %s313
    %p315 = scmp.eq.s32.totalorder %s27, 0
    %p316 = por %p314, %p315
    %s318 = sadd.s32 %s317, 1
    %p321 = scmp.eq.s32.totalorder %s21, 1
    %p322 = scmp.ne.s32.totalorder %s317, %s319
    %p323 = scmp.eq.s32.totalorder %s21, 0
    %p324 = por %p322, %p323
    %p325 = scmp.ne.s32.totalorder %s317, %s319
    %p326 = scmp.eq.s32.totalorder %s26, 1
    %p327 = por %p325, %p326
    %p328 = scmp.ne.s32.totalorder %s319, %s320
    %p329 = scmp.eq.s32.totalorder %s26, 0
    %p330 = por %p328, %p329
    %p331 = scmp.ne.s32.totalorder %s319, %s320
    %p332 = scmp.eq.s32.totalorder %s27, 1
    %p333 = por %p331, %p332
    %p335 = scmp.ne.s32.totalorder %s320, %s334
    %p336 = scmp.eq.s32.totalorder %s27, 0
    %p337 = por %p335, %p336
    %s339 = sadd.s32 %s338, 1
    %p342 = scmp.eq.s32.totalorder %s21, 1
    %p343 = scmp.ne.s32.totalorder %s338, %s340
    %p344 = scmp.eq.s32.totalorder %s21, 0
    %p345 = por %p343, %p344
    %p346 = scmp.ne.s32.totalorder %s338, %s340
    %p347 = scmp.eq.s32.totalorder %s26, 1
    %p348 = por %p346, %p347
    %p349 = scmp.ne.s32.totalorder %s340, %s341
    %p350 = scmp.eq.s32.totalorder %s26, 0
    %p351 = por %p349, %p350
    %p352 = scmp.ne.s32.totalorder %s340, %s341
    %p353 = scmp.eq.s32.totalorder %s27, 1
    %p354 = por %p352, %p353
    %p356 = scmp.ne.s32.totalorder %s341, %s355
    %p357 = scmp.eq.s32.totalorder %s27, 0
    %p358 = por %p356, %p357
    %s359 = ssub.s32 %s21, %s28
    %p360 = scmp.eq.s32.totalorder %s359, 0
    %s362 = sadd.s32 %s361, 1
    %s363 = scalar_select %p360, %s361, %s362
    %p366 = pneg %p360
    %p367 = scmp.eq.s32.totalorder %s21, 1
    %p368 = por %p366, %p367
    %p369 = scmp.ne.s32.totalorder %s361, %s364
    %p370 = scmp.eq.s32.totalorder %s21, 0
    %p371 = por %p369, %p370
    %p372 = scmp.ne.s32.totalorder %s361, %s364
    %p373 = scmp.eq.s32.totalorder %s26, 1
    %p374 = por %p372, %p373
    %p375 = scmp.ne.s32.totalorder %s364, %s365
    %p376 = scmp.eq.s32.totalorder %s26, 0
    %p377 = por %p375, %p376
    %p378 = scmp.ne.s32.totalorder %s364, %s365
    %p379 = scmp.eq.s32.totalorder %s27, 1
    %p380 = por %p378, %p379
    %p382 = scmp.ne.s32.totalorder %s365, %s381
    %p383 = scmp.eq.s32.totalorder %s27, 0
    %p384 = por %p382, %p383
    %p385 = scmp.le.s32.totalorder 1, %s21
    %p386 = scmp.lt.s32.totalorder %s21, 3
    %p387 = pnand %p385, %p386
    %p388 = pneg %p387
    // Predicated region
    $region9: #{gated_equivariant_forward.1} parent=5 // pred_check
      _
    $region10: #{gated_equivariant_forward.1} parent=5 // pred_check_branch
      %390 = sbr.rel (%p387) target = $region12
    $region11: #{gated_equivariant_forward.1} parent=5 // pred_region
      %s391 = ssub.s32 %s21, 1
      // Predicated region
      $region13: #{gated_equivariant_forward.1} parent=11 // pred_check
        %p392 = pneg %p120
      $region14: #{gated_equivariant_forward.1} parent=11 // pred_check_branch
        %394 = sbr.rel (%p392) target = $region16
      $region15: #{gated_equivariant_forward.1} parent=11 // pred_region
        _
      $region16: #{gated_equivariant_forward.1} parent=11 // pred_fallthru
        _
      // Predicated region
      $region17: #{gated_equivariant_forward.1} parent=11 // pred_check
        %p395 = pneg %p141
      $region18: #{gated_equivariant_forward.1} parent=11 // pred_check_branch
        %397 = sbr.rel (%p395) target = $region20
      $region19: #{gated_equivariant_forward.1} parent=11 // pred_region
        _
      $region20: #{gated_equivariant_forward.1} parent=11 // pred_fallthru
        _
      // Predicated region
      $region21: #{gated_equivariant_forward.1} parent=11 // pred_check
        %p398 = pneg %p162
      $region22: #{gated_equivariant_forward.1} parent=11 // pred_check_branch
        %400 = sbr.rel (%p398) target = $region24
      $region23: #{gated_equivariant_forward.1} parent=11 // pred_region
        _
      $region24: #{gated_equivariant_forward.1} parent=11 // pred_fallthru
        _
      // Predicated region
      $region25: #{gated_equivariant_forward.1} parent=11 // pred_check
        %p401 = pneg %p183
      $region26: #{gated_equivariant_forward.1} parent=11 // pred_check_branch
        %403 = sbr.rel (%p401) target = $region28
      $region27: #{gated_equivariant_forward.1} parent=11 // pred_region
        _
      $region28: #{gated_equivariant_forward.1} parent=11 // pred_fallthru
        _
      // Predicated region
      $region29: #{gated_equivariant_forward.1} parent=11 // pred_check
        %p404 = pneg %p204
      $region30: #{gated_equivariant_forward.1} parent=11 // pred_check_branch
        %406 = sbr.rel (%p404) target = $region32
      $region31: #{gated_equivariant_forward.1} parent=11 // pred_region
        _
      $region32: #{gated_equivariant_forward.1} parent=11 // pred_fallthru
        _
      // Predicated region
      $region33: #{gated_equivariant_forward.1} parent=11 // pred_check
        %p407 = pneg %p225
      $region34: #{gated_equivariant_forward.1} parent=11 // pred_check_branch
        %409 = sbr.rel (%p407) target = $region36
      $region35: #{gated_equivariant_forward.1} parent=11 // pred_region
        _
      $region36: #{gated_equivariant_forward.1} parent=11 // pred_fallthru
        _
      // Predicated region
      $region37: #{gated_equivariant_forward.1} parent=11 // pred_check
        %p410 = pneg %p246
      $region38: #{gated_equivariant_forward.1} parent=11 // pred_check_branch
        %412 = sbr.rel (%p410) target = $region40
      $region39: #{gated_equivariant_forward.1} parent=11 // pred_region
        _
      $region40: #{gated_equivariant_forward.1} parent=11 // pred_fallthru
        _
      // Predicated region
      $region41: #{gated_equivariant_forward.1} parent=11 // pred_check
        %p413 = pneg %p267
      $region42: #{gated_equivariant_forward.1} parent=11 // pred_check_branch
        %415 = sbr.rel (%p413) target = $region44
      $region43: #{gated_equivariant_forward.1} parent=11 // pred_region
        _
      $region44: #{gated_equivariant_forward.1} parent=11 // pred_fallthru
        _
      // Predicated region
      $region45: #{gated_equivariant_forward.1} parent=11 // pred_check
        %p416 = pneg %p288
      $region46: #{gated_equivariant_forward.1} parent=11 // pred_check_branch
        %418 = sbr.rel (%p416) target = $region48
      $region47: #{gated_equivariant_forward.1} parent=11 // pred_region
        _
      $region48: #{gated_equivariant_forward.1} parent=11 // pred_fallthru
        _
      // Predicated region
      $region49: #{gated_equivariant_forward.1} parent=11 // pred_check
        %p419 = pneg %p309
      $region50: #{gated_equivariant_forward.1} parent=11 // pred_check_branch
        %421 = sbr.rel (%p419) target = $region52
      $region51: #{gated_equivariant_forward.1} parent=11 // pred_region
        _
      $region52: #{gated_equivariant_forward.1} parent=11 // pred_fallthru
        _
      // Predicated region
      $region53: #{gated_equivariant_forward.1} parent=11 // pred_check
        %p422 = pneg %p330
      $region54: #{gated_equivariant_forward.1} parent=11 // pred_check_branch
        %424 = sbr.rel (%p422) target = $region56
      $region55: #{gated_equivariant_forward.1} parent=11 // pred_region
        _
      $region56: #{gated_equivariant_forward.1} parent=11 // pred_fallthru
        _
      // Predicated region
      $region57: #{gated_equivariant_forward.1} parent=11 // pred_check
        %p425 = pneg %p351
      $region58: #{gated_equivariant_forward.1} parent=11 // pred_check_branch
        %427 = sbr.rel (%p425) target = $region60
      $region59: #{gated_equivariant_forward.1} parent=11 // pred_region
        _
      $region60: #{gated_equivariant_forward.1} parent=11 // pred_fallthru
        _
    $region12: #{gated_equivariant_forward.1} parent=5 // pred_fallthru
      _
    %p428 = scmp.lt.s32.totalorder %s21, 2
    // Predicated region
    $region61: #{gated_equivariant_forward.1} parent=5 // pred_check
      %p429 = pneg %p428
    $region62: #{gated_equivariant_forward.1} parent=5 // pred_check_branch
      %431 = sbr.rel (%p429) target = $region64
    $region63: #{gated_equivariant_forward.1} parent=5 // pred_region
      // Predicated region
      $region65: #{gated_equivariant_forward.1} parent=63 // pred_check
        %p432 = pneg %p41
      $region66: #{gated_equivariant_forward.1} parent=63 // pred_check_branch
        %434 = sbr.rel (%p432) target = $region68
      $region67: #{gated_equivariant_forward.1} parent=63 // pred_region
        %s435 = smul.u32 16, %s21
        %p436 = scmp.lt.s32.totalorder %s435, 31
        %s437 = scalar_select %p436, %s435, 31
        %s438 = smul.addr %s437, 8
        %s439 = scalar_lea.vmem %s0, %s438
        %s440 = smul.u32 16, %s21
      $region68: #{gated_equivariant_forward.1} parent=63 // pred_fallthru
        _
      // Predicated region
      $region69: #{gated_equivariant_forward.1} parent=63 // pred_check
        %p441 = pneg %p67
      $region70: #{gated_equivariant_forward.1} parent=63 // pred_check_branch
        %443 = sbr.rel (%p441) target = $region72
      $region71: #{gated_equivariant_forward.1} parent=63 // pred_region
        %s444 = smul.u32 16, %s21
        %p445 = scmp.lt.s32.totalorder %s444, 31
        %s446 = scalar_select %p445, %s444, 31
        %s447 = smul.addr %s446, 8
        %s448 = scalar_lea.vmem %s1, %s447
        %s449 = smul.u32 16, %s21
      $region72: #{gated_equivariant_forward.1} parent=63 // pred_fallthru
        _
      // Predicated region
      $region73: #{gated_equivariant_forward.1} parent=63 // pred_check
        %p450 = pneg %p93
      $region74: #{gated_equivariant_forward.1} parent=63 // pred_check_branch
        %452 = sbr.rel (%p450) target = $region76
      $region75: #{gated_equivariant_forward.1} parent=63 // pred_region
        %p453 = scmp.lt.s32.totalorder %s21, 1
        %s454 = scalar_select %p453, %s21, 1
        %s455 = smul.addr %s454, 2
        %s456 = scalar_lea.vmem %s2, %s455
      $region76: #{gated_equivariant_forward.1} parent=63 // pred_fallthru
        _
    $region64: #{gated_equivariant_forward.1} parent=5 // pred_fallthru
      _
    %p457 = scmp.le.s32.totalorder 1, %s21
    %p458 = scmp.lt.s32.totalorder %s21, 3
    %p459 = pnand %p457, %p458
    %p460 = pneg %p459
    // Predicated region
    $region77: #{gated_equivariant_forward.1} parent=5 // pred_check
      _
    $region78: #{gated_equivariant_forward.1} parent=5 // pred_check_branch
      %462 = sbr.rel (%p459) target = $region80
    $region79: #{gated_equivariant_forward.1} parent=5 // pred_region
      %s463 = ssub.s32 %s21, 1
      %s464 = smul.u32 16, %s26
      %p465 = scmp.lt.s32.totalorder %s464, 31
      %s466 = scalar_select %p465, %s464, 31
      %s467 = smul.addr %s466, 8
      %s468 = scalar_lea.vmem %s0, %s467
      %p469 = pneg %p47
      %p470 = pneg %p44
      %s471 = smul.u32 16, %s26
      %p472 = scmp.lt.s32.totalorder %s471, 31
      %s473 = scalar_select %p472, %s471, 31
      %s474 = smul.addr %s473, 8
      %s475 = scalar_lea.vmem %s1, %s474
      %p476 = pneg %p73
      %p477 = pneg %p70
      %p478 = scmp.lt.s32.totalorder %s26, 1
      %s479 = scalar_select %p478, %s26, 1
      %s480 = smul.addr %s479, 2
      %s481 = scalar_lea.vmem %s2, %s480
      %p482 = pneg %p99
      %p483 = pneg %p96
      %p484 = pneg %p120
      %p485 = pneg %p117
      %p486 = pneg %p141
      %p487 = pneg %p138
      %p488 = pneg %p162
      %p489 = pneg %p159
      %p490 = pneg %p183
      %p491 = pneg %p180
      %p492 = pneg %p204
      %p493 = pneg %p201
      %p494 = pneg %p225
      %p495 = pneg %p222
      %p496 = pneg %p246
      %p497 = pneg %p243
      %p498 = pneg %p267
      %p499 = pneg %p264
      %p500 = pneg %p288
      %p501 = pneg %p285
      %p502 = pneg %p309
      %p503 = pneg %p306
      %p504 = pneg %p330
      %p505 = pneg %p327
      %p506 = pneg %p351
      %p507 = pneg %p348
      %p508 = pneg %p377
      %p509 = pneg %p374
      %p510 = scmp.lt.s32.totalorder %s26, 1
      %s511 = scalar_select %p510, %s26, 1
      %s512 = smul.addr %s511, 2
      %s513 = scalar_lea.vmem %s15, %s512
      %s514 = smul.u32 16, %s26
      %p515 = scmp.lt.s32.totalorder %s514, 31
      %s516 = scalar_select %p515, %s514, 31
      %s517 = smul.addr %s516, 8
      %s518 = scalar_lea.vmem %s0, %s517
      %s519 = smul.u32 16, %s26
      %s520 = smul.u32 16, %s26
      %p521 = scmp.lt.s32.totalorder %s520, 31
      %s522 = scalar_select %p521, %s520, 31
      %s523 = smul.addr %s522, 8
      %s524 = scalar_lea.vmem %s1, %s523
      %s525 = smul.u32 16, %s26
      %p526 = scmp.lt.s32.totalorder %s26, 1
      %s527 = scalar_select %p526, %s26, 1
      %s528 = smul.addr %s527, 2
      %s529 = scalar_lea.vmem %s2, %s528
      %p530 = scmp.lt.s32.totalorder %s26, 1
      %s531 = scalar_select %p530, %s26, 1
      %s532 = smul.addr %s531, 2
      %s533 = scalar_lea.vmem %s15, %s532
      %v534 = vld [vmem:[%s518] sm:$0xff]
      %v535 = vld [vmem:[%s518 + $0x8] sm:$0xff]
      %v536 = vld [vmem:[%s518 + $0x10] sm:$0xff]
      %v537 = vld [vmem:[%s518 + $0x18] sm:$0xff]
      %v538 = vld [vmem:[%s518 + $0x20] sm:$0xff]
      %v539 = vld [vmem:[%s518 + $0x28] sm:$0xff]
      %v540 = vld [vmem:[%s518 + $0x30] sm:$0xff]
      %v541 = vld [vmem:[%s518 + $0x38] sm:$0xff]
      %v542 = vld [vmem:[%s518 + $0x40] sm:$0xff]
      %v543 = vld [vmem:[%s518 + $0x48] sm:$0xff]
      %v544 = vld [vmem:[%s518 + $0x50] sm:$0xff]
      %v545 = vld [vmem:[%s518 + $0x58] sm:$0xff]
      %v546 = vld [vmem:[%s518 + $0x60] sm:$0xff]
      %v547 = vld [vmem:[%s518 + $0x68] sm:$0xff]
      %v548 = vld [vmem:[%s518 + $0x70] sm:$0xff]
      %v549 = vld [vmem:[%s518 + $0x78] sm:$0xff]
      %v550 = vld [vmem:[%s524] sm:$0xff]
      %v551 = vld [vmem:[%s524 + $0x8] sm:$0xff]
      %v552 = vld [vmem:[%s524 + $0x10] sm:$0xff]
      %v553 = vld [vmem:[%s524 + $0x18] sm:$0xff]
      %v554 = vld [vmem:[%s524 + $0x20] sm:$0xff]
      %v555 = vld [vmem:[%s524 + $0x28] sm:$0xff]
      %v556 = vld [vmem:[%s524 + $0x30] sm:$0xff]
      %v557 = vld [vmem:[%s524 + $0x38] sm:$0xff]
      %v558 = vld [vmem:[%s524 + $0x40] sm:$0xff]
      %v559 = vld [vmem:[%s524 + $0x48] sm:$0xff]
      %v560 = vld [vmem:[%s524 + $0x50] sm:$0xff]
      %v561 = vld [vmem:[%s524 + $0x58] sm:$0xff]
      %v562 = vld [vmem:[%s524 + $0x60] sm:$0xff]
      %v563 = vld [vmem:[%s524 + $0x68] sm:$0xff]
      %v564 = vld [vmem:[%s524 + $0x70] sm:$0xff]
      %v565 = vld [vmem:[%s524 + $0x78] sm:$0xff]
      %v566 = vld [vmem:[%s3] sm:$0xff]
      %v567 = vld [vmem:[%s3 + $0x8] sm:$0xff]
      %v568 = vld [vmem:[%s3 + $0x10] sm:$0xff]
      %v569 = vld [vmem:[%s3 + $0x18] sm:$0xff]
      %v570 = vld [vmem:[%s3 + $0x20] sm:$0xff]
      %v571 = vld [vmem:[%s3 + $0x28] sm:$0xff]
      %v572 = vld [vmem:[%s3 + $0x30] sm:$0xff]
      %v573 = vld [vmem:[%s3 + $0x38] sm:$0xff]
      %v574 = vld [vmem:[%s3 + $0x40] sm:$0xff]
      %v575 = vld [vmem:[%s3 + $0x48] sm:$0xff]
      %v576 = vld [vmem:[%s3 + $0x50] sm:$0xff]
      %v577 = vld [vmem:[%s3 + $0x58] sm:$0xff]
      %v578 = vld [vmem:[%s3 + $0x60] sm:$0xff]
      %v579 = vld [vmem:[%s3 + $0x68] sm:$0xff]
      %v580 = vld [vmem:[%s3 + $0x70] sm:$0xff]
      %vm581 = vcmask 982016
      %v583 = vsel %vm581, %v550, 0
      %v586 = vsel %vm581, %v551, 0
      %v589 = vsel %vm581, %v552, 0
      %v592 = vsel %vm581, %v553, 0
      %v595 = vsel %vm581, %v554, 0
      %v598 = vsel %vm581, %v555, 0
      %v601 = vsel %vm581, %v556, 0
      %v604 = vsel %vm581, %v557, 0
      %v607 = vsel %vm581, %v558, 0
      %v610 = vsel %vm581, %v559, 0
      %v613 = vsel %vm581, %v560, 0
      %v616 = vsel %vm581, %v561, 0
      %v619 = vsel %vm581, %v562, 0
      %v622 = vsel %vm581, %v563, 0
      %v625 = vsel %vm581, %v564, 0
      %v628 = vsel %vm581, %v565, 0
      %630 = vmatprep.subr.mxu0 0.0
      %631 = vmatpush1.msra.mxu0 %v566
      %632 = vmatprep.subr.mxu0 0.0
      %633 = vmatpush1.msra.mxu0 %v567
      %634 = vmatprep.subr.mxu0 0.0
      %635 = vmatpush1.msra.mxu0 %v568
      %636 = vmatprep.subr.mxu0 0.0
      %637 = vmatpush1.msra.mxu0 %v569
      %638 = vmatprep.subr.mxu0 0.0
      %639 = vmatpush1.msra.mxu0 %v570
      %640 = vmatprep.subr.mxu0 0.0
      %641 = vmatpush1.msra.mxu0 %v571
      %642 = vmatprep.subr.mxu0 0.0
      %643 = vmatpush1.msra.mxu0 %v572
      %644 = vmatprep.subr.mxu0 0.0
      %645 = vmatpush1.msra.mxu0 %v573
      %646 = vmatprep.subr.mxu0 0.0
      %647 = vmatpush1.msra.mxu0 %v574
      %648 = vmatprep.subr.mxu0 0.0
      %649 = vmatpush1.msra.mxu0 %v575
      %650 = vmatprep.subr.mxu0 0.0
      %651 = vmatpush1.msra.mxu0 %v576
      %652 = vmatprep.subr.mxu0 0.0
      %653 = vmatpush1.msra.mxu0 %v577
      %654 = vmatprep.subr.mxu0 0.0
      %655 = vmatpush1.msra.mxu0 %v578
      %656 = vmatprep.subr.mxu0 0.0
      %657 = vmatpush1.msra.mxu0 %v579
      %658 = vmatprep.subr.mxu0 0.0
      %659 = vmatpush1.msra.mxu0 %v580
      %660 = vmatprep.subr.mxu0 0.0
      %661 = vmatpush1.msra.mxu0 0.0
      %662 = vmatprep.subr.mxu0 0.0
      %663 = vmatpush1.msra.mxu0 0.0
      %664 = vmatprep.subr.mxu0 0.0
      %665 = vmatpush1.msra.mxu0 0.0
      %666 = vmatprep.subr.mxu0 0.0
      %667 = vmatpush1.msra.mxu0 0.0
      %668 = vmatprep.subr.mxu0 0.0
      %669 = vmatpush1.msra.mxu0 0.0
      %670 = vmatprep.subr.mxu0 0.0
      %671 = vmatpush1.msra.mxu0 0.0
      %672 = vmatprep.subr.mxu0 0.0
      %673 = vmatpush1.msra.mxu0 0.0
      %674 = vmatprep.subr.mxu0 0.0
      %675 = vmatpush1.msra.mxu0 0.0
      %676 = vmatprep.subr.mxu0 0.0
      %677 = vmatpush1.msra.mxu0 0.0
      %678 = vmatprep.subr.mxu0 0.0
      %679 = vmatpush1.msra.mxu0 0.0
      %680 = vmatprep.subr.mxu0 0.0
      %681 = vmatpush1.msra.mxu0 0.0
      %682 = vmatprep.subr.mxu0 0.0
      %683 = vmatpush1.msra.mxu0 0.0
      %684 = vmatprep.subr.mxu0 0.0
      %685 = vmatpush1.msra.mxu0 0.0
      %686 = vmatprep.subr.mxu0 0.0
      %687 = vmatpush1.msra.mxu0 0.0
      %688 = vmatprep.subr.mxu0 0.0
      %689 = vmatpush1.msra.mxu0 0.0
      %690 = vmatprep.subr.mxu0 0.0
      %691 = vmatpush1.msra.mxu0 0.0
      %692 = vmatprep.subr.mxu0 0.0
      %693 = vmatpush1.msra.mxu0 0.0
      %694 = vmatprep.mubr.f32.mxu0 0.0
      %695 = vmatmul.mubr.f32.gmra.mrb[0].mxu0 %v583
      %v696 = vpop.f32.mrb[0].mxu0
      %v697 = vadd.f32 0.0, %v696
      %v698 = vpop.f32.mrb[0].mxu0
      %699 = vmatprep.mubr.f32.mxu0 0.0
      %700 = vmatmul.mubr.f32.gmra.mrb[0].mxu0 %v586
      %v701 = vpop.f32.mrb[0].mxu0
      %v702 = vadd.f32 0.0, %v701
      %v703 = vpop.f32.mrb[0].mxu0
      %704 = vmatprep.mubr.f32.mxu0 0.0
      %705 = vmatmul.mubr.f32.gmra.mrb[0].mxu0 %v589
      %v706 = vpop.f32.mrb[0].mxu0
      %v707 = vadd.f32 0.0, %v706
      %v708 = vpop.f32.mrb[0].mxu0
      %709 = vmatprep.mubr.f32.mxu0 0.0
      %710 = vmatmul.mubr.f32.gmra.mrb[0].mxu0 %v592
      %v711 = vpop.f32.mrb[0].mxu0
      %v712 = vadd.f32 0.0, %v711
      %v713 = vpop.f32.mrb[0].mxu0
      %714 = vmatprep.mubr.f32.mxu0 0.0
      %715 = vmatmul.mubr.f32.gmra.mrb[0].mxu0 %v595
      %v716 = vpop.f32.mrb[0].mxu0
      %v717 = vadd.f32 0.0, %v716
      %v718 = vpop.f32.mrb[0].mxu0
      %719 = vmatprep.mubr.f32.mxu0 0.0
      %720 = vmatmul.mubr.f32.gmra.mrb[0].mxu0 %v598
      %v721 = vpop.f32.mrb[0].mxu0
      %v722 = vadd.f32 0.0, %v721
      %v723 = vpop.f32.mrb[0].mxu0
      %724 = vmatprep.mubr.f32.mxu0 0.0
      %725 = vmatmul.mubr.f32.gmra.mrb[0].mxu0 %v601
      %v726 = vpop.f32.mrb[0].mxu0
      %v727 = vadd.f32 0.0, %v726
      %v728 = vpop.f32.mrb[0].mxu0
      %729 = vmatprep.mubr.f32.mxu0 0.0
      %730 = vmatmul.mubr.f32.gmra.mrb[0].mxu0 %v604
      %v731 = vpop.f32.mrb[0].mxu0
      %v732 = vadd.f32 0.0, %v731
      %v733 = vpop.f32.mrb[0].mxu0
      %734 = vmatprep.mubr.f32.mxu0 0.0
      %735 = vmatmul.mubr.f32.gmra.mrb[0].mxu0 %v607
      %v736 = vpop.f32.mrb[0].mxu0
      %v737 = vadd.f32 0.0, %v736
      %v738 = vpop.f32.mrb[0].mxu0
      %739 = vmatprep.mubr.f32.mxu0 0.0
      %740 = vmatmul.mubr.f32.gmra.mrb[0].mxu0 %v610
      %v741 = vpop.f32.mrb[0].mxu0
      %v742 = vadd.f32 0.0, %v741
      %v743 = vpop.f32.mrb[0].mxu0
      %744 = vmatprep.mubr.f32.mxu0 0.0
      %745 = vmatmul.mubr.f32.gmra.mrb[0].mxu0 %v613
      %v746 = vpop.f32.mrb[0].mxu0
      %v747 = vadd.f32 0.0, %v746
      %v748 = vpop.f32.mrb[0].mxu0
      %749 = vmatprep.mubr.f32.mxu0 0.0
      %750 = vmatmul.mubr.f32.gmra.mrb[0].mxu0 %v616
      %v751 = vpop.f32.mrb[0].mxu0
      %v752 = vadd.f32 0.0, %v751
      %v753 = vpop.f32.mrb[0].mxu0
      %754 = vmatprep.mubr.f32.mxu0 0.0
      %755 = vmatmul.mubr.f32.gmra.mrb[0].mxu0 %v619
      %v756 = vpop.f32.mrb[0].mxu0
      %v757 = vadd.f32 0.0, %v756
      %v758 = vpop.f32.mrb[0].mxu0
      %759 = vmatprep.mubr.f32.mxu0 0.0
      %760 = vmatmul.mubr.f32.gmra.mrb[0].mxu0 %v622
      %v761 = vpop.f32.mrb[0].mxu0
      %v762 = vadd.f32 0.0, %v761
      %v763 = vpop.f32.mrb[0].mxu0
      %764 = vmatprep.mubr.f32.mxu0 0.0
      %765 = vmatmul.mubr.f32.gmra.mrb[0].mxu0 %v625
      %v766 = vpop.f32.mrb[0].mxu0
      %v767 = vadd.f32 0.0, %v766
      %v768 = vpop.f32.mrb[0].mxu0
      %769 = vmatprep.mubr.f32.mxu0 0.0
      %770 = vmatmul.mubr.f32.gmra.mrb[0].mxu0 %v628
      %v771 = vpop.f32.mrb[0].mxu0
      %v772 = vadd.f32 0.0, %v771
      %v773 = vpop.f32.mrb[0].mxu0
      %774 = vdwg.mxu0
      %v775 = vmul.f32 %v697, %v697
      %v776 = vmul.f32 %v702, %v702
      %v777 = vmul.f32 %v707, %v707
      %v778 = vmul.f32 %v712, %v712
      %v779 = vmul.f32 %v717, %v717
      %v780 = vmul.f32 %v722, %v722
      %v781 = vmul.f32 %v727, %v727
      %v782 = vmul.f32 %v732, %v732
      %v783 = vmul.f32 %v737, %v737
      %v784 = vmul.f32 %v742, %v742
      %v785 = vmul.f32 %v747, %v747
      %v786 = vmul.f32 %v752, %v752
      %v787 = vmul.f32 %v757, %v757
      %v788 = vmul.f32 %v762, %v762
      %v789 = vmul.f32 %v767, %v767
      %v790 = vmul.f32 %v772, %v772
      %v791 = vld [vmem:[%s4] sm:$0xff]
      %v792 = vld [vmem:[%s4 + $0x8] sm:$0xff]
      %v793 = vld [vmem:[%s4 + $0x10] sm:$0xff]
      %v794 = vld [vmem:[%s4 + $0x18] sm:$0xff]
      %v795 = vld [vmem:[%s4 + $0x20] sm:$0xff]
      %v796 = vld [vmem:[%s4 + $0x28] sm:$0xff]
      %v797 = vld [vmem:[%s4 + $0x30] sm:$0xff]
      %v798 = vld [vmem:[%s4 + $0x38] sm:$0xff]
      %v799 = vld [vmem:[%s4 + $0x40] sm:$0xff]
      %v800 = vld [vmem:[%s4 + $0x48] sm:$0xff]
      %v801 = vld [vmem:[%s4 + $0x50] sm:$0xff]
      %v802 = vld [vmem:[%s4 + $0x58] sm:$0xff]
      %v803 = vld [vmem:[%s4 + $0x60] sm:$0xff]
      %v804 = vld [vmem:[%s4 + $0x68] sm:$0xff]
      %v805 = vld [vmem:[%s4 + $0x70] sm:$0xff]
      %v807 = vsel %vm581, %v775, 0
      %v810 = vsel %vm581, %v776, 0
      %v813 = vsel %vm581, %v777, 0
      %v816 = vsel %vm581, %v778, 0
      %v819 = vsel %vm581, %v779, 0
      %v822 = vsel %vm581, %v780, 0
      %v825 = vsel %vm581, %v781, 0
      %v828 = vsel %vm581, %v782, 0
      %v831 = vsel %vm581, %v783, 0
      %v834 = vsel %vm581, %v784, 0
      %v837 = vsel %vm581, %v785, 0
      %v840 = vsel %vm581, %v786, 0
      %v843 = vsel %vm581, %v787, 0
      %v846 = vsel %vm581, %v788, 0
      %v849 = vsel %vm581, %v789, 0
      %v852 = vsel %vm581, %v790, 0
      %854 = vmatprep.subr.mxu0 0.0
      %855 = vmatpush1.msra.mxu0 %v791
      %856 = vmatprep.subr.mxu0 0.0
      %857 = vmatpush1.msra.mxu0 %v792
      %858 = vmatprep.subr.mxu0 0.0
      %859 = vmatpush1.msra.mxu0 %v793
      %860 = vmatprep.subr.mxu0 0.0
      %861 = vmatpush1.msra.mxu0 %v794
      %862 = vmatprep.subr.mxu0 0.0
      %863 = vmatpush1.msra.mxu0 %v795
      %864 = vmatprep.subr.mxu0 0.0
      %865 = vmatpush1.msra.mxu0 %v796
      %866 = vmatprep.subr.mxu0 0.0
      %867 = vmatpush1.msra.mxu0 %v797
      %868 = vmatprep.subr.mxu0 0.0
      %869 = vmatpush1.msra.mxu0 %v798
      %870 = vmatprep.subr.mxu0 0.0
      %871 = vmatpush1.msra.mxu0 %v799
      %872 = vmatprep.subr.mxu0 0.0
      %873 = vmatpush1.msra.mxu0 %v800
      %874 = vmatprep.subr.mxu0 0.0
      %875 = vmatpush1.msra.mxu0 %v801
      %876 = vmatprep.subr.mxu0 0.0
      %877 = vmatpush1.msra.mxu0 %v802
      %878 = vmatprep.subr.mxu0 0.0
      %879 = vmatpush1.msra.mxu0 %v803
      %880 = vmatprep.subr.mxu0 0.0
      %881 = vmatpush1.msra.mxu0 %v804
      %882 = vmatprep.subr.mxu0 0.0
      %883 = vmatpush1.msra.mxu0 %v805
      %884 = vmatprep.subr.mxu0 0.0
      %885 = vmatpush1.msra.mxu0 0.0
      %886 = vmatprep.subr.mxu0 0.0
      %887 = vmatpush1.msra.mxu0 0.0
      %888 = vmatprep.subr.mxu0 0.0
      %889 = vmatpush1.msra.mxu0 0.0
      %890 = vmatprep.subr.mxu0 0.0
      %891 = vmatpush1.msra.mxu0 0.0
      %892 = vmatprep.subr.mxu0 0.0
      %893 = vmatpush1.msra.mxu0 0.0
      %894 = vmatprep.subr.mxu0 0.0
      %895 = vmatpush1.msra.mxu0 0.0
      %896 = vmatprep.subr.mxu0 0.0
      %897 = vmatpush1.msra.mxu0 0.0
      %898 = vmatprep.subr.mxu0 0.0
      %899 = vmatpush1.msra.mxu0 0.0
      %900 = vmatprep.subr.mxu0 0.0
      %901 = vmatpush1.msra.mxu0 0.0
      %902 = vmatprep.subr.mxu0 0.0
      %903 = vmatpush1.msra.mxu0 0.0
      %904 = vmatprep.subr.mxu0 0.0
      %905 = vmatpush1.msra.mxu0 0.0
      %906 = vmatprep.subr.mxu0 0.0
      %907 = vmatpush1.msra.mxu0 0.0
      %908 = vmatprep.subr.mxu0 0.0
      %909 = vmatpush1.msra.mxu0 0.0
      %910 = vmatprep.subr.mxu0 0.0
      %911 = vmatpush1.msra.mxu0 0.0
      %912 = vmatprep.subr.mxu0 0.0
      %913 = vmatpush1.msra.mxu0 0.0
      %914 = vmatprep.subr.mxu0 0.0
      %915 = vmatpush1.msra.mxu0 0.0
      %916 = vmatprep.subr.mxu0 0.0
      %917 = vmatpush1.msra.mxu0 0.0
      %918 = vmatprep.mubr.f32.mxu0 0.0
      %919 = vmatmul.mubr.f32.gmra.mrb[0].mxu0 %v807
      %v920 = vpop.f32.mrb[0].mxu0
      %v921 = vadd.f32 1e-08, %v920
      %v922 = vpop.f32.mrb[0].mxu0
      %923 = vmatprep.mubr.f32.mxu0 0.0
      %924 = vmatmul.mubr.f32.gmra.mrb[0].mxu0 %v810
      %v925 = vpop.f32.mrb[0].mxu0
      %v926 = vadd.f32 1e-08, %v925
      %v927 = vpop.f32.mrb[0].mxu0
      %928 = vmatprep.mubr.f32.mxu0 0.0
      %929 = vmatmul.mubr.f32.gmra.mrb[0].mxu0 %v813
      %v930 = vpop.f32.mrb[0].mxu0
      %v931 = vadd.f32 1e-08, %v930
      %v932 = vpop.f32.mrb[0].mxu0
      %933 = vmatprep.mubr.f32.mxu0 0.0
      %934 = vmatmul.mubr.f32.gmra.mrb[0].mxu0 %v816
      %v935 = vpop.f32.mrb[0].mxu0
      %v936 = vadd.f32 1e-08, %v935
      %v937 = vpop.f32.mrb[0].mxu0
      %938 = vmatprep.mubr.f32.mxu0 0.0
      %939 = vmatmul.mubr.f32.gmra.mrb[0].mxu0 %v819
      %v940 = vpop.f32.mrb[0].mxu0
      %v941 = vadd.f32 1e-08, %v940
      %v942 = vpop.f32.mrb[0].mxu0
      %943 = vmatprep.mubr.f32.mxu0 0.0
      %944 = vmatmul.mubr.f32.gmra.mrb[0].mxu0 %v822
      %v945 = vpop.f32.mrb[0].mxu0
      %v946 = vadd.f32 1e-08, %v945
      %v947 = vpop.f32.mrb[0].mxu0
      %948 = vmatprep.mubr.f32.mxu0 0.0
      %949 = vmatmul.mubr.f32.gmra.mrb[0].mxu0 %v825
      %v950 = vpop.f32.mrb[0].mxu0
      %v951 = vadd.f32 1e-08, %v950
      %v952 = vpop.f32.mrb[0].mxu0
      %953 = vmatprep.mubr.f32.mxu0 0.0
      %954 = vmatmul.mubr.f32.gmra.mrb[0].mxu0 %v828
      %v955 = vpop.f32.mrb[0].mxu0
      %v956 = vadd.f32 1e-08, %v955
      %v957 = vpop.f32.mrb[0].mxu0
      %958 = vmatprep.mubr.f32.mxu0 0.0
      %959 = vmatmul.mubr.f32.gmra.mrb[0].mxu0 %v831
      %v960 = vpop.f32.mrb[0].mxu0
      %v961 = vadd.f32 1e-08, %v960
      %v962 = vpop.f32.mrb[0].mxu0
      %963 = vmatprep.mubr.f32.mxu0 0.0
      %964 = vmatmul.mubr.f32.gmra.mrb[0].mxu0 %v834
      %v965 = vpop.f32.mrb[0].mxu0
      %v966 = vadd.f32 1e-08, %v965
      %v967 = vpop.f32.mrb[0].mxu0
      %968 = vmatprep.mubr.f32.mxu0 0.0
      %969 = vmatmul.mubr.f32.gmra.mrb[0].mxu0 %v837
      %v970 = vpop.f32.mrb[0].mxu0
      %v971 = vadd.f32 1e-08, %v970
      %v972 = vpop.f32.mrb[0].mxu0
      %973 = vmatprep.mubr.f32.mxu0 0.0
      %974 = vmatmul.mubr.f32.gmra.mrb[0].mxu0 %v840
      %v975 = vpop.f32.mrb[0].mxu0
      %v976 = vadd.f32 1e-08, %v975
      %v977 = vpop.f32.mrb[0].mxu0
      %978 = vmatprep.mubr.f32.mxu0 0.0
      %979 = vmatmul.mubr.f32.gmra.mrb[0].mxu0 %v843
      %v980 = vpop.f32.mrb[0].mxu0
      %v981 = vadd.f32 1e-08, %v980
      %v982 = vpop.f32.mrb[0].mxu0
      %983 = vmatprep.mubr.f32.mxu0 0.0
      %984 = vmatmul.mubr.f32.gmra.mrb[0].mxu0 %v846
      %v985 = vpop.f32.mrb[0].mxu0
      %v986 = vadd.f32 1e-08, %v985
      %v987 = vpop.f32.mrb[0].mxu0
      %988 = vmatprep.mubr.f32.mxu0 0.0
      %989 = vmatmul.mubr.f32.gmra.mrb[0].mxu0 %v849
      %v990 = vpop.f32.mrb[0].mxu0
      %v991 = vadd.f32 1e-08, %v990
      %v992 = vpop.f32.mrb[0].mxu0
      %993 = vmatprep.mubr.f32.mxu0 0.0
      %994 = vmatmul.mubr.f32.gmra.mrb[0].mxu0 %v852
      %v995 = vpop.f32.mrb[0].mxu0
      %v996 = vadd.f32 1e-08, %v995
      %v997 = vpop.f32.mrb[0].mxu0
      %998 = vdwg.mxu0
      %v999 = vrsqrt.pop %v921
      %v1000 = vmul.f32 %v921, %v999
      %vm1001 = vcmp.eq.f32.partialorder %v921, inf
      %v1002 = vsel %vm1001, %v921, %v1000
      %vm1003 = vcmp.eq.f32.partialorder %v921, 0.0
      %v1004 = vand.u32 %v921, 2147483648
      %v1005 = vsel %vm1003, %v1004, %v1002
      %v1006 = vrsqrt.pop %v926
      %v1007 = vmul.f32 %v926, %v1006
      %vm1008 = vcmp.eq.f32.partialorder %v926, inf
      %v1009 = vsel %vm1008, %v926, %v1007
      %vm1010 = vcmp.eq.f32.partialorder %v926, 0.0
      %v1011 = vand.u32 %v926, 2147483648
      %v1012 = vsel %vm1010, %v1011, %v1009
      %v1013 = vrsqrt.pop %v931
      %v1014 = vmul.f32 %v931, %v1013
      %vm1015 = vcmp.eq.f32.partialorder %v931, inf
      %v1016 = vsel %vm1015, %v931, %v1014
      %vm1017 = vcmp.eq.f32.partialorder %v931, 0.0
      %v1018 = vand.u32 %v931, 2147483648
      %v1019 = vsel %vm1017, %v1018, %v1016
      %v1020 = vrsqrt.pop %v936
      %v1021 = vmul.f32 %v936, %v1020
      %vm1022 = vcmp.eq.f32.partialorder %v936, inf
      %v1023 = vsel %vm1022, %v936, %v1021
      %vm1024 = vcmp.eq.f32.partialorder %v936, 0.0
      %v1025 = vand.u32 %v936, 2147483648
      %v1026 = vsel %vm1024, %v1025, %v1023
      %v1027 = vrsqrt.pop %v941
      %v1028 = vmul.f32 %v941, %v1027
      %vm1029 = vcmp.eq.f32.partialorder %v941, inf
      %v1030 = vsel %vm1029, %v941, %v1028
      %vm1031 = vcmp.eq.f32.partialorder %v941, 0.0
      %v1032 = vand.u32 %v941, 2147483648
      %v1033 = vsel %vm1031, %v1032, %v1030
      %v1034 = vrsqrt.pop %v946
      %v1035 = vmul.f32 %v946, %v1034
      %vm1036 = vcmp.eq.f32.partialorder %v946, inf
      %v1037 = vsel %vm1036, %v946, %v1035
      %vm1038 = vcmp.eq.f32.partialorder %v946, 0.0
      %v1039 = vand.u32 %v946, 2147483648
      %v1040 = vsel %vm1038, %v1039, %v1037
      %v1041 = vrsqrt.pop %v951
      %v1042 = vmul.f32 %v951, %v1041
      %vm1043 = vcmp.eq.f32.partialorder %v951, inf
      %v1044 = vsel %vm1043, %v951, %v1042
      %vm1045 = vcmp.eq.f32.partialorder %v951, 0.0
      %v1046 = vand.u32 %v951, 2147483648
      %v1047 = vsel %vm1045, %v1046, %v1044
      %v1048 = vrsqrt.pop %v956
      %v1049 = vmul.f32 %v956, %v1048
      %vm1050 = vcmp.eq.f32.partialorder %v956, inf
      %v1051 = vsel %vm1050, %v956, %v1049
      %vm1052 = vcmp.eq.f32.partialorder %v956, 0.0
      %v1053 = vand.u32 %v956, 2147483648
      %v1054 = vsel %vm1052, %v1053, %v1051
      %v1055 = vrsqrt.pop %v961
      %v1056 = vmul.f32 %v961, %v1055
      %vm1057 = vcmp.eq.f32.partialorder %v961, inf
      %v1058 = vsel %vm1057, %v961, %v1056
      %vm1059 = vcmp.eq.f32.partialorder %v961, 0.0
      %v1060 = vand.u32 %v961, 2147483648
      %v1061 = vsel %vm1059, %v1060, %v1058
      %v1062 = vrsqrt.pop %v966
      %v1063 = vmul.f32 %v966, %v1062
      %vm1064 = vcmp.eq.f32.partialorder %v966, inf
      %v1065 = vsel %vm1064, %v966, %v1063
      %vm1066 = vcmp.eq.f32.partialorder %v966, 0.0
      %v1067 = vand.u32 %v966, 2147483648
      %v1068 = vsel %vm1066, %v1067, %v1065
      %v1069 = vrsqrt.pop %v971
      %v1070 = vmul.f32 %v971, %v1069
      %vm1071 = vcmp.eq.f32.partialorder %v971, inf
      %v1072 = vsel %vm1071, %v971, %v1070
      %vm1073 = vcmp.eq.f32.partialorder %v971, 0.0
      %v1074 = vand.u32 %v971, 2147483648
      %v1075 = vsel %vm1073, %v1074, %v1072
      %v1076 = vrsqrt.pop %v976
      %v1077 = vmul.f32 %v976, %v1076
      %vm1078 = vcmp.eq.f32.partialorder %v976, inf
      %v1079 = vsel %vm1078, %v976, %v1077
      %vm1080 = vcmp.eq.f32.partialorder %v976, 0.0
      %v1081 = vand.u32 %v976, 2147483648
      %v1082 = vsel %vm1080, %v1081, %v1079
      %v1083 = vrsqrt.pop %v981
      %v1084 = vmul.f32 %v981, %v1083
      %vm1085 = vcmp.eq.f32.partialorder %v981, inf
      %v1086 = vsel %vm1085, %v981, %v1084
      %vm1087 = vcmp.eq.f32.partialorder %v981, 0.0
      %v1088 = vand.u32 %v981, 2147483648
      %v1089 = vsel %vm1087, %v1088, %v1086
      %v1090 = vrsqrt.pop %v986
      %v1091 = vmul.f32 %v986, %v1090
      %vm1092 = vcmp.eq.f32.partialorder %v986, inf
      %v1093 = vsel %vm1092, %v986, %v1091
      %vm1094 = vcmp.eq.f32.partialorder %v986, 0.0
      %v1095 = vand.u32 %v986, 2147483648
      %v1096 = vsel %vm1094, %v1095, %v1093
      %v1097 = vrsqrt.pop %v991
      %v1098 = vmul.f32 %v991, %v1097
      %vm1099 = vcmp.eq.f32.partialorder %v991, inf
      %v1100 = vsel %vm1099, %v991, %v1098
      %vm1101 = vcmp.eq.f32.partialorder %v991, 0.0
      %v1102 = vand.u32 %v991, 2147483648
      %v1103 = vsel %vm1101, %v1102, %v1100
      %v1104 = vrsqrt.pop %v996
      %v1105 = vmul.f32 %v996, %v1104
      %vm1106 = vcmp.eq.f32.partialorder %v996, inf
      %v1107 = vsel %vm1106, %v996, %v1105
      %vm1108 = vcmp.eq.f32.partialorder %v996, 0.0
      %v1109 = vand.u32 %v996, 2147483648
      %v1110 = vsel %vm1108, %v1109, %v1107
      %v1111 = vld [vmem:[%s5] sm:$0xff]
      %v1112 = vld [vmem:[%s5 + $0x8] sm:$0xff]
      %v1113 = vld [vmem:[%s5 + $0x10] sm:$0xff]
      %v1114 = vld [vmem:[%s5 + $0x18] sm:$0xff]
      %v1115 = vld [vmem:[%s6] sm:$0xff]
      %v1116 = vld [vmem:[%s6 + $0x8] sm:$0xff]
      %v1117 = vld [vmem:[%s6 + $0x10] sm:$0xff]
      %vm1118 = vcmask 195584
      %v1120 = vsel %vm1118, %v1005, 0
      %v1123 = vsel %vm1118, %v1012, 0
      %v1126 = vsel %vm1118, %v1019, 0
      %v1129 = vsel %vm1118, %v1026, 0
      %v1132 = vsel %vm1118, %v1033, 0
      %v1135 = vsel %vm1118, %v1040, 0
      %v1138 = vsel %vm1118, %v1047, 0
      %v1141 = vsel %vm1118, %v1054, 0
      %v1144 = vsel %vm1118, %v1061, 0
      %v1147 = vsel %vm1118, %v1068, 0
      %v1150 = vsel %vm1118, %v1075, 0
      %v1153 = vsel %vm1118, %v1082, 0
      %v1156 = vsel %vm1118, %v1089, 0
      %v1159 = vsel %vm1118, %v1096, 0
      %v1162 = vsel %vm1118, %v1103, 0
      %v1165 = vsel %vm1118, %v1110, 0
      %1167 = vmatprep.subr.mxu0 0.0
      %1168 = vmatpush1.msra.mxu0 %v1115
      %1169 = vmatprep.subr.mxu0 0.0
      %1170 = vmatpush1.msra.mxu0 %v1116
      %1171 = vmatprep.subr.mxu0 0.0
      %1172 = vmatpush1.msra.mxu0 %v1117
      %1173 = vmatprep.subr.mxu0 0.0
      %1174 = vmatpush1.msra.mxu0 0.0
      %1175 = vmatprep.subr.mxu0 0.0
      %1176 = vmatpush1.msra.mxu0 0.0
      %1177 = vmatprep.subr.mxu0 0.0
      %1178 = vmatpush1.msra.mxu0 0.0
      %1179 = vmatprep.subr.mxu0 0.0
      %1180 = vmatpush1.msra.mxu0 0.0
      %1181 = vmatprep.subr.mxu0 0.0
      %1182 = vmatpush1.msra.mxu0 0.0
      %1183 = vmatprep.subr.mxu0 0.0
      %1184 = vmatpush1.msra.mxu0 0.0
      %1185 = vmatprep.subr.mxu0 0.0
      %1186 = vmatpush1.msra.mxu0 0.0
      %1187 = vmatprep.subr.mxu0 0.0
      %1188 = vmatpush1.msra.mxu0 0.0
      %1189 = vmatprep.subr.mxu0 0.0
      %1190 = vmatpush1.msra.mxu0 0.0
      %1191 = vmatprep.subr.mxu0 0.0
      %1192 = vmatpush1.msra.mxu0 0.0
      %1193 = vmatprep.subr.mxu0 0.0
      %1194 = vmatpush1.msra.mxu0 0.0
      %1195 = vmatprep.subr.mxu0 0.0
      %1196 = vmatpush1.msra.mxu0 0.0
      %1197 = vmatprep.subr.mxu0 0.0
      %1198 = vmatpush1.msra.mxu0 0.0
      %1199 = vmatprep.subr.mxu0 0.0
      %1200 = vmatpush1.msra.mxu0 0.0
      %1201 = vmatprep.subr.mxu0 0.0
      %1202 = vmatpush1.msra.mxu0 0.0
      %1203 = vmatprep.subr.mxu0 0.0
      %1204 = vmatpush1.msra.mxu0 0.0
      %1205 = vmatprep.subr.mxu0 0.0
      %1206 = vmatpush1.msra.mxu0 0.0
      %1207 = vmatprep.subr.mxu0 0.0
      %1208 = vmatpush1.msra.mxu0 0.0
      %1209 = vmatprep.subr.mxu0 0.0
      %1210 = vmatpush1.msra.mxu0 0.0
      %1211 = vmatprep.subr.mxu0 0.0
      %1212 = vmatpush1.msra.mxu0 0.0
      %1213 = vmatprep.subr.mxu0 0.0
      %1214 = vmatpush1.msra.mxu0 0.0
      %1215 = vmatprep.subr.mxu0 0.0
      %1216 = vmatpush1.msra.mxu0 0.0
      %1217 = vmatprep.subr.mxu0 0.0
      %1218 = vmatpush1.msra.mxu0 0.0
      %1219 = vmatprep.subr.mxu0 0.0
      %1220 = vmatpush1.msra.mxu0 0.0
      %1221 = vmatprep.subr.mxu0 0.0
      %1222 = vmatpush1.msra.mxu0 0.0
      %1223 = vmatprep.subr.mxu0 0.0
      %1224 = vmatpush1.msra.mxu0 0.0
      %1225 = vmatprep.subr.mxu0 0.0
      %1226 = vmatpush1.msra.mxu0 0.0
      %1227 = vmatprep.subr.mxu0 0.0
      %1228 = vmatpush1.msra.mxu0 0.0
      %1229 = vmatprep.subr.mxu0 0.0
      %1230 = vmatpush1.msra.mxu0 0.0
      %1231 = vmatprep.mubr.f32.mxu0 0.0
      %1232 = vmatmul.mubr.f32.gmra.mrb[0].mxu0 %v1120
      %v1233 = vpop.f32.mrb[0].mxu0
      %v1234 = vadd.f32 0.0, %v1233
      %v1235 = vpop.f32.mrb[0].mxu0
      %1236 = vmatprep.mubr.f32.mxu0 0.0
      %1237 = vmatmul.mubr.f32.gmra.mrb[0].mxu0 %v1123
      %v1238 = vpop.f32.mrb[0].mxu0
      %v1239 = vadd.f32 0.0, %v1238
      %v1240 = vpop.f32.mrb[0].mxu0
      %1241 = vmatprep.mubr.f32.mxu0 0.0
      %1242 = vmatmul.mubr.f32.gmra.mrb[0].mxu0 %v1126
      %v1243 = vpop.f32.mrb[0].mxu0
      %v1244 = vadd.f32 0.0, %v1243
      %v1245 = vpop.f32.mrb[0].mxu0
      %1246 = vmatprep.mubr.f32.mxu0 0.0
      %1247 = vmatmul.mubr.f32.gmra.mrb[0].mxu0 %v1129
      %v1248 = vpop.f32.mrb[0].mxu0
      %v1249 = vadd.f32 0.0, %v1248
      %v1250 = vpop.f32.mrb[0].mxu0
      %1251 = vmatprep.mubr.f32.mxu0 0.0
      %1252 = vmatmul.mubr.f32.gmra.mrb[0].mxu0 %v1132
      %v1253 = vpop.f32.mrb[0].mxu0
      %v1254 = vadd.f32 0.0, %v1253
      %v1255 = vpop.f32.mrb[0].mxu0
      %1256 = vmatprep.mubr.f32.mxu0 0.0
      %1257 = vmatmul.mubr.f32.gmra.mrb[0].mxu0 %v1135
      %v1258 = vpop.f32.mrb[0].mxu0
      %v1259 = vadd.f32 0.0, %v1258
      %v1260 = vpop.f32.mrb[0].mxu0
      %1261 = vmatprep.mubr.f32.mxu0 0.0
      %1262 = vmatmul.mubr.f32.gmra.mrb[0].mxu0 %v1138
      %v1263 = vpop.f32.mrb[0].mxu0
      %v1264 = vadd.f32 0.0, %v1263
      %v1265 = vpop.f32.mrb[0].mxu0
      %1266 = vmatprep.mubr.f32.mxu0 0.0
      %1267 = vmatmul.mubr.f32.gmra.mrb[0].mxu0 %v1141
      %v1268 = vpop.f32.mrb[0].mxu0
      %v1269 = vadd.f32 0.0, %v1268
      %v1270 = vpop.f32.mrb[0].mxu0
      %1271 = vmatprep.mubr.f32.mxu0 0.0
      %1272 = vmatmul.mubr.f32.gmra.mrb[0].mxu0 %v1144
      %v1273 = vpop.f32.mrb[0].mxu0
      %v1274 = vadd.f32 0.0, %v1273
      %v1275 = vpop.f32.mrb[0].mxu0
      %1276 = vmatprep.mubr.f32.mxu0 0.0
      %1277 = vmatmul.mubr.f32.gmra.mrb[0].mxu0 %v1147
      %v1278 = vpop.f32.mrb[0].mxu0
      %v1279 = vadd.f32 0.0, %v1278
      %v1280 = vpop.f32.mrb[0].mxu0
      %1281 = vmatprep.mubr.f32.mxu0 0.0
      %1282 = vmatmul.mubr.f32.gmra.mrb[0].mxu0 %v1150
      %v1283 = vpop.f32.mrb[0].mxu0
      %v1284 = vadd.f32 0.0, %v1283
      %v1285 = vpop.f32.mrb[0].mxu0
      %1286 = vmatprep.mubr.f32.mxu0 0.0
      %1287 = vmatmul.mubr.f32.gmra.mrb[0].mxu0 %v1153
      %v1288 = vpop.f32.mrb[0].mxu0
      %v1289 = vadd.f32 0.0, %v1288
      %v1290 = vpop.f32.mrb[0].mxu0
      %1291 = vmatprep.mubr.f32.mxu0 0.0
      %1292 = vmatmul.mubr.f32.gmra.mrb[0].mxu0 %v1156
      %v1293 = vpop.f32.mrb[0].mxu0
      %v1294 = vadd.f32 0.0, %v1293
      %v1295 = vpop.f32.mrb[0].mxu0
      %1296 = vmatprep.mubr.f32.mxu0 0.0
      %1297 = vmatmul.mubr.f32.gmra.mrb[0].mxu0 %v1159
      %v1298 = vpop.f32.mrb[0].mxu0
      %v1299 = vadd.f32 0.0, %v1298
      %v1300 = vpop.f32.mrb[0].mxu0
      %1301 = vmatprep.mubr.f32.mxu0 0.0
      %1302 = vmatmul.mubr.f32.gmra.mrb[0].mxu0 %v1162
      %v1303 = vpop.f32.mrb[0].mxu0
      %v1304 = vadd.f32 0.0, %v1303
      %v1305 = vpop.f32.mrb[0].mxu0
      %1306 = vmatprep.mubr.f32.mxu0 0.0
      %1307 = vmatmul.mubr.f32.gmra.mrb[0].mxu0 %v1165
      %v1308 = vpop.f32.mrb[0].mxu0
      %v1309 = vadd.f32 0.0, %v1308
      %v1310 = vpop.f32.mrb[0].mxu0
      %1311 = vdwg.mxu0
      %vm1312 = vcmask 261120
      %v1314 = vsel %vm1312, %v534, 0
      %v1317 = vsel %vm1312, %v535, 0
      %v1320 = vsel %vm1312, %v536, 0
      %v1323 = vsel %vm1312, %v537, 0
      %v1326 = vsel %vm1312, %v538, 0
      %v1329 = vsel %vm1312, %v539, 0
      %v1332 = vsel %vm1312, %v540, 0
      %v1335 = vsel %vm1312, %v541, 0
      %v1338 = vsel %vm1312, %v542, 0
      %v1341 = vsel %vm1312, %v543, 0
      %v1344 = vsel %vm1312, %v544, 0
      %v1347 = vsel %vm1312, %v545, 0
      %v1350 = vsel %vm1312, %v546, 0
      %v1353 = vsel %vm1312, %v547, 0
      %v1356 = vsel %vm1312, %v548, 0
      %v1359 = vsel %vm1312, %v549, 0
      %1361 = vmatprep.subr.mxu0 0.0
      %1362 = vmatpush1.msra.mxu0 %v1111
      %1363 = vmatprep.subr.mxu0 0.0
      %1364 = vmatpush1.msra.mxu0 %v1112
      %1365 = vmatprep.subr.mxu0 0.0
      %1366 = vmatpush1.msra.mxu0 %v1113
      %1367 = vmatprep.subr.mxu0 0.0
      %1368 = vmatpush1.msra.mxu0 %v1114
      %1369 = vmatprep.subr.mxu0 0.0
      %1370 = vmatpush1.msra.mxu0 0.0
      %1371 = vmatprep.subr.mxu0 0.0
      %1372 = vmatpush1.msra.mxu0 0.0
      %1373 = vmatprep.subr.mxu0 0.0
      %1374 = vmatpush1.msra.mxu0 0.0
      %1375 = vmatprep.subr.mxu0 0.0
      %1376 = vmatpush1.msra.mxu0 0.0
      %1377 = vmatprep.subr.mxu0 0.0
      %1378 = vmatpush1.msra.mxu0 0.0
      %1379 = vmatprep.subr.mxu0 0.0
      %1380 = vmatpush1.msra.mxu0 0.0
      %1381 = vmatprep.subr.mxu0 0.0
      %1382 = vmatpush1.msra.mxu0 0.0
      %1383 = vmatprep.subr.mxu0 0.0
      %1384 = vmatpush1.msra.mxu0 0.0
      %1385 = vmatprep.subr.mxu0 0.0
      %1386 = vmatpush1.msra.mxu0 0.0
      %1387 = vmatprep.subr.mxu0 0.0
      %1388 = vmatpush1.msra.mxu0 0.0
      %1389 = vmatprep.subr.mxu0 0.0
      %1390 = vmatpush1.msra.mxu0 0.0
      %1391 = vmatprep.subr.mxu0 0.0
      %1392 = vmatpush1.msra.mxu0 0.0
      %1393 = vmatprep.subr.mxu0 0.0
      %1394 = vmatpush1.msra.mxu0 0.0
      %1395 = vmatprep.subr.mxu0 0.0
      %1396 = vmatpush1.msra.mxu0 0.0
      %1397 = vmatprep.subr.mxu0 0.0
      %1398 = vmatpush1.msra.mxu0 0.0
      %1399 = vmatprep.subr.mxu0 0.0
      %1400 = vmatpush1.msra.mxu0 0.0
      %1401 = vmatprep.subr.mxu0 0.0
      %1402 = vmatpush1.msra.mxu0 0.0
      %1403 = vmatprep.subr.mxu0 0.0
      %1404 = vmatpush1.msra.mxu0 0.0
      %1405 = vmatprep.subr.mxu0 0.0
      %1406 = vmatpush1.msra.mxu0 0.0
      %1407 = vmatprep.subr.mxu0 0.0
      %1408 = vmatpush1.msra.mxu0 0.0
      %1409 = vmatprep.subr.mxu0 0.0
      %1410 = vmatpush1.msra.mxu0 0.0
      %1411 = vmatprep.subr.mxu0 0.0
      %1412 = vmatpush1.msra.mxu0 0.0
      %1413 = vmatprep.subr.mxu0 0.0
      %1414 = vmatpush1.msra.mxu0 0.0
      %1415 = vmatprep.subr.mxu0 0.0
      %1416 = vmatpush1.msra.mxu0 0.0
      %1417 = vmatprep.subr.mxu0 0.0
      %1418 = vmatpush1.msra.mxu0 0.0
      %1419 = vmatprep.subr.mxu0 0.0
      %1420 = vmatpush1.msra.mxu0 0.0
      %1421 = vmatprep.subr.mxu0 0.0
      %1422 = vmatpush1.msra.mxu0 0.0
      %1423 = vmatprep.subr.mxu0 0.0
      %1424 = vmatpush1.msra.mxu0 0.0
      %1425 = vmatprep.mubr.f32.mxu0 0.0
      %1426 = vmatmul.mubr.f32.gmra.mrb[0].mxu0 %v1314
      %v1427 = vpop.f32.mrb[0].mxu0
      %v1428 = vadd.f32 %v1234, %v1427
      %v1429 = vpop.f32.mrb[0].mxu0
      %1430 = vmatprep.mubr.f32.mxu0 0.0
      %1431 = vmatmul.mubr.f32.gmra.mrb[0].mxu0 %v1317
      %v1432 = vpop.f32.mrb[0].mxu0
      %v1433 = vadd.f32 %v1239, %v1432
      %v1434 = vpop.f32.mrb[0].mxu0
      %1435 = vmatprep.mubr.f32.mxu0 0.0
      %1436 = vmatmul.mubr.f32.gmra.mrb[0].mxu0 %v1320
      %v1437 = vpop.f32.mrb[0].mxu0
      %v1438 = vadd.f32 %v1244, %v1437
      %v1439 = vpop.f32.mrb[0].mxu0
      %1440 = vmatprep.mubr.f32.mxu0 0.0
      %1441 = vmatmul.mubr.f32.gmra.mrb[0].mxu0 %v1323
      %v1442 = vpop.f32.mrb[0].mxu0
      %v1443 = vadd.f32 %v1249, %v1442
      %v1444 = vpop.f32.mrb[0].mxu0
      %1445 = vmatprep.mubr.f32.mxu0 0.0
      %1446 = vmatmul.mubr.f32.gmra.mrb[0].mxu0 %v1326
      %v1447 = vpop.f32.mrb[0].mxu0
      %v1448 = vadd.f32 %v1254, %v1447
      %v1449 = vpop.f32.mrb[0].mxu0
      %1450 = vmatprep.mubr.f32.mxu0 0.0
      %1451 = vmatmul.mubr.f32.gmra.mrb[0].mxu0 %v1329
      %v1452 = vpop.f32.mrb[0].mxu0
      %v1453 = vadd.f32 %v1259, %v1452
      %v1454 = vpop.f32.mrb[0].mxu0
      %1455 = vmatprep.mubr.f32.mxu0 0.0
      %1456 = vmatmul.mubr.f32.gmra.mrb[0].mxu0 %v1332
      %v1457 = vpop.f32.mrb[0].mxu0
      %v1458 = vadd.f32 %v1264, %v1457
      %v1459 = vpop.f32.mrb[0].mxu0
      %1460 = vmatprep.mubr.f32.mxu0 0.0
      %1461 = vmatmul.mubr.f32.gmra.mrb[0].mxu0 %v1335
      %v1462 = vpop.f32.mrb[0].mxu0
      %v1463 = vadd.f32 %v1269, %v1462
      %v1464 = vpop.f32.mrb[0].mxu0
      %1465 = vmatprep.mubr.f32.mxu0 0.0
      %1466 = vmatmul.mubr.f32.gmra.mrb[0].mxu0 %v1338
      %v1467 = vpop.f32.mrb[0].mxu0
      %v1468 = vadd.f32 %v1274, %v1467
      %v1469 = vpop.f32.mrb[0].mxu0
      %1470 = vmatprep.mubr.f32.mxu0 0.0
      %1471 = vmatmul.mubr.f32.gmra.mrb[0].mxu0 %v1341
      %v1472 = vpop.f32.mrb[0].mxu0
      %v1473 = vadd.f32 %v1279, %v1472
      %v1474 = vpop.f32.mrb[0].mxu0
      %1475 = vmatprep.mubr.f32.mxu0 0.0
      %1476 = vmatmul.mubr.f32.gmra.mrb[0].mxu0 %v1344
      %v1477 = vpop.f32.mrb[0].mxu0
      %v1478 = vadd.f32 %v1284, %v1477
      %v1479 = vpop.f32.mrb[0].mxu0
      %1480 = vmatprep.mubr.f32.mxu0 0.0
      %1481 = vmatmul.mubr.f32.gmra.mrb[0].mxu0 %v1347
      %v1482 = vpop.f32.mrb[0].mxu0
      %v1483 = vadd.f32 %v1289, %v1482
      %v1484 = vpop.f32.mrb[0].mxu0
      %1485 = vmatprep.mubr.f32.mxu0 0.0
      %1486 = vmatmul.mubr.f32.gmra.mrb[0].mxu0 %v1350
      %v1487 = vpop.f32.mrb[0].mxu0
      %v1488 = vadd.f32 %v1294, %v1487
      %v1489 = vpop.f32.mrb[0].mxu0
      %1490 = vmatprep.mubr.f32.mxu0 0.0
      %1491 = vmatmul.mubr.f32.gmra.mrb[0].mxu0 %v1353
      %v1492 = vpop.f32.mrb[0].mxu0
      %v1493 = vadd.f32 %v1299, %v1492
      %v1494 = vpop.f32.mrb[0].mxu0
      %1495 = vmatprep.mubr.f32.mxu0 0.0
      %1496 = vmatmul.mubr.f32.gmra.mrb[0].mxu0 %v1356
      %v1497 = vpop.f32.mrb[0].mxu0
      %v1498 = vadd.f32 %v1304, %v1497
      %v1499 = vpop.f32.mrb[0].mxu0
      %1500 = vmatprep.mubr.f32.mxu0 0.0
      %1501 = vmatmul.mubr.f32.gmra.mrb[0].mxu0 %v1359
      %v1502 = vpop.f32.mrb[0].mxu0
      %v1503 = vadd.f32 %v1309, %v1502
      %v1504 = vpop.f32.mrb[0].mxu0
      %1505 = vdwg.mxu0
      %v1506 = vld [vmem:[%s7] sm:$0x1]
      %v1508 = vlaneseq
      %v1509 = vshrl.u32 %v1508, 7
      %v1510 = vsub.s32 0, %v1509
      %v1511 = vrot.slane %v1506, %v1510
      %v1513 = vadd.f32 %v1428, %v1511
      %v1514 = vadd.f32 %v1433, %v1511
      %v1515 = vadd.f32 %v1438, %v1511
      %v1516 = vadd.f32 %v1443, %v1511
      %v1517 = vadd.f32 %v1448, %v1511
      %v1518 = vadd.f32 %v1453, %v1511
      %v1519 = vadd.f32 %v1458, %v1511
      %v1520 = vadd.f32 %v1463, %v1511
      %v1521 = vadd.f32 %v1468, %v1511
      %v1522 = vadd.f32 %v1473, %v1511
      %v1523 = vadd.f32 %v1478, %v1511
      %v1524 = vadd.f32 %v1483, %v1511
      %v1525 = vadd.f32 %v1488, %v1511
      %v1526 = vadd.f32 %v1493, %v1511
      %v1527 = vadd.f32 %v1498, %v1511
      %v1528 = vadd.f32 %v1503, %v1511
      %v1529 = vxor.u32 %v1513, 2147483648
      %v1530 = vxor.u32 %v1514, 2147483648
      %v1531 = vxor.u32 %v1515, 2147483648
      %v1532 = vxor.u32 %v1516, 2147483648
      %v1533 = vxor.u32 %v1517, 2147483648
      %v1534 = vxor.u32 %v1518, 2147483648
      %v1535 = vxor.u32 %v1519, 2147483648
      %v1536 = vxor.u32 %v1520, 2147483648
      %v1537 = vxor.u32 %v1521, 2147483648
      %v1538 = vxor.u32 %v1522, 2147483648
      %v1539 = vxor.u32 %v1523, 2147483648
      %v1540 = vxor.u32 %v1524, 2147483648
      %v1541 = vxor.u32 %v1525, 2147483648
      %v1542 = vxor.u32 %v1526, 2147483648
      %v1543 = vxor.u32 %v1527, 2147483648
      %v1544 = vxor.u32 %v1528, 2147483648
      %v1545 = vmul.f32 %v1529, 1.442695
      %v1546 = vpow.pop %v1545
      %v1547 = vmul.f32 %v1530, 1.442695
      %v1548 = vpow.pop %v1547
      %v1549 = vmul.f32 %v1531, 1.442695
      %v1550 = vpow.pop %v1549
      %v1551 = vmul.f32 %v1532, 1.442695
      %v1552 = vpow.pop %v1551
      %v1553 = vmul.f32 %v1533, 1.442695
      %v1554 = vpow.pop %v1553
      %v1555 = vmul.f32 %v1534, 1.442695
      %v1556 = vpow.pop %v1555
      %v1557 = vmul.f32 %v1535, 1.442695
      %v1558 = vpow.pop %v1557
      %v1559 = vmul.f32 %v1536, 1.442695
      %v1560 = vpow.pop %v1559
      %v1561 = vmul.f32 %v1537, 1.442695
      %v1562 = vpow.pop %v1561
      %v1563 = vmul.f32 %v1538, 1.442695
      %v1564 = vpow.pop %v1563
      %v1565 = vmul.f32 %v1539, 1.442695
      %v1566 = vpow.pop %v1565
      %v1567 = vmul.f32 %v1540, 1.442695
      %v1568 = vpow.pop %v1567
      %v1569 = vmul.f32 %v1541, 1.442695
      %v1570 = vpow.pop %v1569
      %v1571 = vmul.f32 %v1542, 1.442695
      %v1572 = vpow.pop %v1571
      %v1573 = vmul.f32 %v1543, 1.442695
      %v1574 = vpow.pop %v1573
      %v1575 = vmul.f32 %v1544, 1.442695
      %v1576 = vpow.pop %v1575
      %v1577 = vadd.f32 %v1546, 1.0
      %v1578 = vadd.f32 %v1548, 1.0
      %v1579 = vadd.f32 %v1550, 1.0
      %v1580 = vadd.f32 %v1552, 1.0
      %v1581 = vadd.f32 %v1554, 1.0
      %v1582 = vadd.f32 %v1556, 1.0
      %v1583 = vadd.f32 %v1558, 1.0
      %v1584 = vadd.f32 %v1560, 1.0
      %v1585 = vadd.f32 %v1562, 1.0
      %v1586 = vadd.f32 %v1564, 1.0
      %v1587 = vadd.f32 %v1566, 1.0
      %v1588 = vadd.f32 %v1568, 1.0
      %v1589 = vadd.f32 %v1570, 1.0
      %v1590 = vadd.f32 %v1572, 1.0
      %v1591 = vadd.f32 %v1574, 1.0
      %v1592 = vadd.f32 %v1576, 1.0
      %v1593 = vrcp.pop %v1577
      %v1594 = vmul.f32 1.0, %v1593
      %v1595 = vrcp.pop %v1578
      %v1596 = vmul.f32 1.0, %v1595
      %v1597 = vrcp.pop %v1579
      %v1598 = vmul.f32 1.0, %v1597
      %v1599 = vrcp.pop %v1580
      %v1600 = vmul.f32 1.0, %v1599
      %v1601 = vrcp.pop %v1581
      %v1602 = vmul.f32 1.0, %v1601
      %v1603 = vrcp.pop %v1582
      %v1604 = vmul.f32 1.0, %v1603
      %v1605 = vrcp.pop %v1583
      %v1606 = vmul.f32 1.0, %v1605
      %v1607 = vrcp.pop %v1584
      %v1608 = vmul.f32 1.0, %v1607
      %v1609 = vrcp.pop %v1585
      %v1610 = vmul.f32 1.0, %v1609
      %v1611 = vrcp.pop %v1586
      %v1612 = vmul.f32 1.0, %v1611
      %v1613 = vrcp.pop %v1587
      %v1614 = vmul.f32 1.0, %v1613
      %v1615 = vrcp.pop %v1588
      %v1616 = vmul.f32 1.0, %v1615
      %v1617 = vrcp.pop %v1589
      %v1618 = vmul.f32 1.0, %v1617
      %v1619 = vrcp.pop %v1590
      %v1620 = vmul.f32 1.0, %v1619
      %v1621 = vrcp.pop %v1591
      %v1622 = vmul.f32 1.0, %v1621
      %v1623 = vrcp.pop %v1592
      %v1624 = vmul.f32 1.0, %v1623
      %v1625 = vmul.f32 %v1513, %v1594
      %v1626 = vmul.f32 %v1514, %v1596
      %v1627 = vmul.f32 %v1515, %v1598
      %v1628 = vmul.f32 %v1516, %v1600
      %v1629 = vmul.f32 %v1517, %v1602
      %v1630 = vmul.f32 %v1518, %v1604
      %v1631 = vmul.f32 %v1519, %v1606
      %v1632 = vmul.f32 %v1520, %v1608
      %v1633 = vmul.f32 %v1521, %v1610
      %v1634 = vmul.f32 %v1522, %v1612
      %v1635 = vmul.f32 %v1523, %v1614
      %v1636 = vmul.f32 %v1524, %v1616
      %v1637 = vmul.f32 %v1525, %v1618
      %v1638 = vmul.f32 %v1526, %v1620
      %v1639 = vmul.f32 %v1527, %v1622
      %v1640 = vmul.f32 %v1528, %v1624
      %v1641 = vld [vmem:[%s8] sm:$0xff]
      %v1642 = vld [vmem:[%s8 + $0x8] sm:$0xff]
      %v1643 = vld [vmem:[%s8 + $0x10] sm:$0xff]
      %v1644 = vld [vmem:[%s8 + $0x18] sm:$0xff]
      %v1645 = vld [vmem:[%s8 + $0x20] sm:$0xff]
      %v1646 = vld [vmem:[%s8 + $0x28] sm:$0xff]
      %v1647 = vld [vmem:[%s8 + $0x30] sm:$0xff]
      %v1648 = vld [vmem:[%s8 + $0x38] sm:$0xff]
      %vm1649 = vcmask 523264
      %v1651 = vsel %vm1649, %v1625, 0
      %v1654 = vsel %vm1649, %v1626, 0
      %v1657 = vsel %vm1649, %v1627, 0
      %v1660 = vsel %vm1649, %v1628, 0
      %v1663 = vsel %vm1649, %v1629, 0
      %v1666 = vsel %vm1649, %v1630, 0
      %v1669 = vsel %vm1649, %v1631, 0
      %v1672 = vsel %vm1649, %v1632, 0
      %v1675 = vsel %vm1649, %v1633, 0
      %v1678 = vsel %vm1649, %v1634, 0
      %v1681 = vsel %vm1649, %v1635, 0
      %v1684 = vsel %vm1649, %v1636, 0
      %v1687 = vsel %vm1649, %v1637, 0
      %v1690 = vsel %vm1649, %v1638, 0
      %v1693 = vsel %vm1649, %v1639, 0
      %v1696 = vsel %vm1649, %v1640, 0
      %1698 = vmatprep.subr.mxu0 0.0
      %1699 = vmatpush1.msra.mxu0 %v1641
      %1700 = vmatprep.subr.mxu0 0.0
      %1701 = vmatpush1.msra.mxu0 %v1642
      %1702 = vmatprep.subr.mxu0 0.0
      %1703 = vmatpush1.msra.mxu0 %v1643
      %1704 = vmatprep.subr.mxu0 0.0
      %1705 = vmatpush1.msra.mxu0 %v1644
      %1706 = vmatprep.subr.mxu0 0.0
      %1707 = vmatpush1.msra.mxu0 %v1645
      %1708 = vmatprep.subr.mxu0 0.0
      %1709 = vmatpush1.msra.mxu0 %v1646
      %1710 = vmatprep.subr.mxu0 0.0
      %1711 = vmatpush1.msra.mxu0 %v1647
      %1712 = vmatprep.subr.mxu0 0.0
      %1713 = vmatpush1.msra.mxu0 %v1648
      %1714 = vmatprep.subr.mxu0 0.0
      %1715 = vmatpush1.msra.mxu0 0.0
      %1716 = vmatprep.subr.mxu0 0.0
      %1717 = vmatpush1.msra.mxu0 0.0
      %1718 = vmatprep.subr.mxu0 0.0
      %1719 = vmatpush1.msra.mxu0 0.0
      %1720 = vmatprep.subr.mxu0 0.0
      %1721 = vmatpush1.msra.mxu0 0.0
      %1722 = vmatprep.subr.mxu0 0.0
      %1723 = vmatpush1.msra.mxu0 0.0
      %1724 = vmatprep.subr.mxu0 0.0
      %1725 = vmatpush1.msra.mxu0 0.0
      %1726 = vmatprep.subr.mxu0 0.0
      %1727 = vmatpush1.msra.mxu0 0.0
      %1728 = vmatprep.subr.mxu0 0.0
      %1729 = vmatpush1.msra.mxu0 0.0
      %1730 = vmatprep.subr.mxu0 0.0
      %1731 = vmatpush1.msra.mxu0 0.0
      %1732 = vmatprep.subr.mxu0 0.0
      %1733 = vmatpush1.msra.mxu0 0.0
      %1734 = vmatprep.subr.mxu0 0.0
      %1735 = vmatpush1.msra.mxu0 0.0
      %1736 = vmatprep.subr.mxu0 0.0
      %1737 = vmatpush1.msra.mxu0 0.0
      %1738 = vmatprep.subr.mxu0 0.0
      %1739 = vmatpush1.msra.mxu0 0.0
      %1740 = vmatprep.subr.mxu0 0.0
      %1741 = vmatpush1.msra.mxu0 0.0
      %1742 = vmatprep.subr.mxu0 0.0
      %1743 = vmatpush1.msra.mxu0 0.0
      %1744 = vmatprep.subr.mxu0 0.0
      %1745 = vmatpush1.msra.mxu0 0.0
      %1746 = vmatprep.subr.mxu0 0.0
      %1747 = vmatpush1.msra.mxu0 0.0
      %1748 = vmatprep.subr.mxu0 0.0
      %1749 = vmatpush1.msra.mxu0 0.0
      %1750 = vmatprep.subr.mxu0 0.0
      %1751 = vmatpush1.msra.mxu0 0.0
      %1752 = vmatprep.subr.mxu0 0.0
      %1753 = vmatpush1.msra.mxu0 0.0
      %1754 = vmatprep.subr.mxu0 0.0
      %1755 = vmatpush1.msra.mxu0 0.0
      %1756 = vmatprep.subr.mxu0 0.0
      %1757 = vmatpush1.msra.mxu0 0.0
      %1758 = vmatprep.subr.mxu0 0.0
      %1759 = vmatpush1.msra.mxu0 0.0
      %1760 = vmatprep.subr.mxu0 0.0
      %1761 = vmatpush1.msra.mxu0 0.0
      %1762 = vmatprep.mubr.f32.mxu0 0.0
      %1763 = vmatmul.mubr.f32.gmra.mrb[0].mxu0 %v1651
      %v1764 = vpop.f32.mrb[0].mxu0
      %v1765 = vadd.f32 0.0, %v1764
      %v1766 = vpop.f32.mrb[0].mxu0
      %1767 = vmatprep.mubr.f32.mxu0 0.0
      %1768 = vmatmul.mubr.f32.gmra.mrb[0].mxu0 %v1654
      %v1769 = vpop.f32.mrb[0].mxu0
      %v1770 = vadd.f32 0.0, %v1769
      %v1771 = vpop.f32.mrb[0].mxu0
      %1772 = vmatprep.mubr.f32.mxu0 0.0
      %1773 = vmatmul.mubr.f32.gmra.mrb[0].mxu0 %v1657
      %v1774 = vpop.f32.mrb[0].mxu0
      %v1775 = vadd.f32 0.0, %v1774
      %v1776 = vpop.f32.mrb[0].mxu0
      %1777 = vmatprep.mubr.f32.mxu0 0.0
      %1778 = vmatmul.mubr.f32.gmra.mrb[0].mxu0 %v1660
      %v1779 = vpop.f32.mrb[0].mxu0
      %v1780 = vadd.f32 0.0, %v1779
      %v1781 = vpop.f32.mrb[0].mxu0
      %1782 = vmatprep.mubr.f32.mxu0 0.0
      %1783 = vmatmul.mubr.f32.gmra.mrb[0].mxu0 %v1663
      %v1784 = vpop.f32.mrb[0].mxu0
      %v1785 = vadd.f32 0.0, %v1784
      %v1786 = vpop.f32.mrb[0].mxu0
      %1787 = vmatprep.mubr.f32.mxu0 0.0
      %1788 = vmatmul.mubr.f32.gmra.mrb[0].mxu0 %v1666
      %v1789 = vpop.f32.mrb[0].mxu0
      %v1790 = vadd.f32 0.0, %v1789
      %v1791 = vpop.f32.mrb[0].mxu0
      %1792 = vmatprep.mubr.f32.mxu0 0.0
      %1793 = vmatmul.mubr.f32.gmra.mrb[0].mxu0 %v1669
      %v1794 = vpop.f32.mrb[0].mxu0
      %v1795 = vadd.f32 0.0, %v1794
      %v1796 = vpop.f32.mrb[0].mxu0
      %1797 = vmatprep.mubr.f32.mxu0 0.0
      %1798 = vmatmul.mubr.f32.gmra.mrb[0].mxu0 %v1672
      %v1799 = vpop.f32.mrb[0].mxu0
      %v1800 = vadd.f32 0.0, %v1799
      %v1801 = vpop.f32.mrb[0].mxu0
      %1802 = vmatprep.mubr.f32.mxu0 0.0
      %1803 = vmatmul.mubr.f32.gmra.mrb[0].mxu0 %v1675
      %v1804 = vpop.f32.mrb[0].mxu0
      %v1805 = vadd.f32 0.0, %v1804
      %v1806 = vpop.f32.mrb[0].mxu0
      %1807 = vmatprep.mubr.f32.mxu0 0.0
      %1808 = vmatmul.mubr.f32.gmra.mrb[0].mxu0 %v1678
      %v1809 = vpop.f32.mrb[0].mxu0
      %v1810 = vadd.f32 0.0, %v1809
      %v1811 = vpop.f32.mrb[0].mxu0
      %1812 = vmatprep.mubr.f32.mxu0 0.0
      %1813 = vmatmul.mubr.f32.gmra.mrb[0].mxu0 %v1681
      %v1814 = vpop.f32.mrb[0].mxu0
      %v1815 = vadd.f32 0.0, %v1814
      %v1816 = vpop.f32.mrb[0].mxu0
      %1817 = vmatprep.mubr.f32.mxu0 0.0
      %1818 = vmatmul.mubr.f32.gmra.mrb[0].mxu0 %v1684
      %v1819 = vpop.f32.mrb[0].mxu0
      %v1820 = vadd.f32 0.0, %v1819
      %v1821 = vpop.f32.mrb[0].mxu0
      %1822 = vmatprep.mubr.f32.mxu0 0.0
      %1823 = vmatmul.mubr.f32.gmra.mrb[0].mxu0 %v1687
      %v1824 = vpop.f32.mrb[0].mxu0
      %v1825 = vadd.f32 0.0, %v1824
      %v1826 = vpop.f32.mrb[0].mxu0
      %1827 = vmatprep.mubr.f32.mxu0 0.0
      %1828 = vmatmul.mubr.f32.gmra.mrb[0].mxu0 %v1690
      %v1829 = vpop.f32.mrb[0].mxu0
      %v1830 = vadd.f32 0.0, %v1829
      %v1831 = vpop.f32.mrb[0].mxu0
      %1832 = vmatprep.mubr.f32.mxu0 0.0
      %1833 = vmatmul.mubr.f32.gmra.mrb[0].mxu0 %v1693
      %v1834 = vpop.f32.mrb[0].mxu0
      %v1835 = vadd.f32 0.0, %v1834
      %v1836 = vpop.f32.mrb[0].mxu0
      %1837 = vmatprep.mubr.f32.mxu0 0.0
      %1838 = vmatmul.mubr.f32.gmra.mrb[0].mxu0 %v1696
      %v1839 = vpop.f32.mrb[0].mxu0
      %v1840 = vadd.f32 0.0, %v1839
      %v1841 = vpop.f32.mrb[0].mxu0
      %1842 = vdwg.mxu0
      %v1843 = vadd.f32 %v534, %v1765
      %v1844 = vadd.f32 %v535, %v1770
      %v1845 = vadd.f32 %v536, %v1775
      %v1846 = vadd.f32 %v537, %v1780
      %v1847 = vadd.f32 %v538, %v1785
      %v1848 = vadd.f32 %v539, %v1790
      %v1849 = vadd.f32 %v540, %v1795
      %v1850 = vadd.f32 %v541, %v1800
      %v1851 = vadd.f32 %v542, %v1805
      %v1852 = vadd.f32 %v543, %v1810
      %v1853 = vadd.f32 %v544, %v1815
      %v1854 = vadd.f32 %v545, %v1820
      %v1855 = vadd.f32 %v546, %v1825
      %v1856 = vadd.f32 %v547, %v1830
      %v1857 = vadd.f32 %v548, %v1835
      %v1858 = vadd.f32 %v549, %v1840
      %v1859 = vld [vmem:[%s9] sm:$0x1]
      %v1861 = vlaneseq
      %v1862 = vshrl.u32 %v1861, 7
      %v1863 = vsub.s32 0, %v1862
      %v1864 = vrot.slane %v1859, %v1863
      %v1866 = vadd.f32 %v1843, %v1864
      %v1867 = vadd.f32 %v1844, %v1864
      %v1868 = vadd.f32 %v1845, %v1864
      %v1869 = vadd.f32 %v1846, %v1864
      %v1870 = vadd.f32 %v1847, %v1864
      %v1871 = vadd.f32 %v1848, %v1864
      %v1872 = vadd.f32 %v1849, %v1864
      %v1873 = vadd.f32 %v1850, %v1864
      %v1874 = vadd.f32 %v1851, %v1864
      %v1875 = vadd.f32 %v1852, %v1864
      %v1876 = vadd.f32 %v1853, %v1864
      %v1877 = vadd.f32 %v1854, %v1864
      %v1878 = vadd.f32 %v1855, %v1864
      %v1879 = vadd.f32 %v1856, %v1864
      %v1880 = vadd.f32 %v1857, %v1864
      %v1881 = vadd.f32 %v1858, %v1864
      %v1882 = vld [vmem:[%s10] sm:$0xff]
      %v1883 = vld [vmem:[%s10 + $0x8] sm:$0xff]
      %v1884 = vld [vmem:[%s10 + $0x10] sm:$0xff]
      %v1885 = vld [vmem:[%s10 + $0x18] sm:$0xff]
      %v1886 = vld [vmem:[%s10 + $0x20] sm:$0xff]
      %v1887 = vld [vmem:[%s10 + $0x28] sm:$0xff]
      %v1888 = vld [vmem:[%s10 + $0x30] sm:$0xff]
      %v1889 = vld [vmem:[%s10 + $0x38] sm:$0xff]
      %v1890 = vld [vmem:[%s11] sm:$0x1]
      %v1892 = vlaneseq
      %v1893 = vshrl.u32 %v1892, 7
      %v1894 = vsub.s32 0, %v1893
      %v1895 = vrot.slane %v1890, %v1894
      %1897 = vmatprep.subr.mxu0 0.0
      %1898 = vmatpush1.msra.mxu0 %v1882
      %1899 = vmatprep.subr.mxu0 0.0
      %1900 = vmatpush1.msra.mxu0 %v1883
      %1901 = vmatprep.subr.mxu0 0.0
      %1902 = vmatpush1.msra.mxu0 %v1884
      %1903 = vmatprep.subr.mxu0 0.0
      %1904 = vmatpush1.msra.mxu0 %v1885
      %1905 = vmatprep.subr.mxu0 0.0
      %1906 = vmatpush1.msra.mxu0 %v1886
      %1907 = vmatprep.subr.mxu0 0.0
      %1908 = vmatpush1.msra.mxu0 %v1887
      %1909 = vmatprep.subr.mxu0 0.0
      %1910 = vmatpush1.msra.mxu0 %v1888
      %1911 = vmatprep.subr.mxu0 0.0
      %1912 = vmatpush1.msra.mxu0 %v1889
      %1913 = vmatprep.subr.mxu0 0.0
      %1914 = vmatpush1.msra.mxu0 0.0
      %1915 = vmatprep.subr.mxu0 0.0
      %1916 = vmatpush1.msra.mxu0 0.0
      %1917 = vmatprep.subr.mxu0 0.0
      %1918 = vmatpush1.msra.mxu0 0.0
      %1919 = vmatprep.subr.mxu0 0.0
      %1920 = vmatpush1.msra.mxu0 0.0
      %1921 = vmatprep.subr.mxu0 0.0
      %1922 = vmatpush1.msra.mxu0 0.0
      %1923 = vmatprep.subr.mxu0 0.0
      %1924 = vmatpush1.msra.mxu0 0.0
      %1925 = vmatprep.subr.mxu0 0.0
      %1926 = vmatpush1.msra.mxu0 0.0
      %1927 = vmatprep.subr.mxu0 0.0
      %1928 = vmatpush1.msra.mxu0 0.0
      %1929 = vmatprep.subr.mxu0 0.0
      %1930 = vmatpush1.msra.mxu0 0.0
      %1931 = vmatprep.subr.mxu0 0.0
      %1932 = vmatpush1.msra.mxu0 0.0
      %1933 = vmatprep.subr.mxu0 0.0
      %1934 = vmatpush1.msra.mxu0 0.0
      %1935 = vmatprep.subr.mxu0 0.0
      %1936 = vmatpush1.msra.mxu0 0.0
      %1937 = vmatprep.subr.mxu0 0.0
      %1938 = vmatpush1.msra.mxu0 0.0
      %1939 = vmatprep.subr.mxu0 0.0
      %1940 = vmatpush1.msra.mxu0 0.0
      %1941 = vmatprep.subr.mxu0 0.0
      %1942 = vmatpush1.msra.mxu0 0.0
      %1943 = vmatprep.subr.mxu0 0.0
      %1944 = vmatpush1.msra.mxu0 0.0
      %1945 = vmatprep.subr.mxu0 0.0
      %1946 = vmatpush1.msra.mxu0 0.0
      %1947 = vmatprep.subr.mxu0 0.0
      %1948 = vmatpush1.msra.mxu0 0.0
      %1949 = vmatprep.subr.mxu0 0.0
      %1950 = vmatpush1.msra.mxu0 0.0
      %1951 = vmatprep.subr.mxu0 0.0
      %1952 = vmatpush1.msra.mxu0 0.0
      %1953 = vmatprep.subr.mxu0 0.0
      %1954 = vmatpush1.msra.mxu0 0.0
      %1955 = vmatprep.subr.mxu0 0.0
      %1956 = vmatpush1.msra.mxu0 0.0
      %1957 = vmatprep.subr.mxu0 0.0
      %1958 = vmatpush1.msra.mxu0 0.0
      %1959 = vmatprep.subr.mxu0 0.0
      %1960 = vmatpush1.msra.mxu0 0.0
      %1961 = vmatprep.mubr.f32.mxu0 0.0
      %1962 = vmatmul.mubr.f32.gmra.mrb[0].mxu0 %v1651
      %v1963 = vpop.f32.mrb[0].mxu0
      %v1964 = vadd.f32 %v1895, %v1963
      %v1965 = vpop.f32.mrb[0].mxu0
      %1966 = vmatprep.mubr.f32.mxu0 0.0
      %1967 = vmatmul.mubr.f32.gmra.mrb[0].mxu0 %v1654
      %v1968 = vpop.f32.mrb[0].mxu0
      %v1969 = vadd.f32 %v1895, %v1968
      %v1970 = vpop.f32.mrb[0].mxu0
      %1971 = vmatprep.mubr.f32.mxu0 0.0
      %1972 = vmatmul.mubr.f32.gmra.mrb[0].mxu0 %v1657
      %v1973 = vpop.f32.mrb[0].mxu0
      %v1974 = vadd.f32 %v1895, %v1973
      %v1975 = vpop.f32.mrb[0].mxu0
      %1976 = vmatprep.mubr.f32.mxu0 0.0
      %1977 = vmatmul.mubr.f32.gmra.mrb[0].mxu0 %v1660
      %v1978 = vpop.f32.mrb[0].mxu0
      %v1979 = vadd.f32 %v1895, %v1978
      %v1980 = vpop.f32.mrb[0].mxu0
      %1981 = vmatprep.mubr.f32.mxu0 0.0
      %1982 = vmatmul.mubr.f32.gmra.mrb[0].mxu0 %v1663
      %v1983 = vpop.f32.mrb[0].mxu0
      %v1984 = vadd.f32 %v1895, %v1983
      %v1985 = vpop.f32.mrb[0].mxu0
      %1986 = vmatprep.mubr.f32.mxu0 0.0
      %1987 = vmatmul.mubr.f32.gmra.mrb[0].mxu0 %v1666
      %v1988 = vpop.f32.mrb[0].mxu0
      %v1989 = vadd.f32 %v1895, %v1988
      %v1990 = vpop.f32.mrb[0].mxu0
      %1991 = vmatprep.mubr.f32.mxu0 0.0
      %1992 = vmatmul.mubr.f32.gmra.mrb[0].mxu0 %v1669
      %v1993 = vpop.f32.mrb[0].mxu0
      %v1994 = vadd.f32 %v1895, %v1993
      %v1995 = vpop.f32.mrb[0].mxu0
      %1996 = vmatprep.mubr.f32.mxu0 0.0
      %1997 = vmatmul.mubr.f32.gmra.mrb[0].mxu0 %v1672
      %v1998 = vpop.f32.mrb[0].mxu0
      %v1999 = vadd.f32 %v1895, %v1998
      %v2000 = vpop.f32.mrb[0].mxu0
      %2001 = vmatprep.mubr.f32.mxu0 0.0
      %2002 = vmatmul.mubr.f32.gmra.mrb[0].mxu0 %v1675
      %v2003 = vpop.f32.mrb[0].mxu0
      %v2004 = vadd.f32 %v1895, %v2003
      %v2005 = vpop.f32.mrb[0].mxu0
      %2006 = vmatprep.mubr.f32.mxu0 0.0
      %2007 = vmatmul.mubr.f32.gmra.mrb[0].mxu0 %v1678
      %v2008 = vpop.f32.mrb[0].mxu0
      %v2009 = vadd.f32 %v1895, %v2008
      %v2010 = vpop.f32.mrb[0].mxu0
      %2011 = vmatprep.mubr.f32.mxu0 0.0
      %2012 = vmatmul.mubr.f32.gmra.mrb[0].mxu0 %v1681
      %v2013 = vpop.f32.mrb[0].mxu0
      %v2014 = vadd.f32 %v1895, %v2013
      %v2015 = vpop.f32.mrb[0].mxu0
      %2016 = vmatprep.mubr.f32.mxu0 0.0
      %2017 = vmatmul.mubr.f32.gmra.mrb[0].mxu0 %v1684
      %v2018 = vpop.f32.mrb[0].mxu0
      %v2019 = vadd.f32 %v1895, %v2018
      %v2020 = vpop.f32.mrb[0].mxu0
      %2021 = vmatprep.mubr.f32.mxu0 0.0
      %2022 = vmatmul.mubr.f32.gmra.mrb[0].mxu0 %v1687
      %v2023 = vpop.f32.mrb[0].mxu0
      %v2024 = vadd.f32 %v1895, %v2023
      %v2025 = vpop.f32.mrb[0].mxu0
      %2026 = vmatprep.mubr.f32.mxu0 0.0
      %2027 = vmatmul.mubr.f32.gmra.mrb[0].mxu0 %v1690
      %v2028 = vpop.f32.mrb[0].mxu0
      %v2029 = vadd.f32 %v1895, %v2028
      %v2030 = vpop.f32.mrb[0].mxu0
      %2031 = vmatprep.mubr.f32.mxu0 0.0
      %2032 = vmatmul.mubr.f32.gmra.mrb[0].mxu0 %v1693
      %v2033 = vpop.f32.mrb[0].mxu0
      %v2034 = vadd.f32 %v1895, %v2033
      %v2035 = vpop.f32.mrb[0].mxu0
      %2036 = vmatprep.mubr.f32.mxu0 0.0
      %2037 = vmatmul.mubr.f32.gmra.mrb[0].mxu0 %v1696
      %v2038 = vpop.f32.mrb[0].mxu0
      %v2039 = vadd.f32 %v1895, %v2038
      %v2040 = vpop.f32.mrb[0].mxu0
      %2041 = vdwg.mxu0
      %v2042 = vxor.u32 %v1964, 2147483648
      %v2043 = vxor.u32 %v1969, 2147483648
      %v2044 = vxor.u32 %v1974, 2147483648
      %v2045 = vxor.u32 %v1979, 2147483648
      %v2046 = vxor.u32 %v1984, 2147483648
      %v2047 = vxor.u32 %v1989, 2147483648
      %v2048 = vxor.u32 %v1994, 2147483648
      %v2049 = vxor.u32 %v1999, 2147483648
      %v2050 = vxor.u32 %v2004, 2147483648
      %v2051 = vxor.u32 %v2009, 2147483648
      %v2052 = vxor.u32 %v2014, 2147483648
      %v2053 = vxor.u32 %v2019, 2147483648
      %v2054 = vxor.u32 %v2024, 2147483648
      %v2055 = vxor.u32 %v2029, 2147483648
      %v2056 = vxor.u32 %v2034, 2147483648
      %v2057 = vxor.u32 %v2039, 2147483648
      %v2058 = vmul.f32 %v2042, 1.442695
      %v2059 = vpow.pop %v2058
      %v2060 = vmul.f32 %v2043, 1.442695
      %v2061 = vpow.pop %v2060
      %v2062 = vmul.f32 %v2044, 1.442695
      %v2063 = vpow.pop %v2062
      %v2064 = vmul.f32 %v2045, 1.442695
      %v2065 = vpow.pop %v2064
      %v2066 = vmul.f32 %v2046, 1.442695
      %v2067 = vpow.pop %v2066
      %v2068 = vmul.f32 %v2047, 1.442695
      %v2069 = vpow.pop %v2068
      %v2070 = vmul.f32 %v2048, 1.442695
      %v2071 = vpow.pop %v2070
      %v2072 = vmul.f32 %v2049, 1.442695
      %v2073 = vpow.pop %v2072
      %v2074 = vmul.f32 %v2050, 1.442695
      %v2075 = vpow.pop %v2074
      %v2076 = vmul.f32 %v2051, 1.442695
      %v2077 = vpow.pop %v2076
      %v2078 = vmul.f32 %v2052, 1.442695
      %v2079 = vpow.pop %v2078
      %v2080 = vmul.f32 %v2053, 1.442695
      %v2081 = vpow.pop %v2080
      %v2082 = vmul.f32 %v2054, 1.442695
      %v2083 = vpow.pop %v2082
      %v2084 = vmul.f32 %v2055, 1.442695
      %v2085 = vpow.pop %v2084
      %v2086 = vmul.f32 %v2056, 1.442695
      %v2087 = vpow.pop %v2086
      %v2088 = vmul.f32 %v2057, 1.442695
      %v2089 = vpow.pop %v2088
      %v2090 = vadd.f32 %v2059, 1.0
      %v2091 = vadd.f32 %v2061, 1.0
      %v2092 = vadd.f32 %v2063, 1.0
      %v2093 = vadd.f32 %v2065, 1.0
      %v2094 = vadd.f32 %v2067, 1.0
      %v2095 = vadd.f32 %v2069, 1.0
      %v2096 = vadd.f32 %v2071, 1.0
      %v2097 = vadd.f32 %v2073, 1.0
      %v2098 = vadd.f32 %v2075, 1.0
      %v2099 = vadd.f32 %v2077, 1.0
      %v2100 = vadd.f32 %v2079, 1.0
      %v2101 = vadd.f32 %v2081, 1.0
      %v2102 = vadd.f32 %v2083, 1.0
      %v2103 = vadd.f32 %v2085, 1.0
      %v2104 = vadd.f32 %v2087, 1.0
      %v2105 = vadd.f32 %v2089, 1.0
      %v2106 = vrcp.pop %v2090
      %v2107 = vmul.f32 1.0, %v2106
      %v2108 = vrcp.pop %v2091
      %v2109 = vmul.f32 1.0, %v2108
      %v2110 = vrcp.pop %v2092
      %v2111 = vmul.f32 1.0, %v2110
      %v2112 = vrcp.pop %v2093
      %v2113 = vmul.f32 1.0, %v2112
      %v2114 = vrcp.pop %v2094
      %v2115 = vmul.f32 1.0, %v2114
      %v2116 = vrcp.pop %v2095
      %v2117 = vmul.f32 1.0, %v2116
      %v2118 = vrcp.pop %v2096
      %v2119 = vmul.f32 1.0, %v2118
      %v2120 = vrcp.pop %v2097
      %v2121 = vmul.f32 1.0, %v2120
      %v2122 = vrcp.pop %v2098
      %v2123 = vmul.f32 1.0, %v2122
      %v2124 = vrcp.pop %v2099
      %v2125 = vmul.f32 1.0, %v2124
      %v2126 = vrcp.pop %v2100
      %v2127 = vmul.f32 1.0, %v2126
      %v2128 = vrcp.pop %v2101
      %v2129 = vmul.f32 1.0, %v2128
      %v2130 = vrcp.pop %v2102
      %v2131 = vmul.f32 1.0, %v2130
      %v2132 = vrcp.pop %v2103
      %v2133 = vmul.f32 1.0, %v2132
      %v2134 = vrcp.pop %v2104
      %v2135 = vmul.f32 1.0, %v2134
      %v2136 = vrcp.pop %v2105
      %v2137 = vmul.f32 1.0, %v2136
      %v2138 = vmul.f32 %v697, %v2107
      %v2139 = vmul.f32 %v702, %v2109
      %v2140 = vmul.f32 %v707, %v2111
      %v2141 = vmul.f32 %v712, %v2113
      %v2142 = vmul.f32 %v717, %v2115
      %v2143 = vmul.f32 %v722, %v2117
      %v2144 = vmul.f32 %v727, %v2119
      %v2145 = vmul.f32 %v732, %v2121
      %v2146 = vmul.f32 %v737, %v2123
      %v2147 = vmul.f32 %v742, %v2125
      %v2148 = vmul.f32 %v747, %v2127
      %v2149 = vmul.f32 %v752, %v2129
      %v2150 = vmul.f32 %v757, %v2131
      %v2151 = vmul.f32 %v762, %v2133
      %v2152 = vmul.f32 %v767, %v2135
      %v2153 = vmul.f32 %v772, %v2137
      %v2154 = vadd.f32 %v550, %v2138
      %v2155 = vadd.f32 %v551, %v2139
      %v2156 = vadd.f32 %v552, %v2140
      %v2157 = vadd.f32 %v553, %v2141
      %v2158 = vadd.f32 %v554, %v2142
      %v2159 = vadd.f32 %v555, %v2143
      %v2160 = vadd.f32 %v556, %v2144
      %v2161 = vadd.f32 %v557, %v2145
      %v2162 = vadd.f32 %v558, %v2146
      %v2163 = vadd.f32 %v559, %v2147
      %v2164 = vadd.f32 %v560, %v2148
      %v2165 = vadd.f32 %v561, %v2149
      %v2166 = vadd.f32 %v562, %v2150
      %v2167 = vadd.f32 %v563, %v2151
      %v2168 = vadd.f32 %v564, %v2152
      %v2169 = vadd.f32 %v565, %v2153
      %s2170 = scalar_lea.vmem %s3, 120
      %v2171 = vld [vmem:[%s2170] sm:$0xff]
      %v2172 = vld [vmem:[%s2170 + $0x8] sm:$0xff]
      %v2173 = vld [vmem:[%s2170 + $0x10] sm:$0xff]
      %v2174 = vld [vmem:[%s2170 + $0x18] sm:$0xff]
      %v2175 = vld [vmem:[%s2170 + $0x20] sm:$0xff]
      %v2176 = vld [vmem:[%s2170 + $0x28] sm:$0xff]
      %v2177 = vld [vmem:[%s2170 + $0x30] sm:$0xff]
      %v2178 = vld [vmem:[%s2170 + $0x38] sm:$0xff]
      %v2179 = vld [vmem:[%s2170 + $0x40] sm:$0xff]
      %v2180 = vld [vmem:[%s2170 + $0x48] sm:$0xff]
      %v2181 = vld [vmem:[%s2170 + $0x50] sm:$0xff]
      %v2182 = vld [vmem:[%s2170 + $0x58] sm:$0xff]
      %v2183 = vld [vmem:[%s2170 + $0x60] sm:$0xff]
      %v2184 = vld [vmem:[%s2170 + $0x68] sm:$0xff]
      %v2185 = vld [vmem:[%s2170 + $0x70] sm:$0xff]
      %v2187 = vsel %vm581, %v2154, 0
      %v2190 = vsel %vm581, %v2155, 0
      %v2193 = vsel %vm581, %v2156, 0
      %v2196 = vsel %vm581, %v2157, 0
      %v2199 = vsel %vm581, %v2158, 0
      %v2202 = vsel %vm581, %v2159, 0
      %v2205 = vsel %vm581, %v2160, 0
      %v2208 = vsel %vm581, %v2161, 0
      %v2211 = vsel %vm581, %v2162, 0
      %v2214 = vsel %vm581, %v2163, 0
      %v2217 = vsel %vm581, %v2164, 0
      %v2220 = vsel %vm581, %v2165, 0
      %v2223 = vsel %vm581, %v2166, 0
      %v2226 = vsel %vm581, %v2167, 0
      %v2229 = vsel %vm581, %v2168, 0
      %v2232 = vsel %vm581, %v2169, 0
      %2234 = vmatprep.subr.mxu0 0.0
      %2235 = vmatpush1.msra.mxu0 %v2171
      %2236 = vmatprep.subr.mxu0 0.0
      %2237 = vmatpush1.msra.mxu0 %v2172
      %2238 = vmatprep.subr.mxu0 0.0
      %2239 = vmatpush1.msra.mxu0 %v2173
      %2240 = vmatprep.subr.mxu0 0.0
      %2241 = vmatpush1.msra.mxu0 %v2174
      %2242 = vmatprep.subr.mxu0 0.0
      %2243 = vmatpush1.msra.mxu0 %v2175
      %2244 = vmatprep.subr.mxu0 0.0
      %2245 = vmatpush1.msra.mxu0 %v2176
      %2246 = vmatprep.subr.mxu0 0.0
      %2247 = vmatpush1.msra.mxu0 %v2177
      %2248 = vmatprep.subr.mxu0 0.0
      %2249 = vmatpush1.msra.mxu0 %v2178
      %2250 = vmatprep.subr.mxu0 0.0
      %2251 = vmatpush1.msra.mxu0 %v2179
      %2252 = vmatprep.subr.mxu0 0.0
      %2253 = vmatpush1.msra.mxu0 %v2180
      %2254 = vmatprep.subr.mxu0 0.0
      %2255 = vmatpush1.msra.mxu0 %v2181
      %2256 = vmatprep.subr.mxu0 0.0
      %2257 = vmatpush1.msra.mxu0 %v2182
      %2258 = vmatprep.subr.mxu0 0.0
      %2259 = vmatpush1.msra.mxu0 %v2183
      %2260 = vmatprep.subr.mxu0 0.0
      %2261 = vmatpush1.msra.mxu0 %v2184
      %2262 = vmatprep.subr.mxu0 0.0
      %2263 = vmatpush1.msra.mxu0 %v2185
      %2264 = vmatprep.subr.mxu0 0.0
      %2265 = vmatpush1.msra.mxu0 0.0
      %2266 = vmatprep.subr.mxu0 0.0
      %2267 = vmatpush1.msra.mxu0 0.0
      %2268 = vmatprep.subr.mxu0 0.0
      %2269 = vmatpush1.msra.mxu0 0.0
      %2270 = vmatprep.subr.mxu0 0.0
      %2271 = vmatpush1.msra.mxu0 0.0
      %2272 = vmatprep.subr.mxu0 0.0
      %2273 = vmatpush1.msra.mxu0 0.0
      %2274 = vmatprep.subr.mxu0 0.0
      %2275 = vmatpush1.msra.mxu0 0.0
      %2276 = vmatprep.subr.mxu0 0.0
      %2277 = vmatpush1.msra.mxu0 0.0
      %2278 = vmatprep.subr.mxu0 0.0
      %2279 = vmatpush1.msra.mxu0 0.0
      %2280 = vmatprep.subr.mxu0 0.0
      %2281 = vmatpush1.msra.mxu0 0.0
      %2282 = vmatprep.subr.mxu0 0.0
      %2283 = vmatpush1.msra.mxu0 0.0
      %2284 = vmatprep.subr.mxu0 0.0
      %2285 = vmatpush1.msra.mxu0 0.0
      %2286 = vmatprep.subr.mxu0 0.0
      %2287 = vmatpush1.msra.mxu0 0.0
      %2288 = vmatprep.subr.mxu0 0.0
      %2289 = vmatpush1.msra.mxu0 0.0
      %2290 = vmatprep.subr.mxu0 0.0
      %2291 = vmatpush1.msra.mxu0 0.0
      %2292 = vmatprep.subr.mxu0 0.0
      %2293 = vmatpush1.msra.mxu0 0.0
      %2294 = vmatprep.subr.mxu0 0.0
      %2295 = vmatpush1.msra.mxu0 0.0
      %2296 = vmatprep.subr.mxu0 0.0
      %2297 = vmatpush1.msra.mxu0 0.0
      %2298 = vmatprep.mubr.f32.mxu0 0.0
      %2299 = vmatmul.mubr.f32.gmra.mrb[0].mxu0 %v2187
      %v2300 = vpop.f32.mrb[0].mxu0
      %v2301 = vadd.f32 0.0, %v2300
      %v2302 = vpop.f32.mrb[0].mxu0
      %2303 = vmatprep.mubr.f32.mxu0 0.0
      %2304 = vmatmul.mubr.f32.gmra.mrb[0].mxu0 %v2190
      %v2305 = vpop.f32.mrb[0].mxu0
      %v2306 = vadd.f32 0.0, %v2305
      %v2307 = vpop.f32.mrb[0].mxu0
      %2308 = vmatprep.mubr.f32.mxu0 0.0
      %2309 = vmatmul.mubr.f32.gmra.mrb[0].mxu0 %v2193
      %v2310 = vpop.f32.mrb[0].mxu0
      %v2311 = vadd.f32 0.0, %v2310
      %v2312 = vpop.f32.mrb[0].mxu0
      %2313 = vmatprep.mubr.f32.mxu0 0.0
      %2314 = vmatmul.mubr.f32.gmra.mrb[0].mxu0 %v2196
      %v2315 = vpop.f32.mrb[0].mxu0
      %v2316 = vadd.f32 0.0, %v2315
      %v2317 = vpop.f32.mrb[0].mxu0
      %2318 = vmatprep.mubr.f32.mxu0 0.0
      %2319 = vmatmul.mubr.f32.gmra.mrb[0].mxu0 %v2199
      %v2320 = vpop.f32.mrb[0].mxu0
      %v2321 = vadd.f32 0.0, %v2320
      %v2322 = vpop.f32.mrb[0].mxu0
      %2323 = vmatprep.mubr.f32.mxu0 0.0
      %2324 = vmatmul.mubr.f32.gmra.mrb[0].mxu0 %v2202
      %v2325 = vpop.f32.mrb[0].mxu0
      %v2326 = vadd.f32 0.0, %v2325
      %v2327 = vpop.f32.mrb[0].mxu0
      %2328 = vmatprep.mubr.f32.mxu0 0.0
      %2329 = vmatmul.mubr.f32.gmra.mrb[0].mxu0 %v2205
      %v2330 = vpop.f32.mrb[0].mxu0
      %v2331 = vadd.f32 0.0, %v2330
      %v2332 = vpop.f32.mrb[0].mxu0
      %2333 = vmatprep.mubr.f32.mxu0 0.0
      %2334 = vmatmul.mubr.f32.gmra.mrb[0].mxu0 %v2208
      %v2335 = vpop.f32.mrb[0].mxu0
      %v2336 = vadd.f32 0.0, %v2335
      %v2337 = vpop.f32.mrb[0].mxu0
      %2338 = vmatprep.mubr.f32.mxu0 0.0
      %2339 = vmatmul.mubr.f32.gmra.mrb[0].mxu0 %v2211
      %v2340 = vpop.f32.mrb[0].mxu0
      %v2341 = vadd.f32 0.0, %v2340
      %v2342 = vpop.f32.mrb[0].mxu0
      %2343 = vmatprep.mubr.f32.mxu0 0.0
      %2344 = vmatmul.mubr.f32.gmra.mrb[0].mxu0 %v2214
      %v2345 = vpop.f32.mrb[0].mxu0
      %v2346 = vadd.f32 0.0, %v2345
      %v2347 = vpop.f32.mrb[0].mxu0
      %2348 = vmatprep.mubr.f32.mxu0 0.0
      %2349 = vmatmul.mubr.f32.gmra.mrb[0].mxu0 %v2217
      %v2350 = vpop.f32.mrb[0].mxu0
      %v2351 = vadd.f32 0.0, %v2350
      %v2352 = vpop.f32.mrb[0].mxu0
      %2353 = vmatprep.mubr.f32.mxu0 0.0
      %2354 = vmatmul.mubr.f32.gmra.mrb[0].mxu0 %v2220
      %v2355 = vpop.f32.mrb[0].mxu0
      %v2356 = vadd.f32 0.0, %v2355
      %v2357 = vpop.f32.mrb[0].mxu0
      %2358 = vmatprep.mubr.f32.mxu0 0.0
      %2359 = vmatmul.mubr.f32.gmra.mrb[0].mxu0 %v2223
      %v2360 = vpop.f32.mrb[0].mxu0
      %v2361 = vadd.f32 0.0, %v2360
      %v2362 = vpop.f32.mrb[0].mxu0
      %2363 = vmatprep.mubr.f32.mxu0 0.0
      %2364 = vmatmul.mubr.f32.gmra.mrb[0].mxu0 %v2226
      %v2365 = vpop.f32.mrb[0].mxu0
      %v2366 = vadd.f32 0.0, %v2365
      %v2367 = vpop.f32.mrb[0].mxu0
      %2368 = vmatprep.mubr.f32.mxu0 0.0
      %2369 = vmatmul.mubr.f32.gmra.mrb[0].mxu0 %v2229
      %v2370 = vpop.f32.mrb[0].mxu0
      %v2371 = vadd.f32 0.0, %v2370
      %v2372 = vpop.f32.mrb[0].mxu0
      %2373 = vmatprep.mubr.f32.mxu0 0.0
      %2374 = vmatmul.mubr.f32.gmra.mrb[0].mxu0 %v2232
      %v2375 = vpop.f32.mrb[0].mxu0
      %v2376 = vadd.f32 0.0, %v2375
      %v2377 = vpop.f32.mrb[0].mxu0
      %2378 = vdwg.mxu0
      %v2379 = vmul.f32 %v2301, %v2301
      %v2380 = vmul.f32 %v2306, %v2306
      %v2381 = vmul.f32 %v2311, %v2311
      %v2382 = vmul.f32 %v2316, %v2316
      %v2383 = vmul.f32 %v2321, %v2321
      %v2384 = vmul.f32 %v2326, %v2326
      %v2385 = vmul.f32 %v2331, %v2331
      %v2386 = vmul.f32 %v2336, %v2336
      %v2387 = vmul.f32 %v2341, %v2341
      %v2388 = vmul.f32 %v2346, %v2346
      %v2389 = vmul.f32 %v2351, %v2351
      %v2390 = vmul.f32 %v2356, %v2356
      %v2391 = vmul.f32 %v2361, %v2361
      %v2392 = vmul.f32 %v2366, %v2366
      %v2393 = vmul.f32 %v2371, %v2371
      %v2394 = vmul.f32 %v2376, %v2376
      %v2396 = vsel %vm581, %v2379, 0
      %v2399 = vsel %vm581, %v2380, 0
      %v2402 = vsel %vm581, %v2381, 0
      %v2405 = vsel %vm581, %v2382, 0
      %v2408 = vsel %vm581, %v2383, 0
      %v2411 = vsel %vm581, %v2384, 0
      %v2414 = vsel %vm581, %v2385, 0
      %v2417 = vsel %vm581, %v2386, 0
      %v2420 = vsel %vm581, %v2387, 0
      %v2423 = vsel %vm581, %v2388, 0
      %v2426 = vsel %vm581, %v2389, 0
      %v2429 = vsel %vm581, %v2390, 0
      %v2432 = vsel %vm581, %v2391, 0
      %v2435 = vsel %vm581, %v2392, 0
      %v2438 = vsel %vm581, %v2393, 0
      %v2441 = vsel %vm581, %v2394, 0
      %2443 = vmatprep.subr.mxu0 0.0
      %2444 = vmatpush1.msra.mxu0 %v791
      %2445 = vmatprep.subr.mxu0 0.0
      %2446 = vmatpush1.msra.mxu0 %v792
      %2447 = vmatprep.subr.mxu0 0.0
      %2448 = vmatpush1.msra.mxu0 %v793
      %2449 = vmatprep.subr.mxu0 0.0
      %2450 = vmatpush1.msra.mxu0 %v794
      %2451 = vmatprep.subr.mxu0 0.0
      %2452 = vmatpush1.msra.mxu0 %v795
      %2453 = vmatprep.subr.mxu0 0.0
      %2454 = vmatpush1.msra.mxu0 %v796
      %2455 = vmatprep.subr.mxu0 0.0
      %2456 = vmatpush1.msra.mxu0 %v797
      %2457 = vmatprep.subr.mxu0 0.0
      %2458 = vmatpush1.msra.mxu0 %v798
      %2459 = vmatprep.subr.mxu0 0.0
      %2460 = vmatpush1.msra.mxu0 %v799
      %2461 = vmatprep.subr.mxu0 0.0
      %2462 = vmatpush1.msra.mxu0 %v800
      %2463 = vmatprep.subr.mxu0 0.0
      %2464 = vmatpush1.msra.mxu0 %v801
      %2465 = vmatprep.subr.mxu0 0.0
      %2466 = vmatpush1.msra.mxu0 %v802
      %2467 = vmatprep.subr.mxu0 0.0
      %2468 = vmatpush1.msra.mxu0 %v803
      %2469 = vmatprep.subr.mxu0 0.0
      %2470 = vmatpush1.msra.mxu0 %v804
      %2471 = vmatprep.subr.mxu0 0.0
      %2472 = vmatpush1.msra.mxu0 %v805
      %2473 = vmatprep.subr.mxu0 0.0
      %2474 = vmatpush1.msra.mxu0 0.0
      %2475 = vmatprep.subr.mxu0 0.0
      %2476 = vmatpush1.msra.mxu0 0.0
      %2477 = vmatprep.subr.mxu0 0.0
      %2478 = vmatpush1.msra.mxu0 0.0
      %2479 = vmatprep.subr.mxu0 0.0
      %2480 = vmatpush1.msra.mxu0 0.0
      %2481 = vmatprep.subr.mxu0 0.0
      %2482 = vmatpush1.msra.mxu0 0.0
      %2483 = vmatprep.subr.mxu0 0.0
      %2484 = vmatpush1.msra.mxu0 0.0
      %2485 = vmatprep.subr.mxu0 0.0
      %2486 = vmatpush1.msra.mxu0 0.0
      %2487 = vmatprep.subr.mxu0 0.0
      %2488 = vmatpush1.msra.mxu0 0.0
      %2489 = vmatprep.subr.mxu0 0.0
      %2490 = vmatpush1.msra.mxu0 0.0
      %2491 = vmatprep.subr.mxu0 0.0
      %2492 = vmatpush1.msra.mxu0 0.0
      %2493 = vmatprep.subr.mxu0 0.0
      %2494 = vmatpush1.msra.mxu0 0.0
      %2495 = vmatprep.subr.mxu0 0.0
      %2496 = vmatpush1.msra.mxu0 0.0
      %2497 = vmatprep.subr.mxu0 0.0
      %2498 = vmatpush1.msra.mxu0 0.0
      %2499 = vmatprep.subr.mxu0 0.0
      %2500 = vmatpush1.msra.mxu0 0.0
      %2501 = vmatprep.subr.mxu0 0.0
      %2502 = vmatpush1.msra.mxu0 0.0
      %2503 = vmatprep.subr.mxu0 0.0
      %2504 = vmatpush1.msra.mxu0 0.0
      %2505 = vmatprep.subr.mxu0 0.0
      %2506 = vmatpush1.msra.mxu0 0.0
      %2507 = vmatprep.mubr.f32.mxu0 0.0
      %2508 = vmatmul.mubr.f32.gmra.mrb[0].mxu0 %v2396
      %v2509 = vpop.f32.mrb[0].mxu0
      %v2510 = vadd.f32 1e-08, %v2509
      %v2511 = vpop.f32.mrb[0].mxu0
      %2512 = vmatprep.mubr.f32.mxu0 0.0
      %2513 = vmatmul.mubr.f32.gmra.mrb[0].mxu0 %v2399
      %v2514 = vpop.f32.mrb[0].mxu0
      %v2515 = vadd.f32 1e-08, %v2514
      %v2516 = vpop.f32.mrb[0].mxu0
      %2517 = vmatprep.mubr.f32.mxu0 0.0
      %2518 = vmatmul.mubr.f32.gmra.mrb[0].mxu0 %v2402
      %v2519 = vpop.f32.mrb[0].mxu0
      %v2520 = vadd.f32 1e-08, %v2519
      %v2521 = vpop.f32.mrb[0].mxu0
      %2522 = vmatprep.mubr.f32.mxu0 0.0
      %2523 = vmatmul.mubr.f32.gmra.mrb[0].mxu0 %v2405
      %v2524 = vpop.f32.mrb[0].mxu0
      %v2525 = vadd.f32 1e-08, %v2524
      %v2526 = vpop.f32.mrb[0].mxu0
      %2527 = vmatprep.mubr.f32.mxu0 0.0
      %2528 = vmatmul.mubr.f32.gmra.mrb[0].mxu0 %v2408
      %v2529 = vpop.f32.mrb[0].mxu0
      %v2530 = vadd.f32 1e-08, %v2529
      %v2531 = vpop.f32.mrb[0].mxu0
      %2532 = vmatprep.mubr.f32.mxu0 0.0
      %2533 = vmatmul.mubr.f32.gmra.mrb[0].mxu0 %v2411
      %v2534 = vpop.f32.mrb[0].mxu0
      %v2535 = vadd.f32 1e-08, %v2534
      %v2536 = vpop.f32.mrb[0].mxu0
      %2537 = vmatprep.mubr.f32.mxu0 0.0
      %2538 = vmatmul.mubr.f32.gmra.mrb[0].mxu0 %v2414
      %v2539 = vpop.f32.mrb[0].mxu0
      %v2540 = vadd.f32 1e-08, %v2539
      %v2541 = vpop.f32.mrb[0].mxu0
      %2542 = vmatprep.mubr.f32.mxu0 0.0
      %2543 = vmatmul.mubr.f32.gmra.mrb[0].mxu0 %v2417
      %v2544 = vpop.f32.mrb[0].mxu0
      %v2545 = vadd.f32 1e-08, %v2544
      %v2546 = vpop.f32.mrb[0].mxu0
      %2547 = vmatprep.mubr.f32.mxu0 0.0
      %2548 = vmatmul.mubr.f32.gmra.mrb[0].mxu0 %v2420
      %v2549 = vpop.f32.mrb[0].mxu0
      %v2550 = vadd.f32 1e-08, %v2549
      %v2551 = vpop.f32.mrb[0].mxu0
      %2552 = vmatprep.mubr.f32.mxu0 0.0
      %2553 = vmatmul.mubr.f32.gmra.mrb[0].mxu0 %v2423
      %v2554 = vpop.f32.mrb[0].mxu0
      %v2555 = vadd.f32 1e-08, %v2554
      %v2556 = vpop.f32.mrb[0].mxu0
      %2557 = vmatprep.mubr.f32.mxu0 0.0
      %2558 = vmatmul.mubr.f32.gmra.mrb[0].mxu0 %v2426
      %v2559 = vpop.f32.mrb[0].mxu0
      %v2560 = vadd.f32 1e-08, %v2559
      %v2561 = vpop.f32.mrb[0].mxu0
      %2562 = vmatprep.mubr.f32.mxu0 0.0
      %2563 = vmatmul.mubr.f32.gmra.mrb[0].mxu0 %v2429
      %v2564 = vpop.f32.mrb[0].mxu0
      %v2565 = vadd.f32 1e-08, %v2564
      %v2566 = vpop.f32.mrb[0].mxu0
      %2567 = vmatprep.mubr.f32.mxu0 0.0
      %2568 = vmatmul.mubr.f32.gmra.mrb[0].mxu0 %v2432
      %v2569 = vpop.f32.mrb[0].mxu0
      %v2570 = vadd.f32 1e-08, %v2569
      %v2571 = vpop.f32.mrb[0].mxu0
      %2572 = vmatprep.mubr.f32.mxu0 0.0
      %2573 = vmatmul.mubr.f32.gmra.mrb[0].mxu0 %v2435
      %v2574 = vpop.f32.mrb[0].mxu0
      %v2575 = vadd.f32 1e-08, %v2574
      %v2576 = vpop.f32.mrb[0].mxu0
      %2577 = vmatprep.mubr.f32.mxu0 0.0
      %2578 = vmatmul.mubr.f32.gmra.mrb[0].mxu0 %v2438
      %v2579 = vpop.f32.mrb[0].mxu0
      %v2580 = vadd.f32 1e-08, %v2579
      %v2581 = vpop.f32.mrb[0].mxu0
      %2582 = vmatprep.mubr.f32.mxu0 0.0
      %2583 = vmatmul.mubr.f32.gmra.mrb[0].mxu0 %v2441
      %v2584 = vpop.f32.mrb[0].mxu0
      %v2585 = vadd.f32 1e-08, %v2584
      %v2586 = vpop.f32.mrb[0].mxu0
      %2587 = vdwg.mxu0
      %v2588 = vrsqrt.pop %v2510
      %v2589 = vmul.f32 %v2510, %v2588
      %vm2590 = vcmp.eq.f32.partialorder %v2510, inf
      %v2591 = vsel %vm2590, %v2510, %v2589
      %vm2592 = vcmp.eq.f32.partialorder %v2510, 0.0
      %v2593 = vand.u32 %v2510, 2147483648
      %v2594 = vsel %vm2592, %v2593, %v2591
      %v2595 = vrsqrt.pop %v2515
      %v2596 = vmul.f32 %v2515, %v2595
      %vm2597 = vcmp.eq.f32.partialorder %v2515, inf
      %v2598 = vsel %vm2597, %v2515, %v2596
      %vm2599 = vcmp.eq.f32.partialorder %v2515, 0.0
      %v2600 = vand.u32 %v2515, 2147483648
      %v2601 = vsel %vm2599, %v2600, %v2598
      %v2602 = vrsqrt.pop %v2520
      %v2603 = vmul.f32 %v2520, %v2602
      %vm2604 = vcmp.eq.f32.partialorder %v2520, inf
      %v2605 = vsel %vm2604, %v2520, %v2603
      %vm2606 = vcmp.eq.f32.partialorder %v2520, 0.0
      %v2607 = vand.u32 %v2520, 2147483648
      %v2608 = vsel %vm2606, %v2607, %v2605
      %v2609 = vrsqrt.pop %v2525
      %v2610 = vmul.f32 %v2525, %v2609
      %vm2611 = vcmp.eq.f32.partialorder %v2525, inf
      %v2612 = vsel %vm2611, %v2525, %v2610
      %vm2613 = vcmp.eq.f32.partialorder %v2525, 0.0
      %v2614 = vand.u32 %v2525, 2147483648
      %v2615 = vsel %vm2613, %v2614, %v2612
      %v2616 = vrsqrt.pop %v2530
      %v2617 = vmul.f32 %v2530, %v2616
      %vm2618 = vcmp.eq.f32.partialorder %v2530, inf
      %v2619 = vsel %vm2618, %v2530, %v2617
      %vm2620 = vcmp.eq.f32.partialorder %v2530, 0.0
      %v2621 = vand.u32 %v2530, 2147483648
      %v2622 = vsel %vm2620, %v2621, %v2619
      %v2623 = vrsqrt.pop %v2535
      %v2624 = vmul.f32 %v2535, %v2623
      %vm2625 = vcmp.eq.f32.partialorder %v2535, inf
      %v2626 = vsel %vm2625, %v2535, %v2624
      %vm2627 = vcmp.eq.f32.partialorder %v2535, 0.0
      %v2628 = vand.u32 %v2535, 2147483648
      %v2629 = vsel %vm2627, %v2628, %v2626
      %v2630 = vrsqrt.pop %v2540
      %v2631 = vmul.f32 %v2540, %v2630
      %vm2632 = vcmp.eq.f32.partialorder %v2540, inf
      %v2633 = vsel %vm2632, %v2540, %v2631
      %vm2634 = vcmp.eq.f32.partialorder %v2540, 0.0
      %v2635 = vand.u32 %v2540, 2147483648
      %v2636 = vsel %vm2634, %v2635, %v2633
      %v2637 = vrsqrt.pop %v2545
      %v2638 = vmul.f32 %v2545, %v2637
      %vm2639 = vcmp.eq.f32.partialorder %v2545, inf
      %v2640 = vsel %vm2639, %v2545, %v2638
      %vm2641 = vcmp.eq.f32.partialorder %v2545, 0.0
      %v2642 = vand.u32 %v2545, 2147483648
      %v2643 = vsel %vm2641, %v2642, %v2640
      %v2644 = vrsqrt.pop %v2550
      %v2645 = vmul.f32 %v2550, %v2644
      %vm2646 = vcmp.eq.f32.partialorder %v2550, inf
      %v2647 = vsel %vm2646, %v2550, %v2645
      %vm2648 = vcmp.eq.f32.partialorder %v2550, 0.0
      %v2649 = vand.u32 %v2550, 2147483648
      %v2650 = vsel %vm2648, %v2649, %v2647
      %v2651 = vrsqrt.pop %v2555
      %v2652 = vmul.f32 %v2555, %v2651
      %vm2653 = vcmp.eq.f32.partialorder %v2555, inf
      %v2654 = vsel %vm2653, %v2555, %v2652
      %vm2655 = vcmp.eq.f32.partialorder %v2555, 0.0
      %v2656 = vand.u32 %v2555, 2147483648
      %v2657 = vsel %vm2655, %v2656, %v2654
      %v2658 = vrsqrt.pop %v2560
      %v2659 = vmul.f32 %v2560, %v2658
      %vm2660 = vcmp.eq.f32.partialorder %v2560, inf
      %v2661 = vsel %vm2660, %v2560, %v2659
      %vm2662 = vcmp.eq.f32.partialorder %v2560, 0.0
      %v2663 = vand.u32 %v2560, 2147483648
      %v2664 = vsel %vm2662, %v2663, %v2661
      %v2665 = vrsqrt.pop %v2565
      %v2666 = vmul.f32 %v2565, %v2665
      %vm2667 = vcmp.eq.f32.partialorder %v2565, inf
      %v2668 = vsel %vm2667, %v2565, %v2666
      %vm2669 = vcmp.eq.f32.partialorder %v2565, 0.0
      %v2670 = vand.u32 %v2565, 2147483648
      %v2671 = vsel %vm2669, %v2670, %v2668
      %v2672 = vrsqrt.pop %v2570
      %v2673 = vmul.f32 %v2570, %v2672
      %vm2674 = vcmp.eq.f32.partialorder %v2570, inf
      %v2675 = vsel %vm2674, %v2570, %v2673
      %vm2676 = vcmp.eq.f32.partialorder %v2570, 0.0
      %v2677 = vand.u32 %v2570, 2147483648
      %v2678 = vsel %vm2676, %v2677, %v2675
      %v2679 = vrsqrt.pop %v2575
      %v2680 = vmul.f32 %v2575, %v2679
      %vm2681 = vcmp.eq.f32.partialorder %v2575, inf
      %v2682 = vsel %vm2681, %v2575, %v2680
      %vm2683 = vcmp.eq.f32.partialorder %v2575, 0.0
      %v2684 = vand.u32 %v2575, 2147483648
      %v2685 = vsel %vm2683, %v2684, %v2682
      %v2686 = vrsqrt.pop %v2580
      %v2687 = vmul.f32 %v2580, %v2686
      %vm2688 = vcmp.eq.f32.partialorder %v2580, inf
      %v2689 = vsel %vm2688, %v2580, %v2687
      %vm2690 = vcmp.eq.f32.partialorder %v2580, 0.0
      %v2691 = vand.u32 %v2580, 2147483648
      %v2692 = vsel %vm2690, %v2691, %v2689
      %v2693 = vrsqrt.pop %v2585
      %v2694 = vmul.f32 %v2585, %v2693
      %vm2695 = vcmp.eq.f32.partialorder %v2585, inf
      %v2696 = vsel %vm2695, %v2585, %v2694
      %vm2697 = vcmp.eq.f32.partialorder %v2585, 0.0
      %v2698 = vand.u32 %v2585, 2147483648
      %v2699 = vsel %vm2697, %v2698, %v2696
      %s2700 = scalar_lea.vmem %s5, 32
      %v2701 = vld [vmem:[%s2700] sm:$0xff]
      %v2702 = vld [vmem:[%s2700 + $0x8] sm:$0xff]
      %v2703 = vld [vmem:[%s2700 + $0x10] sm:$0xff]
      %v2704 = vld [vmem:[%s2700 + $0x18] sm:$0xff]
      %s2705 = scalar_lea.vmem %s6, 24
      %v2706 = vld [vmem:[%s2705] sm:$0xff]
      %v2707 = vld [vmem:[%s2705 + $0x8] sm:$0xff]
      %v2708 = vld [vmem:[%s2705 + $0x10] sm:$0xff]
      %v2710 = vsel %vm1118, %v2594, 0
      %v2713 = vsel %vm1118, %v2601, 0
      %v2716 = vsel %vm1118, %v2608, 0
      %v2719 = vsel %vm1118, %v2615, 0
      %v2722 = vsel %vm1118, %v2622, 0
      %v2725 = vsel %vm1118, %v2629, 0
      %v2728 = vsel %vm1118, %v2636, 0
      %v2731 = vsel %vm1118, %v2643, 0
      %v2734 = vsel %vm1118, %v2650, 0
      %v2737 = vsel %vm1118, %v2657, 0
      %v2740 = vsel %vm1118, %v2664, 0
      %v2743 = vsel %vm1118, %v2671, 0
      %v2746 = vsel %vm1118, %v2678, 0
      %v2749 = vsel %vm1118, %v2685, 0
      %v2752 = vsel %vm1118, %v2692, 0
      %v2755 = vsel %vm1118, %v2699, 0
      %2757 = vmatprep.subr.mxu0 0.0
      %2758 = vmatpush1.msra.mxu0 %v2706
      %2759 = vmatprep.subr.mxu0 0.0
      %2760 = vmatpush1.msra.mxu0 %v2707
      %2761 = vmatprep.subr.mxu0 0.0
      %2762 = vmatpush1.msra.mxu0 %v2708
      %2763 = vmatprep.subr.mxu0 0.0
      %2764 = vmatpush1.msra.mxu0 0.0
      %2765 = vmatprep.subr.mxu0 0.0
      %2766 = vmatpush1.msra.mxu0 0.0
      %2767 = vmatprep.subr.mxu0 0.0
      %2768 = vmatpush1.msra.mxu0 0.0
      %2769 = vmatprep.subr.mxu0 0.0
      %2770 = vmatpush1.msra.mxu0 0.0
      %2771 = vmatprep.subr.mxu0 0.0
      %2772 = vmatpush1.msra.mxu0 0.0
      %2773 = vmatprep.subr.mxu0 0.0
      %2774 = vmatpush1.msra.mxu0 0.0
      %2775 = vmatprep.subr.mxu0 0.0
      %2776 = vmatpush1.msra.mxu0 0.0
      %2777 = vmatprep.subr.mxu0 0.0
      %2778 = vmatpush1.msra.mxu0 0.0
      %2779 = vmatprep.subr.mxu0 0.0
      %2780 = vmatpush1.msra.mxu0 0.0
      %2781 = vmatprep.subr.mxu0 0.0
      %2782 = vmatpush1.msra.mxu0 0.0
      %2783 = vmatprep.subr.mxu0 0.0
      %2784 = vmatpush1.msra.mxu0 0.0
      %2785 = vmatprep.subr.mxu0 0.0
      %2786 = vmatpush1.msra.mxu0 0.0
      %2787 = vmatprep.subr.mxu0 0.0
      %2788 = vmatpush1.msra.mxu0 0.0
      %2789 = vmatprep.subr.mxu0 0.0
      %2790 = vmatpush1.msra.mxu0 0.0
      %2791 = vmatprep.subr.mxu0 0.0
      %2792 = vmatpush1.msra.mxu0 0.0
      %2793 = vmatprep.subr.mxu0 0.0
      %2794 = vmatpush1.msra.mxu0 0.0
      %2795 = vmatprep.subr.mxu0 0.0
      %2796 = vmatpush1.msra.mxu0 0.0
      %2797 = vmatprep.subr.mxu0 0.0
      %2798 = vmatpush1.msra.mxu0 0.0
      %2799 = vmatprep.subr.mxu0 0.0
      %2800 = vmatpush1.msra.mxu0 0.0
      %2801 = vmatprep.subr.mxu0 0.0
      %2802 = vmatpush1.msra.mxu0 0.0
      %2803 = vmatprep.subr.mxu0 0.0
      %2804 = vmatpush1.msra.mxu0 0.0
      %2805 = vmatprep.subr.mxu0 0.0
      %2806 = vmatpush1.msra.mxu0 0.0
      %2807 = vmatprep.subr.mxu0 0.0
      %2808 = vmatpush1.msra.mxu0 0.0
      %2809 = vmatprep.subr.mxu0 0.0
      %2810 = vmatpush1.msra.mxu0 0.0
      %2811 = vmatprep.subr.mxu0 0.0
      %2812 = vmatpush1.msra.mxu0 0.0
      %2813 = vmatprep.subr.mxu0 0.0
      %2814 = vmatpush1.msra.mxu0 0.0
      %2815 = vmatprep.subr.mxu0 0.0
      %2816 = vmatpush1.msra.mxu0 0.0
      %2817 = vmatprep.subr.mxu0 0.0
      %2818 = vmatpush1.msra.mxu0 0.0
      %2819 = vmatprep.subr.mxu0 0.0
      %2820 = vmatpush1.msra.mxu0 0.0
      %2821 = vmatprep.mubr.f32.mxu0 0.0
      %2822 = vmatmul.mubr.f32.gmra.mrb[0].mxu0 %v2710
      %v2823 = vpop.f32.mrb[0].mxu0
      %v2824 = vadd.f32 0.0, %v2823
      %v2825 = vpop.f32.mrb[0].mxu0
      %2826 = vmatprep.mubr.f32.mxu0 0.0
      %2827 = vmatmul.mubr.f32.gmra.mrb[0].mxu0 %v2713
      %v2828 = vpop.f32.mrb[0].mxu0
      %v2829 = vadd.f32 0.0, %v2828
      %v2830 = vpop.f32.mrb[0].mxu0
      %2831 = vmatprep.mubr.f32.mxu0 0.0
      %2832 = vmatmul.mubr.f32.gmra.mrb[0].mxu0 %v2716
      %v2833 = vpop.f32.mrb[0].mxu0
      %v2834 = vadd.f32 0.0, %v2833
      %v2835 = vpop.f32.mrb[0].mxu0
      %2836 = vmatprep.mubr.f32.mxu0 0.0
      %2837 = vmatmul.mubr.f32.gmra.mrb[0].mxu0 %v2719
      %v2838 = vpop.f32.mrb[0].mxu0
      %v2839 = vadd.f32 0.0, %v2838
      %v2840 = vpop.f32.mrb[0].mxu0
      %2841 = vmatprep.mubr.f32.mxu0 0.0
      %2842 = vmatmul.mubr.f32.gmra.mrb[0].mxu0 %v2722
      %v2843 = vpop.f32.mrb[0].mxu0
      %v2844 = vadd.f32 0.0, %v2843
      %v2845 = vpop.f32.mrb[0].mxu0
      %2846 = vmatprep.mubr.f32.mxu0 0.0
      %2847 = vmatmul.mubr.f32.gmra.mrb[0].mxu0 %v2725
      %v2848 = vpop.f32.mrb[0].mxu0
      %v2849 = vadd.f32 0.0, %v2848
      %v2850 = vpop.f32.mrb[0].mxu0
      %2851 = vmatprep.mubr.f32.mxu0 0.0
      %2852 = vmatmul.mubr.f32.gmra.mrb[0].mxu0 %v2728
      %v2853 = vpop.f32.mrb[0].mxu0
      %v2854 = vadd.f32 0.0, %v2853
      %v2855 = vpop.f32.mrb[0].mxu0
      %2856 = vmatprep.mubr.f32.mxu0 0.0
      %2857 = vmatmul.mubr.f32.gmra.mrb[0].mxu0 %v2731
      %v2858 = vpop.f32.mrb[0].mxu0
      %v2859 = vadd.f32 0.0, %v2858
      %v2860 = vpop.f32.mrb[0].mxu0
      %2861 = vmatprep.mubr.f32.mxu0 0.0
      %2862 = vmatmul.mubr.f32.gmra.mrb[0].mxu0 %v2734
      %v2863 = vpop.f32.mrb[0].mxu0
      %v2864 = vadd.f32 0.0, %v2863
      %v2865 = vpop.f32.mrb[0].mxu0
      %2866 = vmatprep.mubr.f32.mxu0 0.0
      %2867 = vmatmul.mubr.f32.gmra.mrb[0].mxu0 %v2737
      %v2868 = vpop.f32.mrb[0].mxu0
      %v2869 = vadd.f32 0.0, %v2868
      %v2870 = vpop.f32.mrb[0].mxu0
      %2871 = vmatprep.mubr.f32.mxu0 0.0
      %2872 = vmatmul.mubr.f32.gmra.mrb[0].mxu0 %v2740
      %v2873 = vpop.f32.mrb[0].mxu0
      %v2874 = vadd.f32 0.0, %v2873
      %v2875 = vpop.f32.mrb[0].mxu0
      %2876 = vmatprep.mubr.f32.mxu0 0.0
      %2877 = vmatmul.mubr.f32.gmra.mrb[0].mxu0 %v2743
      %v2878 = vpop.f32.mrb[0].mxu0
      %v2879 = vadd.f32 0.0, %v2878
      %v2880 = vpop.f32.mrb[0].mxu0
      %2881 = vmatprep.mubr.f32.mxu0 0.0
      %2882 = vmatmul.mubr.f32.gmra.mrb[0].mxu0 %v2746
      %v2883 = vpop.f32.mrb[0].mxu0
      %v2884 = vadd.f32 0.0, %v2883
      %v2885 = vpop.f32.mrb[0].mxu0
      %2886 = vmatprep.mubr.f32.mxu0 0.0
      %2887 = vmatmul.mubr.f32.gmra.mrb[0].mxu0 %v2749
      %v2888 = vpop.f32.mrb[0].mxu0
      %v2889 = vadd.f32 0.0, %v2888
      %v2890 = vpop.f32.mrb[0].mxu0
      %2891 = vmatprep.mubr.f32.mxu0 0.0
      %2892 = vmatmul.mubr.f32.gmra.mrb[0].mxu0 %v2752
      %v2893 = vpop.f32.mrb[0].mxu0
      %v2894 = vadd.f32 0.0, %v2893
      %v2895 = vpop.f32.mrb[0].mxu0
      %2896 = vmatprep.mubr.f32.mxu0 0.0
      %2897 = vmatmul.mubr.f32.gmra.mrb[0].mxu0 %v2755
      %v2898 = vpop.f32.mrb[0].mxu0
      %v2899 = vadd.f32 0.0, %v2898
      %v2900 = vpop.f32.mrb[0].mxu0
      %2901 = vdwg.mxu0
      %v2903 = vsel %vm1312, %v1866, 0
      %v2906 = vsel %vm1312, %v1867, 0
      %v2909 = vsel %vm1312, %v1868, 0
      %v2912 = vsel %vm1312, %v1869, 0
      %v2915 = vsel %vm1312, %v1870, 0
      %v2918 = vsel %vm1312, %v1871, 0
      %v2921 = vsel %vm1312, %v1872, 0
      %v2924 = vsel %vm1312, %v1873, 0
      %v2927 = vsel %vm1312, %v1874, 0
      %v2930 = vsel %vm1312, %v1875, 0
      %v2933 = vsel %vm1312, %v1876, 0
      %v2936 = vsel %vm1312, %v1877, 0
      %v2939 = vsel %vm1312, %v1878, 0
      %v2942 = vsel %vm1312, %v1879, 0
      %v2945 = vsel %vm1312, %v1880, 0
      %v2948 = vsel %vm1312, %v1881, 0
      %2950 = vmatprep.subr.mxu0 0.0
      %2951 = vmatpush1.msra.mxu0 %v2701
      %2952 = vmatprep.subr.mxu0 0.0
      %2953 = vmatpush1.msra.mxu0 %v2702
      %2954 = vmatprep.subr.mxu0 0.0
      %2955 = vmatpush1.msra.mxu0 %v2703
      %2956 = vmatprep.subr.mxu0 0.0
      %2957 = vmatpush1.msra.mxu0 %v2704
      %2958 = vmatprep.subr.mxu0 0.0
      %2959 = vmatpush1.msra.mxu0 0.0
      %2960 = vmatprep.subr.mxu0 0.0
      %2961 = vmatpush1.msra.mxu0 0.0
      %2962 = vmatprep.subr.mxu0 0.0
      %2963 = vmatpush1.msra.mxu0 0.0
      %2964 = vmatprep.subr.mxu0 0.0
      %2965 = vmatpush1.msra.mxu0 0.0
      %2966 = vmatprep.subr.mxu0 0.0
      %2967 = vmatpush1.msra.mxu0 0.0
      %2968 = vmatprep.subr.mxu0 0.0
      %2969 = vmatpush1.msra.mxu0 0.0
      %2970 = vmatprep.subr.mxu0 0.0
      %2971 = vmatpush1.msra.mxu0 0.0
      %2972 = vmatprep.subr.mxu0 0.0
      %2973 = vmatpush1.msra.mxu0 0.0
      %2974 = vmatprep.subr.mxu0 0.0
      %2975 = vmatpush1.msra.mxu0 0.0
      %2976 = vmatprep.subr.mxu0 0.0
      %2977 = vmatpush1.msra.mxu0 0.0
      %2978 = vmatprep.subr.mxu0 0.0
      %2979 = vmatpush1.msra.mxu0 0.0
      %2980 = vmatprep.subr.mxu0 0.0
      %2981 = vmatpush1.msra.mxu0 0.0
      %2982 = vmatprep.subr.mxu0 0.0
      %2983 = vmatpush1.msra.mxu0 0.0
      %2984 = vmatprep.subr.mxu0 0.0
      %2985 = vmatpush1.msra.mxu0 0.0
      %2986 = vmatprep.subr.mxu0 0.0
      %2987 = vmatpush1.msra.mxu0 0.0
      %2988 = vmatprep.subr.mxu0 0.0
      %2989 = vmatpush1.msra.mxu0 0.0
      %2990 = vmatprep.subr.mxu0 0.0
      %2991 = vmatpush1.msra.mxu0 0.0
      %2992 = vmatprep.subr.mxu0 0.0
      %2993 = vmatpush1.msra.mxu0 0.0
      %2994 = vmatprep.subr.mxu0 0.0
      %2995 = vmatpush1.msra.mxu0 0.0
      %2996 = vmatprep.subr.mxu0 0.0
      %2997 = vmatpush1.msra.mxu0 0.0
      %2998 = vmatprep.subr.mxu0 0.0
      %2999 = vmatpush1.msra.mxu0 0.0
      %3000 = vmatprep.subr.mxu0 0.0
      %3001 = vmatpush1.msra.mxu0 0.0
      %3002 = vmatprep.subr.mxu0 0.0
      %3003 = vmatpush1.msra.mxu0 0.0
      %3004 = vmatprep.subr.mxu0 0.0
      %3005 = vmatpush1.msra.mxu0 0.0
      %3006 = vmatprep.subr.mxu0 0.0
      %3007 = vmatpush1.msra.mxu0 0.0
      %3008 = vmatprep.subr.mxu0 0.0
      %3009 = vmatpush1.msra.mxu0 0.0
      %3010 = vmatprep.subr.mxu0 0.0
      %3011 = vmatpush1.msra.mxu0 0.0
      %3012 = vmatprep.subr.mxu0 0.0
      %3013 = vmatpush1.msra.mxu0 0.0
      %3014 = vmatprep.mubr.f32.mxu0 0.0
      %3015 = vmatmul.mubr.f32.gmra.mrb[0].mxu0 %v2903
      %v3016 = vpop.f32.mrb[0].mxu0
      %v3017 = vadd.f32 %v2824, %v3016
      %v3018 = vpop.f32.mrb[0].mxu0
      %3019 = vmatprep.mubr.f32.mxu0 0.0
      %3020 = vmatmul.mubr.f32.gmra.mrb[0].mxu0 %v2906
      %v3021 = vpop.f32.mrb[0].mxu0
      %v3022 = vadd.f32 %v2829, %v3021
      %v3023 = vpop.f32.mrb[0].mxu0
      %3024 = vmatprep.mubr.f32.mxu0 0.0
      %3025 = vmatmul.mubr.f32.gmra.mrb[0].mxu0 %v2909
      %v3026 = vpop.f32.mrb[0].mxu0
      %v3027 = vadd.f32 %v2834, %v3026
      %v3028 = vpop.f32.mrb[0].mxu0
      %3029 = vmatprep.mubr.f32.mxu0 0.0
      %3030 = vmatmul.mubr.f32.gmra.mrb[0].mxu0 %v2912
      %v3031 = vpop.f32.mrb[0].mxu0
      %v3032 = vadd.f32 %v2839, %v3031
      %v3033 = vpop.f32.mrb[0].mxu0
      %3034 = vmatprep.mubr.f32.mxu0 0.0
      %3035 = vmatmul.mubr.f32.gmra.mrb[0].mxu0 %v2915
      %v3036 = vpop.f32.mrb[0].mxu0
      %v3037 = vadd.f32 %v2844, %v3036
      %v3038 = vpop.f32.mrb[0].mxu0
      %3039 = vmatprep.mubr.f32.mxu0 0.0
      %3040 = vmatmul.mubr.f32.gmra.mrb[0].mxu0 %v2918
      %v3041 = vpop.f32.mrb[0].mxu0
      %v3042 = vadd.f32 %v2849, %v3041
      %v3043 = vpop.f32.mrb[0].mxu0
      %3044 = vmatprep.mubr.f32.mxu0 0.0
      %3045 = vmatmul.mubr.f32.gmra.mrb[0].mxu0 %v2921
      %v3046 = vpop.f32.mrb[0].mxu0
      %v3047 = vadd.f32 %v2854, %v3046
      %v3048 = vpop.f32.mrb[0].mxu0
      %3049 = vmatprep.mubr.f32.mxu0 0.0
      %3050 = vmatmul.mubr.f32.gmra.mrb[0].mxu0 %v2924
      %v3051 = vpop.f32.mrb[0].mxu0
      %v3052 = vadd.f32 %v2859, %v3051
      %v3053 = vpop.f32.mrb[0].mxu0
      %3054 = vmatprep.mubr.f32.mxu0 0.0
      %3055 = vmatmul.mubr.f32.gmra.mrb[0].mxu0 %v2927
      %v3056 = vpop.f32.mrb[0].mxu0
      %v3057 = vadd.f32 %v2864, %v3056
      %v3058 = vpop.f32.mrb[0].mxu0
      %3059 = vmatprep.mubr.f32.mxu0 0.0
      %3060 = vmatmul.mubr.f32.gmra.mrb[0].mxu0 %v2930
      %v3061 = vpop.f32.mrb[0].mxu0
      %v3062 = vadd.f32 %v2869, %v3061
      %v3063 = vpop.f32.mrb[0].mxu0
      %3064 = vmatprep.mubr.f32.mxu0 0.0
      %3065 = vmatmul.mubr.f32.gmra.mrb[0].mxu0 %v2933
      %v3066 = vpop.f32.mrb[0].mxu0
      %v3067 = vadd.f32 %v2874, %v3066
      %v3068 = vpop.f32.mrb[0].mxu0
      %3069 = vmatprep.mubr.f32.mxu0 0.0
      %3070 = vmatmul.mubr.f32.gmra.mrb[0].mxu0 %v2936
      %v3071 = vpop.f32.mrb[0].mxu0
      %v3072 = vadd.f32 %v2879, %v3071
      %v3073 = vpop.f32.mrb[0].mxu0
      %3074 = vmatprep.mubr.f32.mxu0 0.0
      %3075 = vmatmul.mubr.f32.gmra.mrb[0].mxu0 %v2939
      %v3076 = vpop.f32.mrb[0].mxu0
      %v3077 = vadd.f32 %v2884, %v3076
      %v3078 = vpop.f32.mrb[0].mxu0
      %3079 = vmatprep.mubr.f32.mxu0 0.0
      %3080 = vmatmul.mubr.f32.gmra.mrb[0].mxu0 %v2942
      %v3081 = vpop.f32.mrb[0].mxu0
      %v3082 = vadd.f32 %v2889, %v3081
      %v3083 = vpop.f32.mrb[0].mxu0
      %3084 = vmatprep.mubr.f32.mxu0 0.0
      %3085 = vmatmul.mubr.f32.gmra.mrb[0].mxu0 %v2945
      %v3086 = vpop.f32.mrb[0].mxu0
      %v3087 = vadd.f32 %v2894, %v3086
      %v3088 = vpop.f32.mrb[0].mxu0
      %3089 = vmatprep.mubr.f32.mxu0 0.0
      %3090 = vmatmul.mubr.f32.gmra.mrb[0].mxu0 %v2948
      %v3091 = vpop.f32.mrb[0].mxu0
      %v3092 = vadd.f32 %v2899, %v3091
      %v3093 = vpop.f32.mrb[0].mxu0
      %3094 = vdwg.mxu0
      %s3095 = scalar_lea.vmem %s7, 1
      %v3096 = vld [vmem:[%s3095] sm:$0x1]
      %v3098 = vlaneseq
      %v3099 = vshrl.u32 %v3098, 7
      %v3100 = vsub.s32 0, %v3099
      %v3101 = vrot.slane %v3096, %v3100
      %v3103 = vadd.f32 %v3017, %v3101
      %v3104 = vadd.f32 %v3022, %v3101
      %v3105 = vadd.f32 %v3027, %v3101
      %v3106 = vadd.f32 %v3032, %v3101
      %v3107 = vadd.f32 %v3037, %v3101
      %v3108 = vadd.f32 %v3042, %v3101
      %v3109 = vadd.f32 %v3047, %v3101
      %v3110 = vadd.f32 %v3052, %v3101
      %v3111 = vadd.f32 %v3057, %v3101
      %v3112 = vadd.f32 %v3062, %v3101
      %v3113 = vadd.f32 %v3067, %v3101
      %v3114 = vadd.f32 %v3072, %v3101
      %v3115 = vadd.f32 %v3077, %v3101
      %v3116 = vadd.f32 %v3082, %v3101
      %v3117 = vadd.f32 %v3087, %v3101
      %v3118 = vadd.f32 %v3092, %v3101
      %v3119 = vxor.u32 %v3103, 2147483648
      %v3120 = vxor.u32 %v3104, 2147483648
      %v3121 = vxor.u32 %v3105, 2147483648
      %v3122 = vxor.u32 %v3106, 2147483648
      %v3123 = vxor.u32 %v3107, 2147483648
      %v3124 = vxor.u32 %v3108, 2147483648
      %v3125 = vxor.u32 %v3109, 2147483648
      %v3126 = vxor.u32 %v3110, 2147483648
      %v3127 = vxor.u32 %v3111, 2147483648
      %v3128 = vxor.u32 %v3112, 2147483648
      %v3129 = vxor.u32 %v3113, 2147483648
      %v3130 = vxor.u32 %v3114, 2147483648
      %v3131 = vxor.u32 %v3115, 2147483648
      %v3132 = vxor.u32 %v3116, 2147483648
      %v3133 = vxor.u32 %v3117, 2147483648
      %v3134 = vxor.u32 %v3118, 2147483648
      %v3135 = vmul.f32 %v3119, 1.442695
      %v3136 = vpow.pop %v3135
      %v3137 = vmul.f32 %v3120, 1.442695
      %v3138 = vpow.pop %v3137
      %v3139 = vmul.f32 %v3121, 1.442695
      %v3140 = vpow.pop %v3139
      %v3141 = vmul.f32 %v3122, 1.442695
      %v3142 = vpow.pop %v3141
      %v3143 = vmul.f32 %v3123, 1.442695
      %v3144 = vpow.pop %v3143
      %v3145 = vmul.f32 %v3124, 1.442695
      %v3146 = vpow.pop %v3145
      %v3147 = vmul.f32 %v3125, 1.442695
      %v3148 = vpow.pop %v3147
      %v3149 = vmul.f32 %v3126, 1.442695
      %v3150 = vpow.pop %v3149
      %v3151 = vmul.f32 %v3127, 1.442695
      %v3152 = vpow.pop %v3151
      %v3153 = vmul.f32 %v3128, 1.442695
      %v3154 = vpow.pop %v3153
      %v3155 = vmul.f32 %v3129, 1.442695
      %v3156 = vpow.pop %v3155
      %v3157 = vmul.f32 %v3130, 1.442695
      %v3158 = vpow.pop %v3157
      %v3159 = vmul.f32 %v3131, 1.442695
      %v3160 = vpow.pop %v3159
      %v3161 = vmul.f32 %v3132, 1.442695
      %v3162 = vpow.pop %v3161
      %v3163 = vmul.f32 %v3133, 1.442695
      %v3164 = vpow.pop %v3163
      %v3165 = vmul.f32 %v3134, 1.442695
      %v3166 = vpow.pop %v3165
      %v3167 = vadd.f32 %v3136, 1.0
      %v3168 = vadd.f32 %v3138, 1.0
      %v3169 = vadd.f32 %v3140, 1.0
      %v3170 = vadd.f32 %v3142, 1.0
      %v3171 = vadd.f32 %v3144, 1.0
      %v3172 = vadd.f32 %v3146, 1.0
      %v3173 = vadd.f32 %v3148, 1.0
      %v3174 = vadd.f32 %v3150, 1.0
      %v3175 = vadd.f32 %v3152, 1.0
      %v3176 = vadd.f32 %v3154, 1.0
      %v3177 = vadd.f32 %v3156, 1.0
      %v3178 = vadd.f32 %v3158, 1.0
      %v3179 = vadd.f32 %v3160, 1.0
      %v3180 = vadd.f32 %v3162, 1.0
      %v3181 = vadd.f32 %v3164, 1.0
      %v3182 = vadd.f32 %v3166, 1.0
      %v3183 = vrcp.pop %v3167
      %v3184 = vmul.f32 1.0, %v3183
      %v3185 = vrcp.pop %v3168
      %v3186 = vmul.f32 1.0, %v3185
      %v3187 = vrcp.pop %v3169
      %v3188 = vmul.f32 1.0, %v3187
      %v3189 = vrcp.pop %v3170
      %v3190 = vmul.f32 1.0, %v3189
      %v3191 = vrcp.pop %v3171
      %v3192 = vmul.f32 1.0, %v3191
      %v3193 = vrcp.pop %v3172
      %v3194 = vmul.f32 1.0, %v3193
      %v3195 = vrcp.pop %v3173
      %v3196 = vmul.f32 1.0, %v3195
      %v3197 = vrcp.pop %v3174
      %v3198 = vmul.f32 1.0, %v3197
      %v3199 = vrcp.pop %v3175
      %v3200 = vmul.f32 1.0, %v3199
      %v3201 = vrcp.pop %v3176
      %v3202 = vmul.f32 1.0, %v3201
      %v3203 = vrcp.pop %v3177
      %v3204 = vmul.f32 1.0, %v3203
      %v3205 = vrcp.pop %v3178
      %v3206 = vmul.f32 1.0, %v3205
      %v3207 = vrcp.pop %v3179
      %v3208 = vmul.f32 1.0, %v3207
      %v3209 = vrcp.pop %v3180
      %v3210 = vmul.f32 1.0, %v3209
      %v3211 = vrcp.pop %v3181
      %v3212 = vmul.f32 1.0, %v3211
      %v3213 = vrcp.pop %v3182
      %v3214 = vmul.f32 1.0, %v3213
      %v3215 = vmul.f32 %v3103, %v3184
      %v3216 = vmul.f32 %v3104, %v3186
      %v3217 = vmul.f32 %v3105, %v3188
      %v3218 = vmul.f32 %v3106, %v3190
      %v3219 = vmul.f32 %v3107, %v3192
      %v3220 = vmul.f32 %v3108, %v3194
      %v3221 = vmul.f32 %v3109, %v3196
      %v3222 = vmul.f32 %v3110, %v3198
      %v3223 = vmul.f32 %v3111, %v3200
      %v3224 = vmul.f32 %v3112, %v3202
      %v3225 = vmul.f32 %v3113, %v3204
      %v3226 = vmul.f32 %v3114, %v3206
      %v3227 = vmul.f32 %v3115, %v3208
      %v3228 = vmul.f32 %v3116, %v3210
      %v3229 = vmul.f32 %v3117, %v3212
      %v3230 = vmul.f32 %v3118, %v3214
      %s3231 = scalar_lea.vmem %s8, 64
      %v3232 = vld [vmem:[%s3231] sm:$0xff]
      %v3233 = vld [vmem:[%s3231 + $0x8] sm:$0xff]
      %v3234 = vld [vmem:[%s3231 + $0x10] sm:$0xff]
      %v3235 = vld [vmem:[%s3231 + $0x18] sm:$0xff]
      %v3236 = vld [vmem:[%s3231 + $0x20] sm:$0xff]
      %v3237 = vld [vmem:[%s3231 + $0x28] sm:$0xff]
      %v3238 = vld [vmem:[%s3231 + $0x30] sm:$0xff]
      %v3239 = vld [vmem:[%s3231 + $0x38] sm:$0xff]
      %v3241 = vsel %vm1649, %v3215, 0
      %v3244 = vsel %vm1649, %v3216, 0
      %v3247 = vsel %vm1649, %v3217, 0
      %v3250 = vsel %vm1649, %v3218, 0
      %v3253 = vsel %vm1649, %v3219, 0
      %v3256 = vsel %vm1649, %v3220, 0
      %v3259 = vsel %vm1649, %v3221, 0
      %v3262 = vsel %vm1649, %v3222, 0
      %v3265 = vsel %vm1649, %v3223, 0
      %v3268 = vsel %vm1649, %v3224, 0
      %v3271 = vsel %vm1649, %v3225, 0
      %v3274 = vsel %vm1649, %v3226, 0
      %v3277 = vsel %vm1649, %v3227, 0
      %v3280 = vsel %vm1649, %v3228, 0
      %v3283 = vsel %vm1649, %v3229, 0
      %v3286 = vsel %vm1649, %v3230, 0
      %3288 = vmatprep.subr.mxu0 0.0
      %3289 = vmatpush1.msra.mxu0 %v3232
      %3290 = vmatprep.subr.mxu0 0.0
      %3291 = vmatpush1.msra.mxu0 %v3233
      %3292 = vmatprep.subr.mxu0 0.0
      %3293 = vmatpush1.msra.mxu0 %v3234
      %3294 = vmatprep.subr.mxu0 0.0
      %3295 = vmatpush1.msra.mxu0 %v3235
      %3296 = vmatprep.subr.mxu0 0.0
      %3297 = vmatpush1.msra.mxu0 %v3236
      %3298 = vmatprep.subr.mxu0 0.0
      %3299 = vmatpush1.msra.mxu0 %v3237
      %3300 = vmatprep.subr.mxu0 0.0
      %3301 = vmatpush1.msra.mxu0 %v3238
      %3302 = vmatprep.subr.mxu0 0.0
      %3303 = vmatpush1.msra.mxu0 %v3239
      %3304 = vmatprep.subr.mxu0 0.0
      %3305 = vmatpush1.msra.mxu0 0.0
      %3306 = vmatprep.subr.mxu0 0.0
      %3307 = vmatpush1.msra.mxu0 0.0
      %3308 = vmatprep.subr.mxu0 0.0
      %3309 = vmatpush1.msra.mxu0 0.0
      %3310 = vmatprep.subr.mxu0 0.0
      %3311 = vmatpush1.msra.mxu0 0.0
      %3312 = vmatprep.subr.mxu0 0.0
      %3313 = vmatpush1.msra.mxu0 0.0
      %3314 = vmatprep.subr.mxu0 0.0
      %3315 = vmatpush1.msra.mxu0 0.0
      %3316 = vmatprep.subr.mxu0 0.0
      %3317 = vmatpush1.msra.mxu0 0.0
      %3318 = vmatprep.subr.mxu0 0.0
      %3319 = vmatpush1.msra.mxu0 0.0
      %3320 = vmatprep.subr.mxu0 0.0
      %3321 = vmatpush1.msra.mxu0 0.0
      %3322 = vmatprep.subr.mxu0 0.0
      %3323 = vmatpush1.msra.mxu0 0.0
      %3324 = vmatprep.subr.mxu0 0.0
      %3325 = vmatpush1.msra.mxu0 0.0
      %3326 = vmatprep.subr.mxu0 0.0
      %3327 = vmatpush1.msra.mxu0 0.0
      %3328 = vmatprep.subr.mxu0 0.0
      %3329 = vmatpush1.msra.mxu0 0.0
      %3330 = vmatprep.subr.mxu0 0.0
      %3331 = vmatpush1.msra.mxu0 0.0
      %3332 = vmatprep.subr.mxu0 0.0
      %3333 = vmatpush1.msra.mxu0 0.0
      %3334 = vmatprep.subr.mxu0 0.0
      %3335 = vmatpush1.msra.mxu0 0.0
      %3336 = vmatprep.subr.mxu0 0.0
      %3337 = vmatpush1.msra.mxu0 0.0
      %3338 = vmatprep.subr.mxu0 0.0
      %3339 = vmatpush1.msra.mxu0 0.0
      %3340 = vmatprep.subr.mxu0 0.0
      %3341 = vmatpush1.msra.mxu0 0.0
      %3342 = vmatprep.subr.mxu0 0.0
      %3343 = vmatpush1.msra.mxu0 0.0
      %3344 = vmatprep.subr.mxu0 0.0
      %3345 = vmatpush1.msra.mxu0 0.0
      %3346 = vmatprep.subr.mxu0 0.0
      %3347 = vmatpush1.msra.mxu0 0.0
      %3348 = vmatprep.subr.mxu0 0.0
      %3349 = vmatpush1.msra.mxu0 0.0
      %3350 = vmatprep.subr.mxu0 0.0
      %3351 = vmatpush1.msra.mxu0 0.0
      %3352 = vmatprep.mubr.f32.mxu0 0.0
      %3353 = vmatmul.mubr.f32.gmra.mrb[0].mxu0 %v3241
      %v3354 = vpop.f32.mrb[0].mxu0
      %v3355 = vadd.f32 0.0, %v3354
      %v3356 = vpop.f32.mrb[0].mxu0
      %3357 = vmatprep.mubr.f32.mxu0 0.0
      %3358 = vmatmul.mubr.f32.gmra.mrb[0].mxu0 %v3244
      %v3359 = vpop.f32.mrb[0].mxu0
      %v3360 = vadd.f32 0.0, %v3359
      %v3361 = vpop.f32.mrb[0].mxu0
      %3362 = vmatprep.mubr.f32.mxu0 0.0
      %3363 = vmatmul.mubr.f32.gmra.mrb[0].mxu0 %v3247
      %v3364 = vpop.f32.mrb[0].mxu0
      %v3365 = vadd.f32 0.0, %v3364
      %v3366 = vpop.f32.mrb[0].mxu0
      %3367 = vmatprep.mubr.f32.mxu0 0.0
      %3368 = vmatmul.mubr.f32.gmra.mrb[0].mxu0 %v3250
      %v3369 = vpop.f32.mrb[0].mxu0
      %v3370 = vadd.f32 0.0, %v3369
      %v3371 = vpop.f32.mrb[0].mxu0
      %3372 = vmatprep.mubr.f32.mxu0 0.0
      %3373 = vmatmul.mubr.f32.gmra.mrb[0].mxu0 %v3253
      %v3374 = vpop.f32.mrb[0].mxu0
      %v3375 = vadd.f32 0.0, %v3374
      %v3376 = vpop.f32.mrb[0].mxu0
      %3377 = vmatprep.mubr.f32.mxu0 0.0
      %3378 = vmatmul.mubr.f32.gmra.mrb[0].mxu0 %v3256
      %v3379 = vpop.f32.mrb[0].mxu0
      %v3380 = vadd.f32 0.0, %v3379
      %v3381 = vpop.f32.mrb[0].mxu0
      %3382 = vmatprep.mubr.f32.mxu0 0.0
      %3383 = vmatmul.mubr.f32.gmra.mrb[0].mxu0 %v3259
      %v3384 = vpop.f32.mrb[0].mxu0
      %v3385 = vadd.f32 0.0, %v3384
      %v3386 = vpop.f32.mrb[0].mxu0
      %3387 = vmatprep.mubr.f32.mxu0 0.0
      %3388 = vmatmul.mubr.f32.gmra.mrb[0].mxu0 %v3262
      %v3389 = vpop.f32.mrb[0].mxu0
      %v3390 = vadd.f32 0.0, %v3389
      %v3391 = vpop.f32.mrb[0].mxu0
      %3392 = vmatprep.mubr.f32.mxu0 0.0
      %3393 = vmatmul.mubr.f32.gmra.mrb[0].mxu0 %v3265
      %v3394 = vpop.f32.mrb[0].mxu0
      %v3395 = vadd.f32 0.0, %v3394
      %v3396 = vpop.f32.mrb[0].mxu0
      %3397 = vmatprep.mubr.f32.mxu0 0.0
      %3398 = vmatmul.mubr.f32.gmra.mrb[0].mxu0 %v3268
      %v3399 = vpop.f32.mrb[0].mxu0
      %v3400 = vadd.f32 0.0, %v3399
      %v3401 = vpop.f32.mrb[0].mxu0
      %3402 = vmatprep.mubr.f32.mxu0 0.0
      %3403 = vmatmul.mubr.f32.gmra.mrb[0].mxu0 %v3271
      %v3404 = vpop.f32.mrb[0].mxu0
      %v3405 = vadd.f32 0.0, %v3404
      %v3406 = vpop.f32.mrb[0].mxu0
      %3407 = vmatprep.mubr.f32.mxu0 0.0
      %3408 = vmatmul.mubr.f32.gmra.mrb[0].mxu0 %v3274
      %v3409 = vpop.f32.mrb[0].mxu0
      %v3410 = vadd.f32 0.0, %v3409
      %v3411 = vpop.f32.mrb[0].mxu0
      %3412 = vmatprep.mubr.f32.mxu0 0.0
      %3413 = vmatmul.mubr.f32.gmra.mrb[0].mxu0 %v3277
      %v3414 = vpop.f32.mrb[0].mxu0
      %v3415 = vadd.f32 0.0, %v3414
      %v3416 = vpop.f32.mrb[0].mxu0
      %3417 = vmatprep.mubr.f32.mxu0 0.0
      %3418 = vmatmul.mubr.f32.gmra.mrb[0].mxu0 %v3280
      %v3419 = vpop.f32.mrb[0].mxu0
      %v3420 = vadd.f32 0.0, %v3419
      %v3421 = vpop.f32.mrb[0].mxu0
      %3422 = vmatprep.mubr.f32.mxu0 0.0
      %3423 = vmatmul.mubr.f32.gmra.mrb[0].mxu0 %v3283
      %v3424 = vpop.f32.mrb[0].mxu0
      %v3425 = vadd.f32 0.0, %v3424
      %v3426 = vpop.f32.mrb[0].mxu0
      %3427 = vmatprep.mubr.f32.mxu0 0.0
      %3428 = vmatmul.mubr.f32.gmra.mrb[0].mxu0 %v3286
      %v3429 = vpop.f32.mrb[0].mxu0
      %v3430 = vadd.f32 0.0, %v3429
      %v3431 = vpop.f32.mrb[0].mxu0
      %3432 = vdwg.mxu0
      %v3433 = vadd.f32 %v1866, %v3355
      %v3434 = vadd.f32 %v1867, %v3360
      %v3435 = vadd.f32 %v1868, %v3365
      %v3436 = vadd.f32 %v1869, %v3370
      %v3437 = vadd.f32 %v1870, %v3375
      %v3438 = vadd.f32 %v1871, %v3380
      %v3439 = vadd.f32 %v1872, %v3385
      %v3440 = vadd.f32 %v1873, %v3390
      %v3441 = vadd.f32 %v1874, %v3395
      %v3442 = vadd.f32 %v1875, %v3400
      %v3443 = vadd.f32 %v1876, %v3405
      %v3444 = vadd.f32 %v1877, %v3410
      %v3445 = vadd.f32 %v1878, %v3415
      %v3446 = vadd.f32 %v1879, %v3420
      %v3447 = vadd.f32 %v1880, %v3425
      %v3448 = vadd.f32 %v1881, %v3430
      %s3449 = scalar_lea.vmem %s9, 1
      %v3450 = vld [vmem:[%s3449] sm:$0x1]
      %v3452 = vlaneseq
      %v3453 = vshrl.u32 %v3452, 7
      %v3454 = vsub.s32 0, %v3453
      %v3455 = vrot.slane %v3450, %v3454
      %v3457 = vadd.f32 %v3433, %v3455
      %v3458 = vadd.f32 %v3434, %v3455
      %v3459 = vadd.f32 %v3435, %v3455
      %v3460 = vadd.f32 %v3436, %v3455
      %v3461 = vadd.f32 %v3437, %v3455
      %v3462 = vadd.f32 %v3438, %v3455
      %v3463 = vadd.f32 %v3439, %v3455
      %v3464 = vadd.f32 %v3440, %v3455
      %v3465 = vadd.f32 %v3441, %v3455
      %v3466 = vadd.f32 %v3442, %v3455
      %v3467 = vadd.f32 %v3443, %v3455
      %v3468 = vadd.f32 %v3444, %v3455
      %v3469 = vadd.f32 %v3445, %v3455
      %v3470 = vadd.f32 %v3446, %v3455
      %v3471 = vadd.f32 %v3447, %v3455
      %v3472 = vadd.f32 %v3448, %v3455
      %s3473 = scalar_lea.vmem %s10, 64
      %v3474 = vld [vmem:[%s3473] sm:$0xff]
      %v3475 = vld [vmem:[%s3473 + $0x8] sm:$0xff]
      %v3476 = vld [vmem:[%s3473 + $0x10] sm:$0xff]
      %v3477 = vld [vmem:[%s3473 + $0x18] sm:$0xff]
      %v3478 = vld [vmem:[%s3473 + $0x20] sm:$0xff]
      %v3479 = vld [vmem:[%s3473 + $0x28] sm:$0xff]
      %v3480 = vld [vmem:[%s3473 + $0x30] sm:$0xff]
      %v3481 = vld [vmem:[%s3473 + $0x38] sm:$0xff]
      %s3482 = scalar_lea.vmem %s11, 1
      %v3483 = vld [vmem:[%s3482] sm:$0x1]
      %v3485 = vlaneseq
      %v3486 = vshrl.u32 %v3485, 7
      %v3487 = vsub.s32 0, %v3486
      %v3488 = vrot.slane %v3483, %v3487
      %3490 = vmatprep.subr.mxu0 0.0
      %3491 = vmatpush1.msra.mxu0 %v3474
      %3492 = vmatprep.subr.mxu0 0.0
      %3493 = vmatpush1.msra.mxu0 %v3475
      %3494 = vmatprep.subr.mxu0 0.0
      %3495 = vmatpush1.msra.mxu0 %v3476
      %3496 = vmatprep.subr.mxu0 0.0
      %3497 = vmatpush1.msra.mxu0 %v3477
      %3498 = vmatprep.subr.mxu0 0.0
      %3499 = vmatpush1.msra.mxu0 %v3478
      %3500 = vmatprep.subr.mxu0 0.0
      %3501 = vmatpush1.msra.mxu0 %v3479
      %3502 = vmatprep.subr.mxu0 0.0
      %3503 = vmatpush1.msra.mxu0 %v3480
      %3504 = vmatprep.subr.mxu0 0.0
      %3505 = vmatpush1.msra.mxu0 %v3481
      %3506 = vmatprep.subr.mxu0 0.0
      %3507 = vmatpush1.msra.mxu0 0.0
      %3508 = vmatprep.subr.mxu0 0.0
      %3509 = vmatpush1.msra.mxu0 0.0
      %3510 = vmatprep.subr.mxu0 0.0
      %3511 = vmatpush1.msra.mxu0 0.0
      %3512 = vmatprep.subr.mxu0 0.0
      %3513 = vmatpush1.msra.mxu0 0.0
      %3514 = vmatprep.subr.mxu0 0.0
      %3515 = vmatpush1.msra.mxu0 0.0
      %3516 = vmatprep.subr.mxu0 0.0
      %3517 = vmatpush1.msra.mxu0 0.0
      %3518 = vmatprep.subr.mxu0 0.0
      %3519 = vmatpush1.msra.mxu0 0.0
      %3520 = vmatprep.subr.mxu0 0.0
      %3521 = vmatpush1.msra.mxu0 0.0
      %3522 = vmatprep.subr.mxu0 0.0
      %3523 = vmatpush1.msra.mxu0 0.0
      %3524 = vmatprep.subr.mxu0 0.0
      %3525 = vmatpush1.msra.mxu0 0.0
      %3526 = vmatprep.subr.mxu0 0.0
      %3527 = vmatpush1.msra.mxu0 0.0
      %3528 = vmatprep.subr.mxu0 0.0
      %3529 = vmatpush1.msra.mxu0 0.0
      %3530 = vmatprep.subr.mxu0 0.0
      %3531 = vmatpush1.msra.mxu0 0.0
      %3532 = vmatprep.subr.mxu0 0.0
      %3533 = vmatpush1.msra.mxu0 0.0
      %3534 = vmatprep.subr.mxu0 0.0
      %3535 = vmatpush1.msra.mxu0 0.0
      %3536 = vmatprep.subr.mxu0 0.0
      %3537 = vmatpush1.msra.mxu0 0.0
      %3538 = vmatprep.subr.mxu0 0.0
      %3539 = vmatpush1.msra.mxu0 0.0
      %3540 = vmatprep.subr.mxu0 0.0
      %3541 = vmatpush1.msra.mxu0 0.0
      %3542 = vmatprep.subr.mxu0 0.0
      %3543 = vmatpush1.msra.mxu0 0.0
      %3544 = vmatprep.subr.mxu0 0.0
      %3545 = vmatpush1.msra.mxu0 0.0
      %3546 = vmatprep.subr.mxu0 0.0
      %3547 = vmatpush1.msra.mxu0 0.0
      %3548 = vmatprep.subr.mxu0 0.0
      %3549 = vmatpush1.msra.mxu0 0.0
      %3550 = vmatprep.subr.mxu0 0.0
      %3551 = vmatpush1.msra.mxu0 0.0
      %3552 = vmatprep.subr.mxu0 0.0
      %3553 = vmatpush1.msra.mxu0 0.0
      %3554 = vmatprep.mubr.f32.mxu0 0.0
      %3555 = vmatmul.mubr.f32.gmra.mrb[0].mxu0 %v3241
      %v3556 = vpop.f32.mrb[0].mxu0
      %v3557 = vadd.f32 %v3488, %v3556
      %v3558 = vpop.f32.mrb[0].mxu0
      %3559 = vmatprep.mubr.f32.mxu0 0.0
      %3560 = vmatmul.mubr.f32.gmra.mrb[0].mxu0 %v3244
      %v3561 = vpop.f32.mrb[0].mxu0
      %v3562 = vadd.f32 %v3488, %v3561
      %v3563 = vpop.f32.mrb[0].mxu0
      %3564 = vmatprep.mubr.f32.mxu0 0.0
      %3565 = vmatmul.mubr.f32.gmra.mrb[0].mxu0 %v3247
      %v3566 = vpop.f32.mrb[0].mxu0
      %v3567 = vadd.f32 %v3488, %v3566
      %v3568 = vpop.f32.mrb[0].mxu0
      %3569 = vmatprep.mubr.f32.mxu0 0.0
      %3570 = vmatmul.mubr.f32.gmra.mrb[0].mxu0 %v3250
      %v3571 = vpop.f32.mrb[0].mxu0
      %v3572 = vadd.f32 %v3488, %v3571
      %v3573 = vpop.f32.mrb[0].mxu0
      %3574 = vmatprep.mubr.f32.mxu0 0.0
      %3575 = vmatmul.mubr.f32.gmra.mrb[0].mxu0 %v3253
      %v3576 = vpop.f32.mrb[0].mxu0
      %v3577 = vadd.f32 %v3488, %v3576
      %v3578 = vpop.f32.mrb[0].mxu0
      %3579 = vmatprep.mubr.f32.mxu0 0.0
      %3580 = vmatmul.mubr.f32.gmra.mrb[0].mxu0 %v3256
      %v3581 = vpop.f32.mrb[0].mxu0
      %v3582 = vadd.f32 %v3488, %v3581
      %v3583 = vpop.f32.mrb[0].mxu0
      %3584 = vmatprep.mubr.f32.mxu0 0.0
      %3585 = vmatmul.mubr.f32.gmra.mrb[0].mxu0 %v3259
      %v3586 = vpop.f32.mrb[0].mxu0
      %v3587 = vadd.f32 %v3488, %v3586
      %v3588 = vpop.f32.mrb[0].mxu0
      %3589 = vmatprep.mubr.f32.mxu0 0.0
      %3590 = vmatmul.mubr.f32.gmra.mrb[0].mxu0 %v3262
      %v3591 = vpop.f32.mrb[0].mxu0
      %v3592 = vadd.f32 %v3488, %v3591
      %v3593 = vpop.f32.mrb[0].mxu0
      %3594 = vmatprep.mubr.f32.mxu0 0.0
      %3595 = vmatmul.mubr.f32.gmra.mrb[0].mxu0 %v3265
      %v3596 = vpop.f32.mrb[0].mxu0
      %v3597 = vadd.f32 %v3488, %v3596
      %v3598 = vpop.f32.mrb[0].mxu0
      %3599 = vmatprep.mubr.f32.mxu0 0.0
      %3600 = vmatmul.mubr.f32.gmra.mrb[0].mxu0 %v3268
      %v3601 = vpop.f32.mrb[0].mxu0
      %v3602 = vadd.f32 %v3488, %v3601
      %v3603 = vpop.f32.mrb[0].mxu0
      %3604 = vmatprep.mubr.f32.mxu0 0.0
      %3605 = vmatmul.mubr.f32.gmra.mrb[0].mxu0 %v3271
      %v3606 = vpop.f32.mrb[0].mxu0
      %v3607 = vadd.f32 %v3488, %v3606
      %v3608 = vpop.f32.mrb[0].mxu0
      %3609 = vmatprep.mubr.f32.mxu0 0.0
      %3610 = vmatmul.mubr.f32.gmra.mrb[0].mxu0 %v3274
      %v3611 = vpop.f32.mrb[0].mxu0
      %v3612 = vadd.f32 %v3488, %v3611
      %v3613 = vpop.f32.mrb[0].mxu0
      %3614 = vmatprep.mubr.f32.mxu0 0.0
      %3615 = vmatmul.mubr.f32.gmra.mrb[0].mxu0 %v3277
      %v3616 = vpop.f32.mrb[0].mxu0
      %v3617 = vadd.f32 %v3488, %v3616
      %v3618 = vpop.f32.mrb[0].mxu0
      %3619 = vmatprep.mubr.f32.mxu0 0.0
      %3620 = vmatmul.mubr.f32.gmra.mrb[0].mxu0 %v3280
      %v3621 = vpop.f32.mrb[0].mxu0
      %v3622 = vadd.f32 %v3488, %v3621
      %v3623 = vpop.f32.mrb[0].mxu0
      %3624 = vmatprep.mubr.f32.mxu0 0.0
      %3625 = vmatmul.mubr.f32.gmra.mrb[0].mxu0 %v3283
      %v3626 = vpop.f32.mrb[0].mxu0
      %v3627 = vadd.f32 %v3488, %v3626
      %v3628 = vpop.f32.mrb[0].mxu0
      %3629 = vmatprep.mubr.f32.mxu0 0.0
      %3630 = vmatmul.mubr.f32.gmra.mrb[0].mxu0 %v3286
      %v3631 = vpop.f32.mrb[0].mxu0
      %v3632 = vadd.f32 %v3488, %v3631
      %v3633 = vpop.f32.mrb[0].mxu0
      %3634 = vdwg.mxu0
      %v3635 = vxor.u32 %v3557, 2147483648
      %v3636 = vxor.u32 %v3562, 2147483648
      %v3637 = vxor.u32 %v3567, 2147483648
      %v3638 = vxor.u32 %v3572, 2147483648
      %v3639 = vxor.u32 %v3577, 2147483648
      %v3640 = vxor.u32 %v3582, 2147483648
      %v3641 = vxor.u32 %v3587, 2147483648
      %v3642 = vxor.u32 %v3592, 2147483648
      %v3643 = vxor.u32 %v3597, 2147483648
      %v3644 = vxor.u32 %v3602, 2147483648
      %v3645 = vxor.u32 %v3607, 2147483648
      %v3646 = vxor.u32 %v3612, 2147483648
      %v3647 = vxor.u32 %v3617, 2147483648
      %v3648 = vxor.u32 %v3622, 2147483648
      %v3649 = vxor.u32 %v3627, 2147483648
      %v3650 = vxor.u32 %v3632, 2147483648
      %v3651 = vmul.f32 %v3635, 1.442695
      %v3652 = vpow.pop %v3651
      %v3653 = vmul.f32 %v3636, 1.442695
      %v3654 = vpow.pop %v3653
      %v3655 = vmul.f32 %v3637, 1.442695
      %v3656 = vpow.pop %v3655
      %v3657 = vmul.f32 %v3638, 1.442695
      %v3658 = vpow.pop %v3657
      %v3659 = vmul.f32 %v3639, 1.442695
      %v3660 = vpow.pop %v3659
      %v3661 = vmul.f32 %v3640, 1.442695
      %v3662 = vpow.pop %v3661
      %v3663 = vmul.f32 %v3641, 1.442695
      %v3664 = vpow.pop %v3663
      %v3665 = vmul.f32 %v3642, 1.442695
      %v3666 = vpow.pop %v3665
      %v3667 = vmul.f32 %v3643, 1.442695
      %v3668 = vpow.pop %v3667
      %v3669 = vmul.f32 %v3644, 1.442695
      %v3670 = vpow.pop %v3669
      %v3671 = vmul.f32 %v3645, 1.442695
      %v3672 = vpow.pop %v3671
      %v3673 = vmul.f32 %v3646, 1.442695
      %v3674 = vpow.pop %v3673
      %v3675 = vmul.f32 %v3647, 1.442695
      %v3676 = vpow.pop %v3675
      %v3677 = vmul.f32 %v3648, 1.442695
      %v3678 = vpow.pop %v3677
      %v3679 = vmul.f32 %v3649, 1.442695
      %v3680 = vpow.pop %v3679
      %v3681 = vmul.f32 %v3650, 1.442695
      %v3682 = vpow.pop %v3681
      %v3683 = vadd.f32 %v3652, 1.0
      %v3684 = vadd.f32 %v3654, 1.0
      %v3685 = vadd.f32 %v3656, 1.0
      %v3686 = vadd.f32 %v3658, 1.0
      %v3687 = vadd.f32 %v3660, 1.0
      %v3688 = vadd.f32 %v3662, 1.0
      %v3689 = vadd.f32 %v3664, 1.0
      %v3690 = vadd.f32 %v3666, 1.0
      %v3691 = vadd.f32 %v3668, 1.0
      %v3692 = vadd.f32 %v3670, 1.0
      %v3693 = vadd.f32 %v3672, 1.0
      %v3694 = vadd.f32 %v3674, 1.0
      %v3695 = vadd.f32 %v3676, 1.0
      %v3696 = vadd.f32 %v3678, 1.0
      %v3697 = vadd.f32 %v3680, 1.0
      %v3698 = vadd.f32 %v3682, 1.0
      %v3699 = vrcp.pop %v3683
      %v3700 = vmul.f32 1.0, %v3699
      %v3701 = vrcp.pop %v3684
      %v3702 = vmul.f32 1.0, %v3701
      %v3703 = vrcp.pop %v3685
      %v3704 = vmul.f32 1.0, %v3703
      %v3705 = vrcp.pop %v3686
      %v3706 = vmul.f32 1.0, %v3705
      %v3707 = vrcp.pop %v3687
      %v3708 = vmul.f32 1.0, %v3707
      %v3709 = vrcp.pop %v3688
      %v3710 = vmul.f32 1.0, %v3709
      %v3711 = vrcp.pop %v3689
      %v3712 = vmul.f32 1.0, %v3711
      %v3713 = vrcp.pop %v3690
      %v3714 = vmul.f32 1.0, %v3713
      %v3715 = vrcp.pop %v3691
      %v3716 = vmul.f32 1.0, %v3715
      %v3717 = vrcp.pop %v3692
      %v3718 = vmul.f32 1.0, %v3717
      %v3719 = vrcp.pop %v3693
      %v3720 = vmul.f32 1.0, %v3719
      %v3721 = vrcp.pop %v3694
      %v3722 = vmul.f32 1.0, %v3721
      %v3723 = vrcp.pop %v3695
      %v3724 = vmul.f32 1.0, %v3723
      %v3725 = vrcp.pop %v3696
      %v3726 = vmul.f32 1.0, %v3725
      %v3727 = vrcp.pop %v3697
      %v3728 = vmul.f32 1.0, %v3727
      %v3729 = vrcp.pop %v3698
      %v3730 = vmul.f32 1.0, %v3729
      %v3731 = vmul.f32 %v2301, %v3700
      %v3732 = vmul.f32 %v2306, %v3702
      %v3733 = vmul.f32 %v2311, %v3704
      %v3734 = vmul.f32 %v2316, %v3706
      %v3735 = vmul.f32 %v2321, %v3708
      %v3736 = vmul.f32 %v2326, %v3710
      %v3737 = vmul.f32 %v2331, %v3712
      %v3738 = vmul.f32 %v2336, %v3714
      %v3739 = vmul.f32 %v2341, %v3716
      %v3740 = vmul.f32 %v2346, %v3718
      %v3741 = vmul.f32 %v2351, %v3720
      %v3742 = vmul.f32 %v2356, %v3722
      %v3743 = vmul.f32 %v2361, %v3724
      %v3744 = vmul.f32 %v2366, %v3726
      %v3745 = vmul.f32 %v2371, %v3728
      %v3746 = vmul.f32 %v2376, %v3730
      %v3747 = vadd.f32 %v2154, %v3731
      %v3748 = vadd.f32 %v2155, %v3732
      %v3749 = vadd.f32 %v2156, %v3733
      %v3750 = vadd.f32 %v2157, %v3734
      %v3751 = vadd.f32 %v2158, %v3735
      %v3752 = vadd.f32 %v2159, %v3736
      %v3753 = vadd.f32 %v2160, %v3737
      %v3754 = vadd.f32 %v2161, %v3738
      %v3755 = vadd.f32 %v2162, %v3739
      %v3756 = vadd.f32 %v2163, %v3740
      %v3757 = vadd.f32 %v2164, %v3741
      %v3758 = vadd.f32 %v2165, %v3742
      %v3759 = vadd.f32 %v2166, %v3743
      %v3760 = vadd.f32 %v2167, %v3744
      %v3761 = vadd.f32 %v2168, %v3745
      %v3762 = vadd.f32 %v2169, %v3746
      %v3763 = vld [vmem:[%s14] sm:$0x1]
      %v3764 = vld [vmem:[%s14 + $0x1] sm:$0x1]
      %v3765 = vld [vmem:[%s14 + $0x2] sm:$0x1]
      %v3766 = vld [vmem:[%s14 + $0x3] sm:$0x1]
      %v3767 = vld [vmem:[%s12] sm:$0xff]
      %v3768 = vld [vmem:[%s12 + $0x8] sm:$0xff]
      %v3769 = vld [vmem:[%s12 + $0x10] sm:$0xff]
      %v3770 = vld [vmem:[%s12 + $0x18] sm:$0xff]
      %v3771 = vlaneseq
      %v3772 = vshrl.u32 %v3771, 7
      %v3773 = vsub.s32 0, %v3772
      %v3774 = vrot.slane %v3763, %v3773
      %v3776 = vsel %vm1312, %v3457, 0
      %v3779 = vsel %vm1312, %v3458, 0
      %v3782 = vsel %vm1312, %v3459, 0
      %v3785 = vsel %vm1312, %v3460, 0
      %v3788 = vsel %vm1312, %v3461, 0
      %v3791 = vsel %vm1312, %v3462, 0
      %v3794 = vsel %vm1312, %v3463, 0
      %v3797 = vsel %vm1312, %v3464, 0
      %v3800 = vsel %vm1312, %v3465, 0
      %v3803 = vsel %vm1312, %v3466, 0
      %v3806 = vsel %vm1312, %v3467, 0
      %v3809 = vsel %vm1312, %v3468, 0
      %v3812 = vsel %vm1312, %v3469, 0
      %v3815 = vsel %vm1312, %v3470, 0
      %v3818 = vsel %vm1312, %v3471, 0
      %v3821 = vsel %vm1312, %v3472, 0
      %3823 = vmatprep.subr.mxu0 0.0
      %3824 = vmatpush1.msra.mxu0 %v3767
      %3825 = vmatprep.subr.mxu0 0.0
      %3826 = vmatpush1.msra.mxu0 %v3768
      %3827 = vmatprep.subr.mxu0 0.0
      %3828 = vmatpush1.msra.mxu0 %v3769
      %3829 = vmatprep.subr.mxu0 0.0
      %3830 = vmatpush1.msra.mxu0 %v3770
      %3831 = vmatprep.subr.mxu0 0.0
      %3832 = vmatpush1.msra.mxu0 0.0
      %3833 = vmatprep.subr.mxu0 0.0
      %3834 = vmatpush1.msra.mxu0 0.0
      %3835 = vmatprep.subr.mxu0 0.0
      %3836 = vmatpush1.msra.mxu0 0.0
      %3837 = vmatprep.subr.mxu0 0.0
      %3838 = vmatpush1.msra.mxu0 0.0
      %3839 = vmatprep.subr.mxu0 0.0
      %3840 = vmatpush1.msra.mxu0 0.0
      %3841 = vmatprep.subr.mxu0 0.0
      %3842 = vmatpush1.msra.mxu0 0.0
      %3843 = vmatprep.subr.mxu0 0.0
      %3844 = vmatpush1.msra.mxu0 0.0
      %3845 = vmatprep.subr.mxu0 0.0
      %3846 = vmatpush1.msra.mxu0 0.0
      %3847 = vmatprep.subr.mxu0 0.0
      %3848 = vmatpush1.msra.mxu0 0.0
      %3849 = vmatprep.subr.mxu0 0.0
      %3850 = vmatpush1.msra.mxu0 0.0
      %3851 = vmatprep.subr.mxu0 0.0
      %3852 = vmatpush1.msra.mxu0 0.0
      %3853 = vmatprep.subr.mxu0 0.0
      %3854 = vmatpush1.msra.mxu0 0.0
      %3855 = vmatprep.subr.mxu0 0.0
      %3856 = vmatpush1.msra.mxu0 0.0
      %3857 = vmatprep.subr.mxu0 0.0
      %3858 = vmatpush1.msra.mxu0 0.0
      %3859 = vmatprep.subr.mxu0 0.0
      %3860 = vmatpush1.msra.mxu0 0.0
      %3861 = vmatprep.subr.mxu0 0.0
      %3862 = vmatpush1.msra.mxu0 0.0
      %3863 = vmatprep.subr.mxu0 0.0
      %3864 = vmatpush1.msra.mxu0 0.0
      %3865 = vmatprep.subr.mxu0 0.0
      %3866 = vmatpush1.msra.mxu0 0.0
      %3867 = vmatprep.subr.mxu0 0.0
      %3868 = vmatpush1.msra.mxu0 0.0
      %3869 = vmatprep.subr.mxu0 0.0
      %3870 = vmatpush1.msra.mxu0 0.0
      %3871 = vmatprep.subr.mxu0 0.0
      %3872 = vmatpush1.msra.mxu0 0.0
      %3873 = vmatprep.subr.mxu0 0.0
      %3874 = vmatpush1.msra.mxu0 0.0
      %3875 = vmatprep.subr.mxu0 0.0
      %3876 = vmatpush1.msra.mxu0 0.0
      %3877 = vmatprep.subr.mxu0 0.0
      %3878 = vmatpush1.msra.mxu0 0.0
      %3879 = vmatprep.subr.mxu0 0.0
      %3880 = vmatpush1.msra.mxu0 0.0
      %3881 = vmatprep.subr.mxu0 0.0
      %3882 = vmatpush1.msra.mxu0 0.0
      %3883 = vmatprep.subr.mxu0 0.0
      %3884 = vmatpush1.msra.mxu0 0.0
      %3885 = vmatprep.subr.mxu0 0.0
      %3886 = vmatpush1.msra.mxu0 0.0
      %3887 = vmatprep.mubr.f32.mxu0 0.0
      %3888 = vmatmul.mubr.f32.gmra.mrb[0].mxu0 %v3776
      %v3889 = vpop.f32.mrb[0].mxu0
      %v3890 = vadd.f32 %v3774, %v3889
      %v3891 = vpop.f32.mrb[0].mxu0
      %3892 = vmatprep.mubr.f32.mxu0 0.0
      %3893 = vmatmul.mubr.f32.gmra.mrb[0].mxu0 %v3779
      %v3894 = vpop.f32.mrb[0].mxu0
      %v3895 = vadd.f32 %v3774, %v3894
      %v3896 = vpop.f32.mrb[0].mxu0
      %3897 = vmatprep.mubr.f32.mxu0 0.0
      %3898 = vmatmul.mubr.f32.gmra.mrb[0].mxu0 %v3782
      %v3899 = vpop.f32.mrb[0].mxu0
      %v3900 = vadd.f32 %v3774, %v3899
      %v3901 = vpop.f32.mrb[0].mxu0
      %3902 = vmatprep.mubr.f32.mxu0 0.0
      %3903 = vmatmul.mubr.f32.gmra.mrb[0].mxu0 %v3785
      %v3904 = vpop.f32.mrb[0].mxu0
      %v3905 = vadd.f32 %v3774, %v3904
      %v3906 = vpop.f32.mrb[0].mxu0
      %3907 = vmatprep.mubr.f32.mxu0 0.0
      %3908 = vmatmul.mubr.f32.gmra.mrb[0].mxu0 %v3788
      %v3909 = vpop.f32.mrb[0].mxu0
      %v3910 = vadd.f32 %v3774, %v3909
      %v3911 = vpop.f32.mrb[0].mxu0
      %3912 = vmatprep.mubr.f32.mxu0 0.0
      %3913 = vmatmul.mubr.f32.gmra.mrb[0].mxu0 %v3791
      %v3914 = vpop.f32.mrb[0].mxu0
      %v3915 = vadd.f32 %v3774, %v3914
      %v3916 = vpop.f32.mrb[0].mxu0
      %3917 = vmatprep.mubr.f32.mxu0 0.0
      %3918 = vmatmul.mubr.f32.gmra.mrb[0].mxu0 %v3794
      %v3919 = vpop.f32.mrb[0].mxu0
      %v3920 = vadd.f32 %v3774, %v3919
      %v3921 = vpop.f32.mrb[0].mxu0
      %3922 = vmatprep.mubr.f32.mxu0 0.0
      %3923 = vmatmul.mubr.f32.gmra.mrb[0].mxu0 %v3797
      %v3924 = vpop.f32.mrb[0].mxu0
      %v3925 = vadd.f32 %v3774, %v3924
      %v3926 = vpop.f32.mrb[0].mxu0
      %3927 = vmatprep.mubr.f32.mxu0 0.0
      %3928 = vmatmul.mubr.f32.gmra.mrb[0].mxu0 %v3800
      %v3929 = vpop.f32.mrb[0].mxu0
      %v3930 = vadd.f32 %v3774, %v3929
      %v3931 = vpop.f32.mrb[0].mxu0
      %3932 = vmatprep.mubr.f32.mxu0 0.0
      %3933 = vmatmul.mubr.f32.gmra.mrb[0].mxu0 %v3803
      %v3934 = vpop.f32.mrb[0].mxu0
      %v3935 = vadd.f32 %v3774, %v3934
      %v3936 = vpop.f32.mrb[0].mxu0
      %3937 = vmatprep.mubr.f32.mxu0 0.0
      %3938 = vmatmul.mubr.f32.gmra.mrb[0].mxu0 %v3806
      %v3939 = vpop.f32.mrb[0].mxu0
      %v3940 = vadd.f32 %v3774, %v3939
      %v3941 = vpop.f32.mrb[0].mxu0
      %3942 = vmatprep.mubr.f32.mxu0 0.0
      %3943 = vmatmul.mubr.f32.gmra.mrb[0].mxu0 %v3809
      %v3944 = vpop.f32.mrb[0].mxu0
      %v3945 = vadd.f32 %v3774, %v3944
      %v3946 = vpop.f32.mrb[0].mxu0
      %3947 = vmatprep.mubr.f32.mxu0 0.0
      %3948 = vmatmul.mubr.f32.gmra.mrb[0].mxu0 %v3812
      %v3949 = vpop.f32.mrb[0].mxu0
      %v3950 = vadd.f32 %v3774, %v3949
      %v3951 = vpop.f32.mrb[0].mxu0
      %3952 = vmatprep.mubr.f32.mxu0 0.0
      %3953 = vmatmul.mubr.f32.gmra.mrb[0].mxu0 %v3815
      %v3954 = vpop.f32.mrb[0].mxu0
      %v3955 = vadd.f32 %v3774, %v3954
      %v3956 = vpop.f32.mrb[0].mxu0
      %3957 = vmatprep.mubr.f32.mxu0 0.0
      %3958 = vmatmul.mubr.f32.gmra.mrb[0].mxu0 %v3818
      %v3959 = vpop.f32.mrb[0].mxu0
      %v3960 = vadd.f32 %v3774, %v3959
      %v3961 = vpop.f32.mrb[0].mxu0
      %3962 = vmatprep.mubr.f32.mxu0 0.0
      %3963 = vmatmul.mubr.f32.gmra.mrb[0].mxu0 %v3821
      %v3964 = vpop.f32.mrb[0].mxu0
      %v3965 = vadd.f32 %v3774, %v3964
      %v3966 = vpop.f32.mrb[0].mxu0
      %3967 = vdwg.mxu0
      %v3968 = vxor.u32 %v3890, 2147483648
      %v3969 = vxor.u32 %v3895, 2147483648
      %v3970 = vxor.u32 %v3900, 2147483648
      %v3971 = vxor.u32 %v3905, 2147483648
      %v3972 = vxor.u32 %v3910, 2147483648
      %v3973 = vxor.u32 %v3915, 2147483648
      %v3974 = vxor.u32 %v3920, 2147483648
      %v3975 = vxor.u32 %v3925, 2147483648
      %v3976 = vxor.u32 %v3930, 2147483648
      %v3977 = vxor.u32 %v3935, 2147483648
      %v3978 = vxor.u32 %v3940, 2147483648
      %v3979 = vxor.u32 %v3945, 2147483648
      %v3980 = vxor.u32 %v3950, 2147483648
      %v3981 = vxor.u32 %v3955, 2147483648
      %v3982 = vxor.u32 %v3960, 2147483648
      %v3983 = vxor.u32 %v3965, 2147483648
      %v3984 = vmul.f32 %v3968, 1.442695
      %v3985 = vpow.pop %v3984
      %v3986 = vmul.f32 %v3969, 1.442695
      %v3987 = vpow.pop %v3986
      %v3988 = vmul.f32 %v3970, 1.442695
      %v3989 = vpow.pop %v3988
      %v3990 = vmul.f32 %v3971, 1.442695
      %v3991 = vpow.pop %v3990
      %v3992 = vmul.f32 %v3972, 1.442695
      %v3993 = vpow.pop %v3992
      %v3994 = vmul.f32 %v3973, 1.442695
      %v3995 = vpow.pop %v3994
      %v3996 = vmul.f32 %v3974, 1.442695
      %v3997 = vpow.pop %v3996
      %v3998 = vmul.f32 %v3975, 1.442695
      %v3999 = vpow.pop %v3998
      %v4000 = vmul.f32 %v3976, 1.442695
      %v4001 = vpow.pop %v4000
      %v4002 = vmul.f32 %v3977, 1.442695
      %v4003 = vpow.pop %v4002
      %v4004 = vmul.f32 %v3978, 1.442695
      %v4005 = vpow.pop %v4004
      %v4006 = vmul.f32 %v3979, 1.442695
      %v4007 = vpow.pop %v4006
      %v4008 = vmul.f32 %v3980, 1.442695
      %v4009 = vpow.pop %v4008
      %v4010 = vmul.f32 %v3981, 1.442695
      %v4011 = vpow.pop %v4010
      %v4012 = vmul.f32 %v3982, 1.442695
      %v4013 = vpow.pop %v4012
      %v4014 = vmul.f32 %v3983, 1.442695
      %v4015 = vpow.pop %v4014
      %v4016 = vadd.f32 %v3985, 1.0
      %v4017 = vadd.f32 %v3987, 1.0
      %v4018 = vadd.f32 %v3989, 1.0
      %v4019 = vadd.f32 %v3991, 1.0
      %v4020 = vadd.f32 %v3993, 1.0
      %v4021 = vadd.f32 %v3995, 1.0
      %v4022 = vadd.f32 %v3997, 1.0
      %v4023 = vadd.f32 %v3999, 1.0
      %v4024 = vadd.f32 %v4001, 1.0
      %v4025 = vadd.f32 %v4003, 1.0
      %v4026 = vadd.f32 %v4005, 1.0
      %v4027 = vadd.f32 %v4007, 1.0
      %v4028 = vadd.f32 %v4009, 1.0
      %v4029 = vadd.f32 %v4011, 1.0
      %v4030 = vadd.f32 %v4013, 1.0
      %v4031 = vadd.f32 %v4015, 1.0
      %v4032 = vrcp.pop %v4016
      %v4033 = vmul.f32 1.0, %v4032
      %v4034 = vrcp.pop %v4017
      %v4035 = vmul.f32 1.0, %v4034
      %v4036 = vrcp.pop %v4018
      %v4037 = vmul.f32 1.0, %v4036
      %v4038 = vrcp.pop %v4019
      %v4039 = vmul.f32 1.0, %v4038
      %v4040 = vrcp.pop %v4020
      %v4041 = vmul.f32 1.0, %v4040
      %v4042 = vrcp.pop %v4021
      %v4043 = vmul.f32 1.0, %v4042
      %v4044 = vrcp.pop %v4022
      %v4045 = vmul.f32 1.0, %v4044
      %v4046 = vrcp.pop %v4023
      %v4047 = vmul.f32 1.0, %v4046
      %v4048 = vrcp.pop %v4024
      %v4049 = vmul.f32 1.0, %v4048
      %v4050 = vrcp.pop %v4025
      %v4051 = vmul.f32 1.0, %v4050
      %v4052 = vrcp.pop %v4026
      %v4053 = vmul.f32 1.0, %v4052
      %v4054 = vrcp.pop %v4027
      %v4055 = vmul.f32 1.0, %v4054
      %v4056 = vrcp.pop %v4028
      %v4057 = vmul.f32 1.0, %v4056
      %v4058 = vrcp.pop %v4029
      %v4059 = vmul.f32 1.0, %v4058
      %v4060 = vrcp.pop %v4030
      %v4061 = vmul.f32 1.0, %v4060
      %v4062 = vrcp.pop %v4031
      %v4063 = vmul.f32 1.0, %v4062
      %v4064 = vmul.f32 %v3890, %v4033
      %v4065 = vmul.f32 %v3895, %v4035
      %v4066 = vmul.f32 %v3900, %v4037
      %v4067 = vmul.f32 %v3905, %v4039
      %v4068 = vmul.f32 %v3910, %v4041
      %v4069 = vmul.f32 %v3915, %v4043
      %v4070 = vmul.f32 %v3920, %v4045
      %v4071 = vmul.f32 %v3925, %v4047
      %v4072 = vmul.f32 %v3930, %v4049
      %v4073 = vmul.f32 %v3935, %v4051
      %v4074 = vmul.f32 %v3940, %v4053
      %v4075 = vmul.f32 %v3945, %v4055
      %v4076 = vmul.f32 %v3950, %v4057
      %v4077 = vmul.f32 %v3955, %v4059
      %v4078 = vmul.f32 %v3960, %v4061
      %v4079 = vmul.f32 %v3965, %v4063
      %s4080 = scalar_lea.vmem %s12, 32
      %v4081 = vld [vmem:[%s4080] sm:$0xff]
      %v4082 = vld [vmem:[%s4080 + $0x8] sm:$0xff]
      %v4083 = vld [vmem:[%s4080 + $0x10] sm:$0xff]
      %v4084 = vld [vmem:[%s4080 + $0x18] sm:$0xff]
      %v4085 = vlaneseq
      %v4086 = vshrl.u32 %v4085, 7
      %v4087 = vsub.s32 0, %v4086
      %v4088 = vrot.slane %v3764, %v4087
      %v4090 = vsel %vm1312, %v4064, 0
      %v4093 = vsel %vm1312, %v4065, 0
      %v4096 = vsel %vm1312, %v4066, 0
      %v4099 = vsel %vm1312, %v4067, 0
      %v4102 = vsel %vm1312, %v4068, 0
      %v4105 = vsel %vm1312, %v4069, 0
      %v4108 = vsel %vm1312, %v4070, 0
      %v4111 = vsel %vm1312, %v4071, 0
      %v4114 = vsel %vm1312, %v4072, 0
      %v4117 = vsel %vm1312, %v4073, 0
      %v4120 = vsel %vm1312, %v4074, 0
      %v4123 = vsel %vm1312, %v4075, 0
      %v4126 = vsel %vm1312, %v4076, 0
      %v4129 = vsel %vm1312, %v4077, 0
      %v4132 = vsel %vm1312, %v4078, 0
      %v4135 = vsel %vm1312, %v4079, 0
      %4137 = vmatprep.subr.mxu0 0.0
      %4138 = vmatpush1.msra.mxu0 %v4081
      %4139 = vmatprep.subr.mxu0 0.0
      %4140 = vmatpush1.msra.mxu0 %v4082
      %4141 = vmatprep.subr.mxu0 0.0
      %4142 = vmatpush1.msra.mxu0 %v4083
      %4143 = vmatprep.subr.mxu0 0.0
      %4144 = vmatpush1.msra.mxu0 %v4084
      %4145 = vmatprep.subr.mxu0 0.0
      %4146 = vmatpush1.msra.mxu0 0.0
      %4147 = vmatprep.subr.mxu0 0.0
      %4148 = vmatpush1.msra.mxu0 0.0
      %4149 = vmatprep.subr.mxu0 0.0
      %4150 = vmatpush1.msra.mxu0 0.0
      %4151 = vmatprep.subr.mxu0 0.0
      %4152 = vmatpush1.msra.mxu0 0.0
      %4153 = vmatprep.subr.mxu0 0.0
      %4154 = vmatpush1.msra.mxu0 0.0
      %4155 = vmatprep.subr.mxu0 0.0
      %4156 = vmatpush1.msra.mxu0 0.0
      %4157 = vmatprep.subr.mxu0 0.0
      %4158 = vmatpush1.msra.mxu0 0.0
      %4159 = vmatprep.subr.mxu0 0.0
      %4160 = vmatpush1.msra.mxu0 0.0
      %4161 = vmatprep.subr.mxu0 0.0
      %4162 = vmatpush1.msra.mxu0 0.0
      %4163 = vmatprep.subr.mxu0 0.0
      %4164 = vmatpush1.msra.mxu0 0.0
      %4165 = vmatprep.subr.mxu0 0.0
      %4166 = vmatpush1.msra.mxu0 0.0
      %4167 = vmatprep.subr.mxu0 0.0
      %4168 = vmatpush1.msra.mxu0 0.0
      %4169 = vmatprep.subr.mxu0 0.0
      %4170 = vmatpush1.msra.mxu0 0.0
      %4171 = vmatprep.subr.mxu0 0.0
      %4172 = vmatpush1.msra.mxu0 0.0
      %4173 = vmatprep.subr.mxu0 0.0
      %4174 = vmatpush1.msra.mxu0 0.0
      %4175 = vmatprep.subr.mxu0 0.0
      %4176 = vmatpush1.msra.mxu0 0.0
      %4177 = vmatprep.subr.mxu0 0.0
      %4178 = vmatpush1.msra.mxu0 0.0
      %4179 = vmatprep.subr.mxu0 0.0
      %4180 = vmatpush1.msra.mxu0 0.0
      %4181 = vmatprep.subr.mxu0 0.0
      %4182 = vmatpush1.msra.mxu0 0.0
      %4183 = vmatprep.subr.mxu0 0.0
      %4184 = vmatpush1.msra.mxu0 0.0
      %4185 = vmatprep.subr.mxu0 0.0
      %4186 = vmatpush1.msra.mxu0 0.0
      %4187 = vmatprep.subr.mxu0 0.0
      %4188 = vmatpush1.msra.mxu0 0.0
      %4189 = vmatprep.subr.mxu0 0.0
      %4190 = vmatpush1.msra.mxu0 0.0
      %4191 = vmatprep.subr.mxu0 0.0
      %4192 = vmatpush1.msra.mxu0 0.0
      %4193 = vmatprep.subr.mxu0 0.0
      %4194 = vmatpush1.msra.mxu0 0.0
      %4195 = vmatprep.subr.mxu0 0.0
      %4196 = vmatpush1.msra.mxu0 0.0
      %4197 = vmatprep.subr.mxu0 0.0
      %4198 = vmatpush1.msra.mxu0 0.0
      %4199 = vmatprep.subr.mxu0 0.0
      %4200 = vmatpush1.msra.mxu0 0.0
      %4201 = vmatprep.mubr.f32.mxu0 0.0
      %4202 = vmatmul.mubr.f32.gmra.mrb[0].mxu0 %v4090
      %v4203 = vpop.f32.mrb[0].mxu0
      %v4204 = vadd.f32 %v4088, %v4203
      %v4205 = vpop.f32.mrb[0].mxu0
      %4206 = vmatprep.mubr.f32.mxu0 0.0
      %4207 = vmatmul.mubr.f32.gmra.mrb[0].mxu0 %v4093
      %v4208 = vpop.f32.mrb[0].mxu0
      %v4209 = vadd.f32 %v4088, %v4208
      %v4210 = vpop.f32.mrb[0].mxu0
      %4211 = vmatprep.mubr.f32.mxu0 0.0
      %4212 = vmatmul.mubr.f32.gmra.mrb[0].mxu0 %v4096
      %v4213 = vpop.f32.mrb[0].mxu0
      %v4214 = vadd.f32 %v4088, %v4213
      %v4215 = vpop.f32.mrb[0].mxu0
      %4216 = vmatprep.mubr.f32.mxu0 0.0
      %4217 = vmatmul.mubr.f32.gmra.mrb[0].mxu0 %v4099
      %v4218 = vpop.f32.mrb[0].mxu0
      %v4219 = vadd.f32 %v4088, %v4218
      %v4220 = vpop.f32.mrb[0].mxu0
      %4221 = vmatprep.mubr.f32.mxu0 0.0
      %4222 = vmatmul.mubr.f32.gmra.mrb[0].mxu0 %v4102
      %v4223 = vpop.f32.mrb[0].mxu0
      %v4224 = vadd.f32 %v4088, %v4223
      %v4225 = vpop.f32.mrb[0].mxu0
      %4226 = vmatprep.mubr.f32.mxu0 0.0
      %4227 = vmatmul.mubr.f32.gmra.mrb[0].mxu0 %v4105
      %v4228 = vpop.f32.mrb[0].mxu0
      %v4229 = vadd.f32 %v4088, %v4228
      %v4230 = vpop.f32.mrb[0].mxu0
      %4231 = vmatprep.mubr.f32.mxu0 0.0
      %4232 = vmatmul.mubr.f32.gmra.mrb[0].mxu0 %v4108
      %v4233 = vpop.f32.mrb[0].mxu0
      %v4234 = vadd.f32 %v4088, %v4233
      %v4235 = vpop.f32.mrb[0].mxu0
      %4236 = vmatprep.mubr.f32.mxu0 0.0
      %4237 = vmatmul.mubr.f32.gmra.mrb[0].mxu0 %v4111
      %v4238 = vpop.f32.mrb[0].mxu0
      %v4239 = vadd.f32 %v4088, %v4238
      %v4240 = vpop.f32.mrb[0].mxu0
      %4241 = vmatprep.mubr.f32.mxu0 0.0
      %4242 = vmatmul.mubr.f32.gmra.mrb[0].mxu0 %v4114
      %v4243 = vpop.f32.mrb[0].mxu0
      %v4244 = vadd.f32 %v4088, %v4243
      %v4245 = vpop.f32.mrb[0].mxu0
      %4246 = vmatprep.mubr.f32.mxu0 0.0
      %4247 = vmatmul.mubr.f32.gmra.mrb[0].mxu0 %v4117
      %v4248 = vpop.f32.mrb[0].mxu0
      %v4249 = vadd.f32 %v4088, %v4248
      %v4250 = vpop.f32.mrb[0].mxu0
      %4251 = vmatprep.mubr.f32.mxu0 0.0
      %4252 = vmatmul.mubr.f32.gmra.mrb[0].mxu0 %v4120
      %v4253 = vpop.f32.mrb[0].mxu0
      %v4254 = vadd.f32 %v4088, %v4253
      %v4255 = vpop.f32.mrb[0].mxu0
      %4256 = vmatprep.mubr.f32.mxu0 0.0
      %4257 = vmatmul.mubr.f32.gmra.mrb[0].mxu0 %v4123
      %v4258 = vpop.f32.mrb[0].mxu0
      %v4259 = vadd.f32 %v4088, %v4258
      %v4260 = vpop.f32.mrb[0].mxu0
      %4261 = vmatprep.mubr.f32.mxu0 0.0
      %4262 = vmatmul.mubr.f32.gmra.mrb[0].mxu0 %v4126
      %v4263 = vpop.f32.mrb[0].mxu0
      %v4264 = vadd.f32 %v4088, %v4263
      %v4265 = vpop.f32.mrb[0].mxu0
      %4266 = vmatprep.mubr.f32.mxu0 0.0
      %4267 = vmatmul.mubr.f32.gmra.mrb[0].mxu0 %v4129
      %v4268 = vpop.f32.mrb[0].mxu0
      %v4269 = vadd.f32 %v4088, %v4268
      %v4270 = vpop.f32.mrb[0].mxu0
      %4271 = vmatprep.mubr.f32.mxu0 0.0
      %4272 = vmatmul.mubr.f32.gmra.mrb[0].mxu0 %v4132
      %v4273 = vpop.f32.mrb[0].mxu0
      %v4274 = vadd.f32 %v4088, %v4273
      %v4275 = vpop.f32.mrb[0].mxu0
      %4276 = vmatprep.mubr.f32.mxu0 0.0
      %4277 = vmatmul.mubr.f32.gmra.mrb[0].mxu0 %v4135
      %v4278 = vpop.f32.mrb[0].mxu0
      %v4279 = vadd.f32 %v4088, %v4278
      %v4280 = vpop.f32.mrb[0].mxu0
      %4281 = vdwg.mxu0
      %v4282 = vxor.u32 %v4204, 2147483648
      %v4283 = vxor.u32 %v4209, 2147483648
      %v4284 = vxor.u32 %v4214, 2147483648
      %v4285 = vxor.u32 %v4219, 2147483648
      %v4286 = vxor.u32 %v4224, 2147483648
      %v4287 = vxor.u32 %v4229, 2147483648
      %v4288 = vxor.u32 %v4234, 2147483648
      %v4289 = vxor.u32 %v4239, 2147483648
      %v4290 = vxor.u32 %v4244, 2147483648
      %v4291 = vxor.u32 %v4249, 2147483648
      %v4292 = vxor.u32 %v4254, 2147483648
      %v4293 = vxor.u32 %v4259, 2147483648
      %v4294 = vxor.u32 %v4264, 2147483648
      %v4295 = vxor.u32 %v4269, 2147483648
      %v4296 = vxor.u32 %v4274, 2147483648
      %v4297 = vxor.u32 %v4279, 2147483648
      %v4298 = vmul.f32 %v4282, 1.442695
      %v4299 = vpow.pop %v4298
      %v4300 = vmul.f32 %v4283, 1.442695
      %v4301 = vpow.pop %v4300
      %v4302 = vmul.f32 %v4284, 1.442695
      %v4303 = vpow.pop %v4302
      %v4304 = vmul.f32 %v4285, 1.442695
      %v4305 = vpow.pop %v4304
      %v4306 = vmul.f32 %v4286, 1.442695
      %v4307 = vpow.pop %v4306
      %v4308 = vmul.f32 %v4287, 1.442695
      %v4309 = vpow.pop %v4308
      %v4310 = vmul.f32 %v4288, 1.442695
      %v4311 = vpow.pop %v4310
      %v4312 = vmul.f32 %v4289, 1.442695
      %v4313 = vpow.pop %v4312
      %v4314 = vmul.f32 %v4290, 1.442695
      %v4315 = vpow.pop %v4314
      %v4316 = vmul.f32 %v4291, 1.442695
      %v4317 = vpow.pop %v4316
      %v4318 = vmul.f32 %v4292, 1.442695
      %v4319 = vpow.pop %v4318
      %v4320 = vmul.f32 %v4293, 1.442695
      %v4321 = vpow.pop %v4320
      %v4322 = vmul.f32 %v4294, 1.442695
      %v4323 = vpow.pop %v4322
      %v4324 = vmul.f32 %v4295, 1.442695
      %v4325 = vpow.pop %v4324
      %v4326 = vmul.f32 %v4296, 1.442695
      %v4327 = vpow.pop %v4326
      %v4328 = vmul.f32 %v4297, 1.442695
      %v4329 = vpow.pop %v4328
      %v4330 = vadd.f32 %v4299, 1.0
      %v4331 = vadd.f32 %v4301, 1.0
      %v4332 = vadd.f32 %v4303, 1.0
      %v4333 = vadd.f32 %v4305, 1.0
      %v4334 = vadd.f32 %v4307, 1.0
      %v4335 = vadd.f32 %v4309, 1.0
      %v4336 = vadd.f32 %v4311, 1.0
      %v4337 = vadd.f32 %v4313, 1.0
      %v4338 = vadd.f32 %v4315, 1.0
      %v4339 = vadd.f32 %v4317, 1.0
      %v4340 = vadd.f32 %v4319, 1.0
      %v4341 = vadd.f32 %v4321, 1.0
      %v4342 = vadd.f32 %v4323, 1.0
      %v4343 = vadd.f32 %v4325, 1.0
      %v4344 = vadd.f32 %v4327, 1.0
      %v4345 = vadd.f32 %v4329, 1.0
      %v4346 = vrcp.pop %v4330
      %v4347 = vmul.f32 1.0, %v4346
      %v4348 = vrcp.pop %v4331
      %v4349 = vmul.f32 1.0, %v4348
      %v4350 = vrcp.pop %v4332
      %v4351 = vmul.f32 1.0, %v4350
      %v4352 = vrcp.pop %v4333
      %v4353 = vmul.f32 1.0, %v4352
      %v4354 = vrcp.pop %v4334
      %v4355 = vmul.f32 1.0, %v4354
      %v4356 = vrcp.pop %v4335
      %v4357 = vmul.f32 1.0, %v4356
      %v4358 = vrcp.pop %v4336
      %v4359 = vmul.f32 1.0, %v4358
      %v4360 = vrcp.pop %v4337
      %v4361 = vmul.f32 1.0, %v4360
      %v4362 = vrcp.pop %v4338
      %v4363 = vmul.f32 1.0, %v4362
      %v4364 = vrcp.pop %v4339
      %v4365 = vmul.f32 1.0, %v4364
      %v4366 = vrcp.pop %v4340
      %v4367 = vmul.f32 1.0, %v4366
      %v4368 = vrcp.pop %v4341
      %v4369 = vmul.f32 1.0, %v4368
      %v4370 = vrcp.pop %v4342
      %v4371 = vmul.f32 1.0, %v4370
      %v4372 = vrcp.pop %v4343
      %v4373 = vmul.f32 1.0, %v4372
      %v4374 = vrcp.pop %v4344
      %v4375 = vmul.f32 1.0, %v4374
      %v4376 = vrcp.pop %v4345
      %v4377 = vmul.f32 1.0, %v4376
      %v4378 = vmul.f32 %v4204, %v4347
      %v4379 = vmul.f32 %v4209, %v4349
      %v4380 = vmul.f32 %v4214, %v4351
      %v4381 = vmul.f32 %v4219, %v4353
      %v4382 = vmul.f32 %v4224, %v4355
      %v4383 = vmul.f32 %v4229, %v4357
      %v4384 = vmul.f32 %v4234, %v4359
      %v4385 = vmul.f32 %v4239, %v4361
      %v4386 = vmul.f32 %v4244, %v4363
      %v4387 = vmul.f32 %v4249, %v4365
      %v4388 = vmul.f32 %v4254, %v4367
      %v4389 = vmul.f32 %v4259, %v4369
      %v4390 = vmul.f32 %v4264, %v4371
      %v4391 = vmul.f32 %v4269, %v4373
      %v4392 = vmul.f32 %v4274, %v4375
      %v4393 = vmul.f32 %v4279, %v4377
      %v4394 = vlaneseq
      %v4395 = vshrl.u32 %v4394, 7
      %v4396 = vsub.s32 0, %v4395
      %v4397 = vrot.slane %v3765, %v4396
      %v4398 = vmul.f32 %v4378, %v4397
      %v4399 = vmul.f32 %v4379, %v4397
      %v4400 = vmul.f32 %v4380, %v4397
      %v4401 = vmul.f32 %v4381, %v4397
      %v4402 = vmul.f32 %v4382, %v4397
      %v4403 = vmul.f32 %v4383, %v4397
      %v4404 = vmul.f32 %v4384, %v4397
      %v4405 = vmul.f32 %v4385, %v4397
      %v4406 = vmul.f32 %v4386, %v4397
      %v4407 = vmul.f32 %v4387, %v4397
      %v4408 = vmul.f32 %v4388, %v4397
      %v4409 = vmul.f32 %v4389, %v4397
      %v4410 = vmul.f32 %v4390, %v4397
      %v4411 = vmul.f32 %v4391, %v4397
      %v4412 = vmul.f32 %v4392, %v4397
      %v4413 = vmul.f32 %v4393, %v4397
      %v4414 = vsel %vm1312, %v4398, 0.0
      %4415 = vadd.xlane.f32.xlu0 %v4414
      %v4416 = vpop.xlane.xlu0 %4415
      %v4417 = vsel %vm1312, %v4399, 0.0
      %4418 = vadd.xlane.f32.xlu0 %v4417
      %v4419 = vpop.xlane.xlu0 %4418
      %v4420 = vsel %vm1312, %v4400, 0.0
      %4421 = vadd.xlane.f32.xlu0 %v4420
      %v4422 = vpop.xlane.xlu0 %4421
      %v4423 = vsel %vm1312, %v4401, 0.0
      %4424 = vadd.xlane.f32.xlu0 %v4423
      %v4425 = vpop.xlane.xlu0 %4424
      %v4426 = vsel %vm1312, %v4402, 0.0
      %4427 = vadd.xlane.f32.xlu0 %v4426
      %v4428 = vpop.xlane.xlu0 %4427
      %v4429 = vsel %vm1312, %v4403, 0.0
      %4430 = vadd.xlane.f32.xlu0 %v4429
      %v4431 = vpop.xlane.xlu0 %4430
      %v4432 = vsel %vm1312, %v4404, 0.0
      %4433 = vadd.xlane.f32.xlu0 %v4432
      %v4434 = vpop.xlane.xlu0 %4433
      %v4435 = vsel %vm1312, %v4405, 0.0
      %4436 = vadd.xlane.f32.xlu0 %v4435
      %v4437 = vpop.xlane.xlu0 %4436
      %v4438 = vsel %vm1312, %v4406, 0.0
      %4439 = vadd.xlane.f32.xlu0 %v4438
      %v4440 = vpop.xlane.xlu0 %4439
      %v4441 = vsel %vm1312, %v4407, 0.0
      %4442 = vadd.xlane.f32.xlu0 %v4441
      %v4443 = vpop.xlane.xlu0 %4442
      %v4444 = vsel %vm1312, %v4408, 0.0
      %4445 = vadd.xlane.f32.xlu0 %v4444
      %v4446 = vpop.xlane.xlu0 %4445
      %v4447 = vsel %vm1312, %v4409, 0.0
      %4448 = vadd.xlane.f32.xlu0 %v4447
      %v4449 = vpop.xlane.xlu0 %4448
      %v4450 = vsel %vm1312, %v4410, 0.0
      %4451 = vadd.xlane.f32.xlu0 %v4450
      %v4452 = vpop.xlane.xlu0 %4451
      %v4453 = vsel %vm1312, %v4411, 0.0
      %4454 = vadd.xlane.f32.xlu0 %v4453
      %v4455 = vpop.xlane.xlu0 %4454
      %v4456 = vsel %vm1312, %v4412, 0.0
      %4457 = vadd.xlane.f32.xlu0 %v4456
      %v4458 = vpop.xlane.xlu0 %4457
      %v4459 = vsel %vm1312, %v4413, 0.0
      %4460 = vadd.xlane.f32.xlu0 %v4459
      %v4461 = vpop.xlane.xlu0 %4460
      %v4462 = vlaneseq
      %v4463 = vshrl.u32 %v4462, 7
      %v4464 = vsub.s32 0, %v4463
      %v4465 = vrot.slane %v3766, %v4464
      %v4466 = vadd.f32 %v4416, %v4465
      %v4467 = vadd.f32 %v4419, %v4465
      %v4468 = vadd.f32 %v4422, %v4465
      %v4469 = vadd.f32 %v4425, %v4465
      %v4470 = vadd.f32 %v4428, %v4465
      %v4471 = vadd.f32 %v4431, %v4465
      %v4472 = vadd.f32 %v4434, %v4465
      %v4473 = vadd.f32 %v4437, %v4465
      %v4474 = vadd.f32 %v4440, %v4465
      %v4475 = vadd.f32 %v4443, %v4465
      %v4476 = vadd.f32 %v4446, %v4465
      %v4477 = vadd.f32 %v4449, %v4465
      %v4478 = vadd.f32 %v4452, %v4465
      %v4479 = vadd.f32 %v4455, %v4465
      %v4480 = vadd.f32 %v4458, %v4465
      %v4481 = vadd.f32 %v4461, %v4465
      %v4482 = vld [vmem:[%s13] sm:$0xff]
      %v4483 = vld [vmem:[%s13 + $0x8] sm:$0xff]
      %v4484 = vld [vmem:[%s13 + $0x10] sm:$0xff]
      %v4485 = vld [vmem:[%s13 + $0x18] sm:$0xff]
      %v4486 = vld [vmem:[%s13 + $0x20] sm:$0xff]
      %v4487 = vld [vmem:[%s13 + $0x28] sm:$0xff]
      %v4488 = vld [vmem:[%s13 + $0x30] sm:$0xff]
      %v4489 = vld [vmem:[%s13 + $0x38] sm:$0xff]
      %v4490 = vld [vmem:[%s13 + $0x40] sm:$0xff]
      %v4491 = vld [vmem:[%s13 + $0x48] sm:$0xff]
      %v4492 = vld [vmem:[%s13 + $0x50] sm:$0xff]
      %v4493 = vld [vmem:[%s13 + $0x58] sm:$0xff]
      %v4494 = vld [vmem:[%s13 + $0x60] sm:$0xff]
      %v4495 = vld [vmem:[%s13 + $0x68] sm:$0xff]
      %v4496 = vld [vmem:[%s13 + $0x70] sm:$0xff]
      %v4498 = vsel %vm581, %v3747, 0
      %v4501 = vsel %vm581, %v3748, 0
      %v4504 = vsel %vm581, %v3749, 0
      %v4507 = vsel %vm581, %v3750, 0
      %v4510 = vsel %vm581, %v3751, 0
      %v4513 = vsel %vm581, %v3752, 0
      %v4516 = vsel %vm581, %v3753, 0
      %v4519 = vsel %vm581, %v3754, 0
      %v4522 = vsel %vm581, %v3755, 0
      %v4525 = vsel %vm581, %v3756, 0
      %v4528 = vsel %vm581, %v3757, 0
      %v4531 = vsel %vm581, %v3758, 0
      %v4534 = vsel %vm581, %v3759, 0
      %v4537 = vsel %vm581, %v3760, 0
      %v4540 = vsel %vm581, %v3761, 0
      %v4543 = vsel %vm581, %v3762, 0
      %4545 = vmatprep.subr.mxu0 0.0
      %4546 = vmatpush1.msra.mxu0 %v4482
      %4547 = vmatprep.subr.mxu0 0.0
      %4548 = vmatpush1.msra.mxu0 %v4483
      %4549 = vmatprep.subr.mxu0 0.0
      %4550 = vmatpush1.msra.mxu0 %v4484
      %4551 = vmatprep.subr.mxu0 0.0
      %4552 = vmatpush1.msra.mxu0 %v4485
      %4553 = vmatprep.subr.mxu0 0.0
      %4554 = vmatpush1.msra.mxu0 %v4486
      %4555 = vmatprep.subr.mxu0 0.0
      %4556 = vmatpush1.msra.mxu0 %v4487
      %4557 = vmatprep.subr.mxu0 0.0
      %4558 = vmatpush1.msra.mxu0 %v4488
      %4559 = vmatprep.subr.mxu0 0.0
      %4560 = vmatpush1.msra.mxu0 %v4489
      %4561 = vmatprep.subr.mxu0 0.0
      %4562 = vmatpush1.msra.mxu0 %v4490
      %4563 = vmatprep.subr.mxu0 0.0
      %4564 = vmatpush1.msra.mxu0 %v4491
      %4565 = vmatprep.subr.mxu0 0.0
      %4566 = vmatpush1.msra.mxu0 %v4492
      %4567 = vmatprep.subr.mxu0 0.0
      %4568 = vmatpush1.msra.mxu0 %v4493
      %4569 = vmatprep.subr.mxu0 0.0
      %4570 = vmatpush1.msra.mxu0 %v4494
      %4571 = vmatprep.subr.mxu0 0.0
      %4572 = vmatpush1.msra.mxu0 %v4495
      %4573 = vmatprep.subr.mxu0 0.0
      %4574 = vmatpush1.msra.mxu0 %v4496
      %4575 = vmatprep.subr.mxu0 0.0
      %4576 = vmatpush1.msra.mxu0 0.0
      %4577 = vmatprep.subr.mxu0 0.0
      %4578 = vmatpush1.msra.mxu0 0.0
      %4579 = vmatprep.subr.mxu0 0.0
      %4580 = vmatpush1.msra.mxu0 0.0
      %4581 = vmatprep.subr.mxu0 0.0
      %4582 = vmatpush1.msra.mxu0 0.0
      %4583 = vmatprep.subr.mxu0 0.0
      %4584 = vmatpush1.msra.mxu0 0.0
      %4585 = vmatprep.subr.mxu0 0.0
      %4586 = vmatpush1.msra.mxu0 0.0
      %4587 = vmatprep.subr.mxu0 0.0
      %4588 = vmatpush1.msra.mxu0 0.0
      %4589 = vmatprep.subr.mxu0 0.0
      %4590 = vmatpush1.msra.mxu0 0.0
      %4591 = vmatprep.subr.mxu0 0.0
      %4592 = vmatpush1.msra.mxu0 0.0
      %4593 = vmatprep.subr.mxu0 0.0
      %4594 = vmatpush1.msra.mxu0 0.0
      %4595 = vmatprep.subr.mxu0 0.0
      %4596 = vmatpush1.msra.mxu0 0.0
      %4597 = vmatprep.subr.mxu0 0.0
      %4598 = vmatpush1.msra.mxu0 0.0
      %4599 = vmatprep.subr.mxu0 0.0
      %4600 = vmatpush1.msra.mxu0 0.0
      %4601 = vmatprep.subr.mxu0 0.0
      %4602 = vmatpush1.msra.mxu0 0.0
      %4603 = vmatprep.subr.mxu0 0.0
      %4604 = vmatpush1.msra.mxu0 0.0
      %4605 = vmatprep.subr.mxu0 0.0
      %4606 = vmatpush1.msra.mxu0 0.0
      %4607 = vmatprep.subr.mxu0 0.0
      %4608 = vmatpush1.msra.mxu0 0.0
      %4609 = vmatprep.mubr.f32.mxu0 0.0
      %4610 = vmatmul.mubr.f32.gmra.mrb[0].mxu0 %v4498
      %v4611 = vpop.f32.mrb[0].mxu0
      %v4612 = vadd.f32 0.0, %v4611
      %v4613 = vpop.f32.mrb[0].mxu0
      %4614 = vmatprep.mubr.f32.mxu0 0.0
      %4615 = vmatmul.mubr.f32.gmra.mrb[0].mxu0 %v4501
      %v4616 = vpop.f32.mrb[0].mxu0
      %v4617 = vadd.f32 0.0, %v4616
      %v4618 = vpop.f32.mrb[0].mxu0
      %4619 = vmatprep.mubr.f32.mxu0 0.0
      %4620 = vmatmul.mubr.f32.gmra.mrb[0].mxu0 %v4504
      %v4621 = vpop.f32.mrb[0].mxu0
      %v4622 = vadd.f32 0.0, %v4621
      %v4623 = vpop.f32.mrb[0].mxu0
      %4624 = vmatprep.mubr.f32.mxu0 0.0
      %4625 = vmatmul.mubr.f32.gmra.mrb[0].mxu0 %v4507
      %v4626 = vpop.f32.mrb[0].mxu0
      %v4627 = vadd.f32 0.0, %v4626
      %v4628 = vpop.f32.mrb[0].mxu0
      %4629 = vmatprep.mubr.f32.mxu0 0.0
      %4630 = vmatmul.mubr.f32.gmra.mrb[0].mxu0 %v4510
      %v4631 = vpop.f32.mrb[0].mxu0
      %v4632 = vadd.f32 0.0, %v4631
      %v4633 = vpop.f32.mrb[0].mxu0
      %4634 = vmatprep.mubr.f32.mxu0 0.0
      %4635 = vmatmul.mubr.f32.gmra.mrb[0].mxu0 %v4513
      %v4636 = vpop.f32.mrb[0].mxu0
      %v4637 = vadd.f32 0.0, %v4636
      %v4638 = vpop.f32.mrb[0].mxu0
      %4639 = vmatprep.mubr.f32.mxu0 0.0
      %4640 = vmatmul.mubr.f32.gmra.mrb[0].mxu0 %v4516
      %v4641 = vpop.f32.mrb[0].mxu0
      %v4642 = vadd.f32 0.0, %v4641
      %v4643 = vpop.f32.mrb[0].mxu0
      %4644 = vmatprep.mubr.f32.mxu0 0.0
      %4645 = vmatmul.mubr.f32.gmra.mrb[0].mxu0 %v4519
      %v4646 = vpop.f32.mrb[0].mxu0
      %v4647 = vadd.f32 0.0, %v4646
      %v4648 = vpop.f32.mrb[0].mxu0
      %4649 = vmatprep.mubr.f32.mxu0 0.0
      %4650 = vmatmul.mubr.f32.gmra.mrb[0].mxu0 %v4522
      %v4651 = vpop.f32.mrb[0].mxu0
      %v4652 = vadd.f32 0.0, %v4651
      %v4653 = vpop.f32.mrb[0].mxu0
      %4654 = vmatprep.mubr.f32.mxu0 0.0
      %4655 = vmatmul.mubr.f32.gmra.mrb[0].mxu0 %v4525
      %v4656 = vpop.f32.mrb[0].mxu0
      %v4657 = vadd.f32 0.0, %v4656
      %v4658 = vpop.f32.mrb[0].mxu0
      %4659 = vmatprep.mubr.f32.mxu0 0.0
      %4660 = vmatmul.mubr.f32.gmra.mrb[0].mxu0 %v4528
      %v4661 = vpop.f32.mrb[0].mxu0
      %v4662 = vadd.f32 0.0, %v4661
      %v4663 = vpop.f32.mrb[0].mxu0
      %4664 = vmatprep.mubr.f32.mxu0 0.0
      %4665 = vmatmul.mubr.f32.gmra.mrb[0].mxu0 %v4531
      %v4666 = vpop.f32.mrb[0].mxu0
      %v4667 = vadd.f32 0.0, %v4666
      %v4668 = vpop.f32.mrb[0].mxu0
      %4669 = vmatprep.mubr.f32.mxu0 0.0
      %4670 = vmatmul.mubr.f32.gmra.mrb[0].mxu0 %v4534
      %v4671 = vpop.f32.mrb[0].mxu0
      %v4672 = vadd.f32 0.0, %v4671
      %v4673 = vpop.f32.mrb[0].mxu0
      %4674 = vmatprep.mubr.f32.mxu0 0.0
      %4675 = vmatmul.mubr.f32.gmra.mrb[0].mxu0 %v4537
      %v4676 = vpop.f32.mrb[0].mxu0
      %v4677 = vadd.f32 0.0, %v4676
      %v4678 = vpop.f32.mrb[0].mxu0
      %4679 = vmatprep.mubr.f32.mxu0 0.0
      %4680 = vmatmul.mubr.f32.gmra.mrb[0].mxu0 %v4540
      %v4681 = vpop.f32.mrb[0].mxu0
      %v4682 = vadd.f32 0.0, %v4681
      %v4683 = vpop.f32.mrb[0].mxu0
      %4684 = vmatprep.mubr.f32.mxu0 0.0
      %4685 = vmatmul.mubr.f32.gmra.mrb[0].mxu0 %v4543
      %v4686 = vpop.f32.mrb[0].mxu0
      %v4687 = vadd.f32 0.0, %v4686
      %v4688 = vpop.f32.mrb[0].mxu0
      %4689 = vdwg.mxu0
      %v4690 = vlaneseq
      %v4691 = vand.u32 %v4690, 127
      %vm4692 = vcmp.lt.s32.totalorder %v4691, 0
      %v4693 = vsub.s32 0, %v4691
      %v4694 = vsel %vm4692, %v4693, %v4691
      %v4695 = vshrl.u32 %v4694, 2
      %v4696 = vand.u32 %v4694, 3
      %v4697 = vsub.s32 0, %v4696
      %v4698 = vsel %vm4692, %v4697, %v4696
      %vm4699 = vcmp.ne.s32.totalorder %v4698, 0
      %vm4700 = vcmp.lt.s32.totalorder %v4698, 0
      %vm4701 = vmand %vm4700, %vm4699
      %v4702 = vadd.s32 %v4698, 4
      %v4703 = vsel %vm4701, %v4702, %v4698
      %vm4704 = vcmp.eq.s32.totalorder %v4703, 0
      %v4705 = vsel %vm4704, 1.0, 0.0
      %4722 = vrot.lane.b32.xlu0 %v4612, 119
      %v4723 = vpop.permute.xlu0 %4722
      %4724 = vrot.lane.b32.xlu0 %v4617, 119
      %v4725 = vpop.permute.xlu0 %4724
      %4726 = vrot.lane.b32.xlu0 %v4622, 119
      %v4727 = vpop.permute.xlu0 %4726
      %4728 = vrot.lane.b32.xlu0 %v4627, 119
      %v4729 = vpop.permute.xlu0 %4728
      %4730 = vrot.lane.b32.xlu0 %v4632, 119
      %v4731 = vpop.permute.xlu0 %4730
      %4732 = vrot.lane.b32.xlu0 %v4637, 119
      %v4733 = vpop.permute.xlu0 %4732
      %4734 = vrot.lane.b32.xlu0 %v4642, 119
      %v4735 = vpop.permute.xlu0 %4734
      %4736 = vrot.lane.b32.xlu0 %v4647, 119
      %v4737 = vpop.permute.xlu0 %4736
      %4738 = vrot.lane.b32.xlu0 %v4652, 119
      %v4739 = vpop.permute.xlu0 %4738
      %4740 = vrot.lane.b32.xlu0 %v4657, 119
      %v4741 = vpop.permute.xlu0 %4740
      %4742 = vrot.lane.b32.xlu0 %v4662, 119
      %v4743 = vpop.permute.xlu0 %4742
      %4744 = vrot.lane.b32.xlu0 %v4667, 119
      %v4745 = vpop.permute.xlu0 %4744
      %4746 = vrot.lane.b32.xlu0 %v4672, 119
      %v4747 = vpop.permute.xlu0 %4746
      %4748 = vrot.lane.b32.xlu0 %v4677, 119
      %v4749 = vpop.permute.xlu0 %4748
      %4750 = vrot.lane.b32.xlu0 %v4682, 119
      %v4751 = vpop.permute.xlu0 %4750
      %4752 = vrot.lane.b32.xlu0 %v4687, 119
      %v4753 = vpop.permute.xlu0 %4752
      %v4770 = vmul.f32 %v4612, %v4723
      %v4771 = vmul.f32 %v4617, %v4725
      %v4772 = vmul.f32 %v4622, %v4727
      %v4773 = vmul.f32 %v4627, %v4729
      %v4774 = vmul.f32 %v4632, %v4731
      %v4775 = vmul.f32 %v4637, %v4733
      %v4776 = vmul.f32 %v4642, %v4735
      %v4777 = vmul.f32 %v4647, %v4737
      %v4778 = vmul.f32 %v4652, %v4739
      %v4779 = vmul.f32 %v4657, %v4741
      %v4780 = vmul.f32 %v4662, %v4743
      %v4781 = vmul.f32 %v4667, %v4745
      %v4782 = vmul.f32 %v4672, %v4747
      %v4783 = vmul.f32 %v4677, %v4749
      %v4784 = vmul.f32 %v4682, %v4751
      %v4785 = vmul.f32 %v4687, %v4753
      %4802 = vrot.lane.b32.xlu0 %v4770, 18
      %v4803 = vpop.permute.xlu0 %4802
      %4804 = vrot.lane.b32.xlu0 %v4771, 18
      %v4805 = vpop.permute.xlu0 %4804
      %4806 = vrot.lane.b32.xlu0 %v4772, 18
      %v4807 = vpop.permute.xlu0 %4806
      %4808 = vrot.lane.b32.xlu0 %v4773, 18
      %v4809 = vpop.permute.xlu0 %4808
      %4810 = vrot.lane.b32.xlu0 %v4774, 18
      %v4811 = vpop.permute.xlu0 %4810
      %4812 = vrot.lane.b32.xlu0 %v4775, 18
      %v4813 = vpop.permute.xlu0 %4812
      %4814 = vrot.lane.b32.xlu0 %v4776, 18
      %v4815 = vpop.permute.xlu0 %4814
      %4816 = vrot.lane.b32.xlu0 %v4777, 18
      %v4817 = vpop.permute.xlu0 %4816
      %4818 = vrot.lane.b32.xlu0 %v4778, 18
      %v4819 = vpop.permute.xlu0 %4818
      %4820 = vrot.lane.b32.xlu0 %v4779, 18
      %v4821 = vpop.permute.xlu0 %4820
      %4822 = vrot.lane.b32.xlu0 %v4780, 18
      %v4823 = vpop.permute.xlu0 %4822
      %4824 = vrot.lane.b32.xlu0 %v4781, 18
      %v4825 = vpop.permute.xlu0 %4824
      %4826 = vrot.lane.b32.xlu0 %v4782, 18
      %v4827 = vpop.permute.xlu0 %4826
      %4828 = vrot.lane.b32.xlu0 %v4783, 18
      %v4829 = vpop.permute.xlu0 %4828
      %4830 = vrot.lane.b32.xlu0 %v4784, 18
      %v4831 = vpop.permute.xlu0 %4830
      %4832 = vrot.lane.b32.xlu0 %v4785, 18
      %v4833 = vpop.permute.xlu0 %4832
      %v4850 = vadd.f32 %v4612, %v4803
      %v4851 = vadd.f32 %v4617, %v4805
      %v4852 = vadd.f32 %v4622, %v4807
      %v4853 = vadd.f32 %v4627, %v4809
      %v4854 = vadd.f32 %v4632, %v4811
      %v4855 = vadd.f32 %v4637, %v4813
      %v4856 = vadd.f32 %v4642, %v4815
      %v4857 = vadd.f32 %v4647, %v4817
      %v4858 = vadd.f32 %v4652, %v4819
      %v4859 = vadd.f32 %v4657, %v4821
      %v4860 = vadd.f32 %v4662, %v4823
      %v4861 = vadd.f32 %v4667, %v4825
      %v4862 = vadd.f32 %v4672, %v4827
      %v4863 = vadd.f32 %v4677, %v4829
      %v4864 = vadd.f32 %v4682, %v4831
      %v4865 = vadd.f32 %v4687, %v4833
      %4867 = vset.pattern.permute.xlu0 0
      %4868 = vperm.xlu0 %4867, %v4466
      %v4869 = vpop.permute.xlu0 %4868
      %4872 = vset.pattern.permute.xlu0 0
      %4873 = vperm.xlu0 %4872, %v4467
      %v4874 = vpop.permute.xlu0 %4873
      %4877 = vset.pattern.permute.xlu0 0
      %4878 = vperm.xlu0 %4877, %v4468
      %v4879 = vpop.permute.xlu0 %4878
      %4882 = vset.pattern.permute.xlu0 0
      %4883 = vperm.xlu0 %4882, %v4469
      %v4884 = vpop.permute.xlu0 %4883
      %4887 = vset.pattern.permute.xlu0 0
      %4888 = vperm.xlu0 %4887, %v4470
      %v4889 = vpop.permute.xlu0 %4888
      %4892 = vset.pattern.permute.xlu0 0
      %4893 = vperm.xlu0 %4892, %v4471
      %v4894 = vpop.permute.xlu0 %4893
      %4897 = vset.pattern.permute.xlu0 0
      %4898 = vperm.xlu0 %4897, %v4472
      %v4899 = vpop.permute.xlu0 %4898
      %4902 = vset.pattern.permute.xlu0 0
      %4903 = vperm.xlu0 %4902, %v4473
      %v4904 = vpop.permute.xlu0 %4903
      %4907 = vset.pattern.permute.xlu0 0
      %4908 = vperm.xlu0 %4907, %v4474
      %v4909 = vpop.permute.xlu0 %4908
      %4912 = vset.pattern.permute.xlu0 0
      %4913 = vperm.xlu0 %4912, %v4475
      %v4914 = vpop.permute.xlu0 %4913
      %4917 = vset.pattern.permute.xlu0 0
      %4918 = vperm.xlu0 %4917, %v4476
      %v4919 = vpop.permute.xlu0 %4918
      %4922 = vset.pattern.permute.xlu0 0
      %4923 = vperm.xlu0 %4922, %v4477
      %v4924 = vpop.permute.xlu0 %4923
      %4927 = vset.pattern.permute.xlu0 0
      %4928 = vperm.xlu0 %4927, %v4478
      %v4929 = vpop.permute.xlu0 %4928
      %4932 = vset.pattern.permute.xlu0 0
      %4933 = vperm.xlu0 %4932, %v4479
      %v4934 = vpop.permute.xlu0 %4933
      %4937 = vset.pattern.permute.xlu0 0
      %4938 = vperm.xlu0 %4937, %v4480
      %v4939 = vpop.permute.xlu0 %4938
      %4942 = vset.pattern.permute.xlu0 0
      %4943 = vperm.xlu0 %4942, %v4481
      %v4944 = vpop.permute.xlu0 %4943
      %v4946 = vmul.f32 %v4869, %v4705
      %v4947 = vmul.f32 %v4874, %v4705
      %v4948 = vmul.f32 %v4879, %v4705
      %v4949 = vmul.f32 %v4884, %v4705
      %v4950 = vmul.f32 %v4889, %v4705
      %v4951 = vmul.f32 %v4894, %v4705
      %v4952 = vmul.f32 %v4899, %v4705
      %v4953 = vmul.f32 %v4904, %v4705
      %v4954 = vmul.f32 %v4909, %v4705
      %v4955 = vmul.f32 %v4914, %v4705
      %v4956 = vmul.f32 %v4919, %v4705
      %v4957 = vmul.f32 %v4924, %v4705
      %v4958 = vmul.f32 %v4929, %v4705
      %v4959 = vmul.f32 %v4934, %v4705
      %v4960 = vmul.f32 %v4939, %v4705
      %v4961 = vmul.f32 %v4944, %v4705
      %4978 = vrot.lane.b32.xlu0 %v4946, 18
      %v4979 = vpop.permute.xlu0 %4978
      %4980 = vrot.lane.b32.xlu0 %v4947, 18
      %v4981 = vpop.permute.xlu0 %4980
      %4982 = vrot.lane.b32.xlu0 %v4948, 18
      %v4983 = vpop.permute.xlu0 %4982
      %4984 = vrot.lane.b32.xlu0 %v4949, 18
      %v4985 = vpop.permute.xlu0 %4984
      %4986 = vrot.lane.b32.xlu0 %v4950, 18
      %v4987 = vpop.permute.xlu0 %4986
      %4988 = vrot.lane.b32.xlu0 %v4951, 18
      %v4989 = vpop.permute.xlu0 %4988
      %4990 = vrot.lane.b32.xlu0 %v4952, 18
      %v4991 = vpop.permute.xlu0 %4990
      %4992 = vrot.lane.b32.xlu0 %v4953, 18
      %v4993 = vpop.permute.xlu0 %4992
      %4994 = vrot.lane.b32.xlu0 %v4954, 18
      %v4995 = vpop.permute.xlu0 %4994
      %4996 = vrot.lane.b32.xlu0 %v4955, 18
      %v4997 = vpop.permute.xlu0 %4996
      %4998 = vrot.lane.b32.xlu0 %v4956, 18
      %v4999 = vpop.permute.xlu0 %4998
      %5000 = vrot.lane.b32.xlu0 %v4957, 18
      %v5001 = vpop.permute.xlu0 %5000
      %5002 = vrot.lane.b32.xlu0 %v4958, 18
      %v5003 = vpop.permute.xlu0 %5002
      %5004 = vrot.lane.b32.xlu0 %v4959, 18
      %v5005 = vpop.permute.xlu0 %5004
      %5006 = vrot.lane.b32.xlu0 %v4960, 18
      %v5007 = vpop.permute.xlu0 %5006
      %5008 = vrot.lane.b32.xlu0 %v4961, 18
      %v5009 = vpop.permute.xlu0 %5008
      %v5026 = vadd.f32 %v4850, %v4979
      %v5027 = vadd.f32 %v4851, %v4981
      %v5028 = vadd.f32 %v4852, %v4983
      %v5029 = vadd.f32 %v4853, %v4985
      %v5030 = vadd.f32 %v4854, %v4987
      %v5031 = vadd.f32 %v4855, %v4989
      %v5032 = vadd.f32 %v4856, %v4991
      %v5033 = vadd.f32 %v4857, %v4993
      %v5034 = vadd.f32 %v4858, %v4995
      %v5035 = vadd.f32 %v4859, %v4997
      %v5036 = vadd.f32 %v4860, %v4999
      %v5037 = vadd.f32 %v4861, %v5001
      %v5038 = vadd.f32 %v4862, %v5003
      %v5039 = vadd.f32 %v4863, %v5005
      %v5040 = vadd.f32 %v4864, %v5007
      %v5041 = vadd.f32 %v4865, %v5009
      %v5042 = vld [vmem:[%s529] sm:$0x3]
      %5059 = vrot.lane.b32.xlu0 %v5026, 110
      %v5060 = vpop.permute.xlu0 %5059
      %5061 = vrot.lane.b32.xlu0 %v5027, 110
      %v5062 = vpop.permute.xlu0 %5061
      %5063 = vrot.lane.b32.xlu0 %v5028, 110
      %v5064 = vpop.permute.xlu0 %5063
      %5065 = vrot.lane.b32.xlu0 %v5029, 110
      %v5066 = vpop.permute.xlu0 %5065
      %5067 = vrot.lane.b32.xlu0 %v5030, 110
      %v5068 = vpop.permute.xlu0 %5067
      %5069 = vrot.lane.b32.xlu0 %v5031, 110
      %v5070 = vpop.permute.xlu0 %5069
      %5071 = vrot.lane.b32.xlu0 %v5032, 110
      %v5072 = vpop.permute.xlu0 %5071
      %5073 = vrot.lane.b32.xlu0 %v5033, 110
      %v5074 = vpop.permute.xlu0 %5073
      %5075 = vrot.lane.b32.xlu0 %v5034, 110
      %v5076 = vpop.permute.xlu0 %5075
      %5077 = vrot.lane.b32.xlu0 %v5035, 110
      %v5078 = vpop.permute.xlu0 %5077
      %5079 = vrot.lane.b32.xlu0 %v5036, 110
      %v5080 = vpop.permute.xlu0 %5079
      %5081 = vrot.lane.b32.xlu0 %v5037, 110
      %v5082 = vpop.permute.xlu0 %5081
      %5083 = vrot.lane.b32.xlu0 %v5038, 110
      %v5084 = vpop.permute.xlu0 %5083
      %5085 = vrot.lane.b32.xlu0 %v5039, 110
      %v5086 = vpop.permute.xlu0 %5085
      %5087 = vrot.lane.b32.xlu0 %v5040, 110
      %v5088 = vpop.permute.xlu0 %5087
      %5089 = vrot.lane.b32.xlu0 %v5041, 110
      %v5090 = vpop.permute.xlu0 %5089
      %5107 = vmatprep.subr.mxu0 0.0
      %5108 = vmatpush1.msra.mxu0 %v5060
      %5109 = vmatprep.subr.mxu0 0.0
      %5110 = vmatpush1.msra.mxu0 %v5062
      %5111 = vmatprep.subr.mxu0 0.0
      %5112 = vmatpush1.msra.mxu0 %v5064
      %5113 = vmatprep.subr.mxu0 0.0
      %5114 = vmatpush1.msra.mxu0 %v5066
      %5115 = vmatprep.subr.mxu0 0.0
      %5116 = vmatpush1.msra.mxu0 %v5068
      %5117 = vmatprep.subr.mxu0 0.0
      %5118 = vmatpush1.msra.mxu0 %v5070
      %5119 = vmatprep.subr.mxu0 0.0
      %5120 = vmatpush1.msra.mxu0 %v5072
      %5121 = vmatprep.subr.mxu0 0.0
      %5122 = vmatpush1.msra.mxu0 %v5074
      %5123 = vmatprep.subr.mxu0 0.0
      %5124 = vmatpush1.msra.mxu0 %v5076
      %5125 = vmatprep.subr.mxu0 0.0
      %5126 = vmatpush1.msra.mxu0 %v5078
      %5127 = vmatprep.subr.mxu0 0.0
      %5128 = vmatpush1.msra.mxu0 %v5080
      %5129 = vmatprep.subr.mxu0 0.0
      %5130 = vmatpush1.msra.mxu0 %v5082
      %5131 = vmatprep.subr.mxu0 0.0
      %5132 = vmatpush1.msra.mxu0 %v5084
      %5133 = vmatprep.subr.mxu0 0.0
      %5134 = vmatpush1.msra.mxu0 %v5086
      %5135 = vmatprep.subr.mxu0 0.0
      %5136 = vmatpush1.msra.mxu0 %v5088
      %5137 = vmatprep.subr.mxu0 0.0
      %5138 = vmatpush1.msra.mxu0 %v5090
      %5139 = vmatprep.subr.mxu0 0.0
      %5140 = vmatpush1.msra.mxu0 0.0
      %5141 = vmatprep.subr.mxu0 0.0
      %5142 = vmatpush1.msra.mxu0 0.0
      %5143 = vmatprep.subr.mxu0 0.0
      %5144 = vmatpush1.msra.mxu0 0.0
      %5145 = vmatprep.subr.mxu0 0.0
      %5146 = vmatpush1.msra.mxu0 0.0
      %5147 = vmatprep.subr.mxu0 0.0
      %5148 = vmatpush1.msra.mxu0 0.0
      %5149 = vmatprep.subr.mxu0 0.0
      %5150 = vmatpush1.msra.mxu0 0.0
      %5151 = vmatprep.subr.mxu0 0.0
      %5152 = vmatpush1.msra.mxu0 0.0
      %5153 = vmatprep.subr.mxu0 0.0
      %5154 = vmatpush1.msra.mxu0 0.0
      %5155 = vmatprep.subr.mxu0 0.0
      %5156 = vmatpush1.msra.mxu0 0.0
      %5157 = vmatprep.subr.mxu0 0.0
      %5158 = vmatpush1.msra.mxu0 0.0
      %5159 = vmatprep.subr.mxu0 0.0
      %5160 = vmatpush1.msra.mxu0 0.0
      %5161 = vmatprep.subr.mxu0 0.0
      %5162 = vmatpush1.msra.mxu0 0.0
      %5163 = vmatprep.subr.mxu0 0.0
      %5164 = vmatpush1.msra.mxu0 0.0
      %5165 = vmatprep.subr.mxu0 0.0
      %5166 = vmatpush1.msra.mxu0 0.0
      %5167 = vmatprep.subr.mxu0 0.0
      %5168 = vmatpush1.msra.mxu0 0.0
      %5169 = vmatprep.subr.mxu0 0.0
      %5170 = vmatpush1.msra.mxu0 0.0
      %5171 = vmatprep.mubr.f32.mxu0 0.0
      %5172 = vmatmul.mubr.f32.gmra.mrb[0].mxu0 %v5042
      %v5173 = vpop.f32.mrb[0].mxu0
      %v5174 = vadd.f32 0.0, %v5173
      %v5175 = vpop.f32.mrb[0].mxu0
      %5176 = vdwg.mxu0
      %vm5177 = vcmask 66560
      %5178 = vst.msk [vmem:[%s533] sm:$0x3] %vm5177, %v5174
      %p5179 = scmp.lt.s32.totalorder %s26, 1
      %s5180 = scalar_select %p5179, %s26, 1
      %s5181 = smul.addr %s5180, 2
      %s5182 = scalar_lea.vmem %s15, %s5181
      // Predicated region
      $region81: #{gated_equivariant_forward.1} parent=79 // pred_check
        %p5183 = pneg %p374
      $region82: #{gated_equivariant_forward.1} parent=79 // pred_check_branch
        %5185 = sbr.rel (%p5183) target = $region84
      $region83: #{gated_equivariant_forward.1} parent=79 // pred_region
        _
      $region84: #{gated_equivariant_forward.1} parent=79 // pred_fallthru
        _
    $region80: #{gated_equivariant_forward.1} parent=5 // pred_fallthru
      _
    %p5186 = scmp.le.s32.totalorder 2, %s21
    // Predicated region
    $region85: #{gated_equivariant_forward.1} parent=5 // pred_check
      %p5187 = pneg %p5186
    $region86: #{gated_equivariant_forward.1} parent=5 // pred_check_branch
      %5189 = sbr.rel (%p5187) target = $region88
    $region87: #{gated_equivariant_forward.1} parent=5 // pred_region
      %s5190 = ssub.s32 %s21, 2
      // Predicated region
      $region89: #{gated_equivariant_forward.1} parent=87 // pred_check
        %p5191 = pneg %p380
      $region90: #{gated_equivariant_forward.1} parent=87 // pred_check_branch
        %5193 = sbr.rel (%p5191) target = $region92
      $region91: #{gated_equivariant_forward.1} parent=87 // pred_region
        %p5194 = scmp.lt.s32.totalorder %s27, 1
        %s5195 = scalar_select %p5194, %s27, 1
        %s5196 = smul.addr %s5195, 2
        %s5197 = scalar_lea.vmem %s15, %s5196
      $region92: #{gated_equivariant_forward.1} parent=87 // pred_fallthru
        _
    $region88: #{gated_equivariant_forward.1} parent=5 // pred_fallthru
      _
  $region6: #{gated_equivariant_forward.1} parent=0 // loop_footer
    %s25 = sadd.s32 1, %s21
  $region7: #{gated_equivariant_forward.1} parent=0 // loop_footer_branch
    %20 = sbr.rel target = $region3
  $region8: #{gated_equivariant_forward.1} parent=0 // loop_exit
    _

</llo_original>
